<compile_context>
chip_gen: v7x
topology: tpu7x:2x2x1
jax: 0.10.0
libtpu: 0.0.40
codegen_flags: <defaults>
</compile_context>

<pallas_src>
import jax
import jax.numpy as jnp
from jax.experimental import pallas as pl
from jax.experimental.pallas import tpu as pltpu

_LANES = 128          # vreg lane width
_SUBLANES_BF16 = 16   # bf16 sublane tile


def _round_up(v, m):
    return (v + m - 1) // m * m


def _conv_operands(x_nhwc, ho_p, wo_p):
    """Phase-merged operand tensor for a 3x3 / stride-2 / pad-1 conv.

    Returns xg of shape (N, (ho_p+1)*wo_p, 6*Cin) in bf16 with
        xg[n, R*wo_p + c, pi*3*Cin + dj*Cin + i] = x_pad[n, 2R+pi, 2c+dj, i]
    where x_pad is x zero-padded by 1 on top/left (and as needed bottom/right).
    Pure data movement (~1.5x the input, no 9-tap duplication, no transpose);
    the kernel finishes the im2col with one row-shifted view + a 1-row halo.
    """
    n, h, w, cin = x_nhwc.shape
    hp = 2 * (ho_p + 1)          # padded height: covers both phases + row halo
    wp = 2 * wo_p + 1            # padded width needed by the dj=2 column tap
    xpad = jnp.pad(x_nhwc.astype(jnp.bfloat16),
                   ((0, 0), (1, hp - h - 1), (1, wp - w - 1), (0, 0)))
    parts = [xpad[:, pi::2, dj:dj + 2 * wo_p:2, :]     # (N, ho_p+1, wo_p, Cin)
             for pi in range(2) for dj in range(3)]
    xg = jnp.concatenate(parts, axis=-1)               # (N, ho_p+1, wo_p, 6*Cin)
    return xg.reshape(n, (ho_p + 1) * wo_p, 6 * cin)


def _conv_weights(w_oihw, coutp):
    """OIHW weights -> stacked (2, 6*Cin, Coutp) bf16 GEMM operands.

    wk[0]: taps di=0,1 (K index = pi*3*Cin + dj*Cin + i).
    wk[1]: tap di=2 in the phase-0 lanes, zeros in the phase-1 lanes.
    """
    cout, cin, _, _ = w_oihw.shape
    wt = jnp.transpose(w_oihw, (2, 3, 1, 0)).reshape(3, 3 * cin, cout)
    w01 = jnp.concatenate([wt[0], wt[1]], axis=0)            # (6*Cin, Cout)
    w2 = jnp.concatenate([wt[2], jnp.zeros_like(wt[2])], axis=0)
    wk = jnp.stack([w01, w2], axis=0)                         # (2, 6*Cin, Cout)
    wk = jnp.pad(wk, ((0, 0), (0, 0), (0, coutp - cout)))
    return wk.astype(jnp.bfloat16)


def conv3x3_s2_leaky_pallas(x_nhwc, w_oihw, bias, out_dtype=jnp.bfloat16):
    """3x3 conv (stride 2, pad 1) + bias + LeakyReLU(0.1), fused Pallas kernel."""
    cout, cin, kh, kw = w_oihw.shape
    assert (kh, kw) == (3, 3)
    n, h, w, cin_x = x_nhwc.shape
    assert cin_x == cin
    ho = (h - 1) // 2 + 1
    wo = (w - 1) // 2 + 1
    wo_p = _round_up(wo, _SUBLANES_BF16)   # sublane-aligned row width
    coutp = _round_up(cout, _LANES)        # lane-dense output / full MXU columns
    k6 = 6 * cin                           # phase-merged contraction depth
    out_itemsize = jnp.dtype(out_dtype).itemsize

    # M tile = output rows per grid step.  Cap the A / output blocks at ~1.5 MiB
    # each so the double-buffered working set stays far below v7x's 64 MiB VMEM
    # (and trivially within v5e/v6e); keep >=2 row tiles when the image allows
    # it so both v7x TensorCores are busy even at batch 1.
    row_bytes = wo_p * max(coutp * out_itemsize, k6 * 2)
    cap = max(1, (3 * 1024 * 1024) // (2 * row_bytes))
    tm = max(1, min(16, cap, max(1, ho // 2)))
    ho_p = _round_up(ho, tm)
    n_row_tiles = ho_p // tm
    mt = tm * wo_p                         # GEMM M rows per grid step

    xg = _conv_operands(x_nhwc, ho_p, wo_p)                   # bf16 operands
    wk = _conv_weights(w_oihw, coutp)                         # bf16 weights
    b_p = jnp.pad(bias.astype(jnp.float32), (0, coutp - cout)).reshape(1, coutp)

    def kernel(x_ref, h_ref, w_ref, b_ref, o_ref, acc_ref):
        xv = x_ref[...]                                       # (mt, 6*Cin) bf16
        # Taps di=0,1 (both stride phases merged along K): one GEMM, K = 6*Cin.
        acc_ref[...] = jnp.dot(xv, w_ref[0],
                               preferred_element_type=jnp.float32)
        # Tap di=2 needs the next output row's phase-0 data: the bulk is a
        # one-row-shifted view of this block, the last row comes from the
        # 1-row halo block.  Single accumulator, `+=` (MRB-friendly on v7x).
        if tm > 1:
            xv2 = jnp.concatenate([xv[wo_p:, :], h_ref[...]], axis=0)
        else:
            xv2 = h_ref[...]
        acc_ref[...] += jnp.dot(xv2, w_ref[1],
                                preferred_element_type=jnp.float32)
        # f32 epilogue: bias + LeakyReLU(0.1) as mul+max; cast on store.
        y = acc_ref[...] + b_ref[...]
        o_ref[...] = jnp.maximum(y, 0.1 * y).astype(o_ref.dtype)

    out = pl.pallas_call(
        kernel,
        out_shape=jax.ShapeDtypeStruct((n, ho_p * wo_p, coutp), out_dtype),
        grid_spec=pltpu.PrefetchScalarGridSpec(
            num_scalar_prefetch=0,
            grid=(n, n_row_tiles),
            in_specs=[
                # main operand block: output rows [t*tm, (t+1)*tm)
                pl.BlockSpec((None, mt, k6), lambda b, t: (b, t, 0)),
                # 1-row halo (phase-0 data of output row (t+1)*tm)
                pl.BlockSpec((None, wo_p, k6), lambda b, t: (b, (t + 1) * tm, 0)),
                pl.BlockSpec((2, k6, coutp), lambda b, t: (0, 0, 0)),
                pl.BlockSpec((1, coutp), lambda b, t: (0, 0)),
            ],
            out_specs=pl.BlockSpec((None, mt, coutp), lambda b, t: (b, t, 0)),
            scratch_shapes=[pltpu.VMEM((mt, coutp), jnp.float32)],
        ),
        compiler_params=pltpu.CompilerParams(
            dimension_semantics=("parallel", "parallel"),
            vmem_limit_bytes=48 * 1024 * 1024),
    )(xg, xg, wk, b_p)

    # Strip row / column / lane padding.
    return out.reshape(n, ho_p, wo_p, coutp)[:, :ho, :wo, :cout]


# ------------------------------ FlowNet model ------------------------------ #
def init_flownet_params(key):
    """Deterministic synthetic parameters for the MaskFlownet encoder stem."""
    layer_defs = [(16, 6), (32, 16), (64, 32)]     # (Cout, Cin), OIHW 3x3 convs
    params = []
    for li, (cout, cin) in enumerate(layer_defs):
        kw_, kb_ = jax.random.split(jax.random.fold_in(key, li))
        scale = 1.0 / jnp.sqrt(cin * 9.0)
        w = jax.random.normal(kw_, (cout, cin, 3, 3), jnp.float32) * scale
        b = jax.random.normal(kb_, (cout,), jnp.float32) * 0.01
        params.append((w, b))
    return params


def flownet_forward(x_nchw, params):
    """FlowNet.forward: feature = maskflownet(input). Input NCHW, output NCHW."""
    x = jnp.transpose(x_nchw, (0, 2, 3, 1))        # NCHW -> NHWC
    for li, (w, b) in enumerate(params):
        last = li == len(params) - 1
        # Intermediates in bf16 (next layer casts to bf16 anyway); last layer f32.
        x = conv3x3_s2_leaky_pallas(
            x, w, b, out_dtype=jnp.float32 if last else jnp.bfloat16)
    return jnp.transpose(x, (0, 3, 1, 2))          # NHWC -> NCHW


# ------------------------------ reference impl ----------------------------- #
def _reference_forward(x_nchw, params):
    # Same numerics as the kernel path: bf16 operands, f32 accumulation/epilogue.
    x = jnp.transpose(x_nchw, (0, 2, 3, 1))
    for w, b in params:
        w_hwio = jnp.transpose(w, (2, 3, 1, 0)).astype(jnp.bfloat16)
        y = jax.lax.conv_general_dilated(
            x.astype(jnp.bfloat16), w_hwio, window_strides=(2, 2),
            padding=[(1, 1), (1, 1)],
            dimension_numbers=("NHWC", "HWIO", "NHWC"),
            preferred_element_type=jnp.float32)
        y = y + b
        x = jnp.where(y > 0, y, 0.1 * y)
    return jnp.transpose(x, (0, 3, 1, 2))


if __name__ == "__main__":
    key = jax.random.PRNGKey(0)
    k_x, k_p = jax.random.split(key)

    # Two stacked RGB frames (MaskFlownet-style input): N=2, C=6, H=W=64.
    x = jax.random.normal(k_x, (2, 6, 64, 64), jnp.float32)
    params = init_flownet_params(k_p)

    fwd = jax.jit(flownet_forward)
    feat = jax.block_until_ready(fwd(x, params))

    ref = jax.block_until_ready(_reference_forward(x, params))
    assert feat.shape == (2, 64, 8, 8), feat.shape
    err = float(jnp.max(jnp.abs(feat - ref.astype(feat.dtype))))
    # bf16 operands on both paths; tolerance covers summation-order differences.
    assert jnp.allclose(feat, ref.astype(feat.dtype), atol=2e-2, rtol=2e-2), (
        f"mismatch vs reference (max err {err})")

    print("KERNEL_OK")
</pallas_src>

<mosaic_0001>
module attributes {stable_mosaic.version = 11 : i64} {
  func.func @kernel(%arg0: i32, %arg1: i32, %arg2: memref<1x512x36xbf16, #tpu.memory_space<vmem>>, %arg3: memref<1x32x36xbf16, #tpu.memory_space<vmem>>, %arg4: memref<2x36x128xbf16, #tpu.memory_space<vmem>>, %arg5: memref<1x128xf32, #tpu.memory_space<vmem>>, %arg6: memref<1x512x128xbf16, #tpu.memory_space<vmem>>, %arg7: memref<512x128xf32, #tpu.memory_space<vmem>>) attributes {dimension_semantics = [#tpu.dimension_semantics<parallel>, #tpu.dimension_semantics<parallel>], iteration_bounds = array<i64: 2, 2>, scalar_prefetch = 0 : i64, scratch_operands = 1 : i64, tpu.core_type = #tpu.core_type<tc>, window_params = [{transform_indices = @transform_0, window_bounds = array<i64: 1, 512, 36>}, {transform_indices = @transform_1, window_bounds = array<i64: 1, 32, 36>}, {pipeline_mode = #tpu.pipeline_mode<synchronous>, transform_indices = @transform_2, window_bounds = array<i64: 2, 36, 128>}, {pipeline_mode = #tpu.pipeline_mode<synchronous>, transform_indices = @transform_3, window_bounds = array<i64: 1, 128>}, {transform_indices = @transform_4, window_bounds = array<i64: 1, 512, 128>}]} {
    %c0 = arith.constant 0 : index
    %c0_0 = arith.constant 0 : index
    %c0_1 = arith.constant 0 : index
    %0 = vector.load %arg2[%c0, %c0_0, %c0_1] : memref<1x512x36xbf16, #tpu.memory_space<vmem>>, vector<1x512x36xbf16>
    %1 = vector.shape_cast %0 : vector<1x512x36xbf16> to vector<512x36xbf16>
    %c0_2 = arith.constant 0 : index
    %c0_3 = arith.constant 0 : index
    %c0_4 = arith.constant 0 : index
    %2 = vector.load %arg4[%c0_2, %c0_3, %c0_4] : memref<2x36x128xbf16, #tpu.memory_space<vmem>>, vector<1x36x128xbf16>
    %3 = vector.shape_cast %2 : vector<1x36x128xbf16> to vector<36x128xbf16>
    %cst = arith.constant dense<0.000000e+00> : vector<512x128xf32>
    %4 = tpu.matmul %1, %3, %cst {dimension_numbers = #tpu.dot_dimension_numbers<[1], [0], [0], [1], [0, 0, 1, 1], [], []>} : vector<512x36xbf16>, vector<36x128xbf16>, vector<512x128xf32> -> vector<512x128xf32>
    %c0_5 = arith.constant 0 : index
    %c0_6 = arith.constant 0 : index
    %5 = vector.load %arg7[%c0_5, %c0_6] : memref<512x128xf32, #tpu.memory_space<vmem>>, vector<512x128xf32>
    tpu.vector_store %arg7[%c0_5, %c0_6], %4 {strides = array<i32>} : memref<512x128xf32, #tpu.memory_space<vmem>>, vector<512x128xf32>,
    %6 = vector.extract_strided_slice %1 {offsets = [32, 0], sizes = [480, 36], strides = [1, 1]} : vector<512x36xbf16> to vector<480x36xbf16>
    %c0_7 = arith.constant 0 : index
    %c0_8 = arith.constant 0 : index
    %c0_9 = arith.constant 0 : index
    %7 = vector.load %arg3[%c0_7, %c0_8, %c0_9] : memref<1x32x36xbf16, #tpu.memory_space<vmem>>, vector<1x32x36xbf16>
    %8 = vector.shape_cast %7 : vector<1x32x36xbf16> to vector<32x36xbf16>
    %9 = tpu.concatenate %6, %8 in 0 : vector<480x36xbf16>, vector<32x36xbf16> -> vector<512x36xbf16>
    %c0_10 = arith.constant 0 : index
    %c0_11 = arith.constant 0 : index
    %10 = vector.load %arg7[%c0_10, %c0_11] : memref<512x128xf32, #tpu.memory_space<vmem>>, vector<512x128xf32>
    %c1 = arith.constant 1 : index
    %c0_12 = arith.constant 0 : index
    %c0_13 = arith.constant 0 : index
    %11 = vector.load %arg4[%c1, %c0_12, %c0_13] : memref<2x36x128xbf16, #tpu.memory_space<vmem>>, vector<1x36x128xbf16>
    %12 = vector.shape_cast %11 : vector<1x36x128xbf16> to vector<36x128xbf16>
    %cst_14 = arith.constant dense<0.000000e+00> : vector<512x128xf32>
    %13 = tpu.matmul %9, %12, %cst_14 {dimension_numbers = #tpu.dot_dimension_numbers<[1], [0], [0], [1], [0, 0, 1, 1], [], []>} : vector<512x36xbf16>, vector<36x128xbf16>, vector<512x128xf32> -> vector<512x128xf32>
    %14 = arith.addf %10, %13 : vector<512x128xf32>
    %c0_15 = arith.constant 0 : index
    %c0_16 = arith.constant 0 : index
    %15 = vector.load %arg7[%c0_15, %c0_16] : memref<512x128xf32, #tpu.memory_space<vmem>>, vector<512x128xf32>
    tpu.vector_store %arg7[%c0_15, %c0_16], %14 {strides = array<i32>} : memref<512x128xf32, #tpu.memory_space<vmem>>, vector<512x128xf32>,
    %c0_17 = arith.constant 0 : index
    %c0_18 = arith.constant 0 : index
    %16 = vector.load %arg7[%c0_17, %c0_18] : memref<512x128xf32, #tpu.memory_space<vmem>>, vector<512x128xf32>
    %c0_19 = arith.constant 0 : index
    %c0_20 = arith.constant 0 : index
    %17 = vector.load %arg5[%c0_19, %c0_20] : memref<1x128xf32, #tpu.memory_space<vmem>>, vector<1x128xf32>
    %18 = vector.broadcast %17 : vector<1x128xf32> to vector<512x128xf32>
    %19 = arith.addf %16, %18 : vector<512x128xf32>
    %cst_21 = arith.constant 1.000000e-01 : f32
    %20 = vector.broadcast %cst_21 : f32 to vector<512x128xf32>
    %21 = arith.mulf %20, %19 : vector<512x128xf32>
    %22 = arith.maximumf %19, %21 : vector<512x128xf32>
    %23 = arith.truncf %22 : vector<512x128xf32> to vector<512x128xbf16>
    %c0_22 = arith.constant 0 : index
    %c0_23 = arith.constant 0 : index
    %c0_24 = arith.constant 0 : index
    %24 = vector.load %arg6[%c0_22, %c0_23, %c0_24] : memref<1x512x128xbf16, #tpu.memory_space<vmem>>, vector<1x512x128xbf16>
    %25 = vector.shape_cast %24 : vector<1x512x128xbf16> to vector<512x128xbf16>
    %26 = vector.shape_cast %23 : vector<512x128xbf16> to vector<1x512x128xbf16>
    tpu.vector_store %arg6[%c0_22, %c0_23, %c0_24], %26 {strides = array<i32>} : memref<1x512x128xbf16, #tpu.memory_space<vmem>>, vector<1x512x128xbf16>,
    return
  }
  func.func @transform_0(%arg0: i32, %arg1: i32) -> (i32, i32, i32) {
    %c0_i32 = arith.constant 0 : i32
    %c0_i32_0 = arith.constant 0 : i32
    return %arg0, %arg1, %c0_i32 : i32, i32, i32
  }
  func.func @transform_1(%arg0: i32, %arg1: i32) -> (i32, i32, i32) {
    %c1_i32 = arith.constant 1 : i32
    %0 = arith.addi %arg1, %c1_i32 : i32
    %c16_i32 = arith.constant 16 : i32
    %1 = arith.muli %0, %c16_i32 : i32
    %c0_i32 = arith.constant 0 : i32
    %c0_i32_0 = arith.constant 0 : i32
    return %arg0, %1, %c0_i32 : i32, i32, i32
  }
  func.func @transform_2(%arg0: i32, %arg1: i32) -> (i32, i32, i32) {
    %c0_i32 = arith.constant 0 : i32
    %c0_i32_0 = arith.constant 0 : i32
    %c0_i32_1 = arith.constant 0 : i32
    %c0_i32_2 = arith.constant 0 : i32
    return %c0_i32, %c0_i32_0, %c0_i32_1 : i32, i32, i32
  }
  func.func @transform_3(%arg0: i32, %arg1: i32) -> (i32, i32) {
    %c0_i32 = arith.constant 0 : i32
    %c0_i32_0 = arith.constant 0 : i32
    %c0_i32_1 = arith.constant 0 : i32
    return %c0_i32, %c0_i32_0 : i32, i32
  }
  func.func @transform_4(%arg0: i32, %arg1: i32) -> (i32, i32, i32) {
    %c0_i32 = arith.constant 0 : i32
    %c0_i32_0 = arith.constant 0 : i32
    return %arg0, %arg1, %c0_i32 : i32, i32, i32
  }
}

module attributes {stable_mosaic.version = 11 : i64} {
  func.func @kernel(%arg0: i32, %arg1: i32, %arg2: memref<1x128x96xbf16, #tpu.memory_space<vmem>>, %arg3: memref<1x16x96xbf16, #tpu.memory_space<vmem>>, %arg4: memref<2x96x128xbf16, #tpu.memory_space<vmem>>, %arg5: memref<1x128xf32, #tpu.memory_space<vmem>>, %arg6: memref<1x128x128xbf16, #tpu.memory_space<vmem>>, %arg7: memref<128x128xf32, #tpu.memory_space<vmem>>) attributes {dimension_semantics = [#tpu.dimension_semantics<parallel>, #tpu.dimension_semantics<parallel>], iteration_bounds = array<i64: 2, 2>, scalar_prefetch = 0 : i64, scratch_operands = 1 : i64, tpu.core_type = #tpu.core_type<tc>, window_params = [{transform_indices = @transform_0, window_bounds = array<i64: 1, 128, 96>}, {transform_indices = @transform_1, window_bounds = array<i64: 1, 16, 96>}, {pipeline_mode = #tpu.pipeline_mode<synchronous>, transform_indices = @transform_2, window_bounds = array<i64: 2, 96, 128>}, {pipeline_mode = #tpu.pipeline_mode<synchronous>, transform_indices = @transform_3, window_bounds = array<i64: 1, 128>}, {transform_indices = @transform_4, window_bounds = array<i64: 1, 128, 128>}]} {
    %c0 = arith.constant 0 : index
    %c0_0 = arith.constant 0 : index
    %c0_1 = arith.constant 0 : index
    %0 = vector.load %arg2[%c0, %c0_0, %c0_1] : memref<1x128x96xbf16, #tpu.memory_space<vmem>>, vector<1x128x96xbf16>
    %1 = vector.shape_cast %0 : vector<1x128x96xbf16> to vector<128x96xbf16>
    %c0_2 = arith.constant 0 : index
    %c0_3 = arith.constant 0 : index
    %c0_4 = arith.constant 0 : index
    %2 = vector.load %arg4[%c0_2, %c0_3, %c0_4] : memref<2x96x128xbf16, #tpu.memory_space<vmem>>, vector<1x96x128xbf16>
    %3 = vector.shape_cast %2 : vector<1x96x128xbf16> to vector<96x128xbf16>
    %cst = arith.constant dense<0.000000e+00> : vector<128x128xf32>
    %4 = tpu.matmul %1, %3, %cst {dimension_numbers = #tpu.dot_dimension_numbers<[1], [0], [0], [1], [0, 0, 1, 1], [], []>} : vector<128x96xbf16>, vector<96x128xbf16>, vector<128x128xf32> -> vector<128x128xf32>
    %c0_5 = arith.constant 0 : index
    %c0_6 = arith.constant 0 : index
    %5 = vector.load %arg7[%c0_5, %c0_6] : memref<128x128xf32, #tpu.memory_space<vmem>>, vector<128x128xf32>
    tpu.vector_store %arg7[%c0_5, %c0_6], %4 {strides = array<i32>} : memref<128x128xf32, #tpu.memory_space<vmem>>, vector<128x128xf32>,
    %6 = vector.extract_strided_slice %1 {offsets = [16, 0], sizes = [112, 96], strides = [1, 1]} : vector<128x96xbf16> to vector<112x96xbf16>
    %c0_7 = arith.constant 0 : index
    %c0_8 = arith.constant 0 : index
    %c0_9 = arith.constant 0 : index
    %7 = vector.load %arg3[%c0_7, %c0_8, %c0_9] : memref<1x16x96xbf16, #tpu.memory_space<vmem>>, vector<1x16x96xbf16>
    %8 = vector.shape_cast %7 : vector<1x16x96xbf16> to vector<16x96xbf16>
    %9 = tpu.concatenate %6, %8 in 0 : vector<112x96xbf16>, vector<16x96xbf16> -> vector<128x96xbf16>
    %c0_10 = arith.constant 0 : index
    %c0_11 = arith.constant 0 : index
    %10 = vector.load %arg7[%c0_10, %c0_11] : memref<128x128xf32, #tpu.memory_space<vmem>>, vector<128x128xf32>
    %c1 = arith.constant 1 : index
    %c0_12 = arith.constant 0 : index
    %c0_13 = arith.constant 0 : index
    %11 = vector.load %arg4[%c1, %c0_12, %c0_13] : memref<2x96x128xbf16, #tpu.memory_space<vmem>>, vector<1x96x128xbf16>
    %12 = vector.shape_cast %11 : vector<1x96x128xbf16> to vector<96x128xbf16>
    %cst_14 = arith.constant dense<0.000000e+00> : vector<128x128xf32>
    %13 = tpu.matmul %9, %12, %cst_14 {dimension_numbers = #tpu.dot_dimension_numbers<[1], [0], [0], [1], [0, 0, 1, 1], [], []>} : vector<128x96xbf16>, vector<96x128xbf16>, vector<128x128xf32> -> vector<128x128xf32>
    %14 = arith.addf %10, %13 : vector<128x128xf32>
    %c0_15 = arith.constant 0 : index
    %c0_16 = arith.constant 0 : index
    %15 = vector.load %arg7[%c0_15, %c0_16] : memref<128x128xf32, #tpu.memory_space<vmem>>, vector<128x128xf32>
    tpu.vector_store %arg7[%c0_15, %c0_16], %14 {strides = array<i32>} : memref<128x128xf32, #tpu.memory_space<vmem>>, vector<128x128xf32>,
    %c0_17 = arith.constant 0 : index
    %c0_18 = arith.constant 0 : index
    %16 = vector.load %arg7[%c0_17, %c0_18] : memref<128x128xf32, #tpu.memory_space<vmem>>, vector<128x128xf32>
    %c0_19 = arith.constant 0 : index
    %c0_20 = arith.constant 0 : index
    %17 = vector.load %arg5[%c0_19, %c0_20] : memref<1x128xf32, #tpu.memory_space<vmem>>, vector<1x128xf32>
    %18 = vector.broadcast %17 : vector<1x128xf32> to vector<128x128xf32>
    %19 = arith.addf %16, %18 : vector<128x128xf32>
    %cst_21 = arith.constant 1.000000e-01 : f32
    %20 = vector.broadcast %cst_21 : f32 to vector<128x128xf32>
    %21 = arith.mulf %20, %19 : vector<128x128xf32>
    %22 = arith.maximumf %19, %21 : vector<128x128xf32>
    %23 = arith.truncf %22 : vector<128x128xf32> to vector<128x128xbf16>
    %c0_22 = arith.constant 0 : index
    %c0_23 = arith.constant 0 : index
    %c0_24 = arith.constant 0 : index
    %24 = vector.load %arg6[%c0_22, %c0_23, %c0_24] : memref<1x128x128xbf16, #tpu.memory_space<vmem>>, vector<1x128x128xbf16>
    %25 = vector.shape_cast %24 : vector<1x128x128xbf16> to vector<128x128xbf16>
    %26 = vector.shape_cast %23 : vector<128x128xbf16> to vector<1x128x128xbf16>
    tpu.vector_store %arg6[%c0_22, %c0_23, %c0_24], %26 {strides = array<i32>} : memref<1x128x128xbf16, #tpu.memory_space<vmem>>, vector<1x128x128xbf16>,
    return
  }
  func.func @transform_0(%arg0: i32, %arg1: i32) -> (i32, i32, i32) {
    %c0_i32 = arith.constant 0 : i32
    %c0_i32_0 = arith.constant 0 : i32
    return %arg0, %arg1, %c0_i32 : i32, i32, i32
  }
  func.func @transform_1(%arg0: i32, %arg1: i32) -> (i32, i32, i32) {
    %c1_i32 = arith.constant 1 : i32
    %0 = arith.addi %arg1, %c1_i32 : i32
    %c8_i32 = arith.constant 8 : i32
    %1 = arith.muli %0, %c8_i32 : i32
    %c0_i32 = arith.constant 0 : i32
    %c0_i32_0 = arith.constant 0 : i32
    return %arg0, %1, %c0_i32 : i32, i32, i32
  }
  func.func @transform_2(%arg0: i32, %arg1: i32) -> (i32, i32, i32) {
    %c0_i32 = arith.constant 0 : i32
    %c0_i32_0 = arith.constant 0 : i32
    %c0_i32_1 = arith.constant 0 : i32
    %c0_i32_2 = arith.constant 0 : i32
    return %c0_i32, %c0_i32_0, %c0_i32_1 : i32, i32, i32
  }
  func.func @transform_3(%arg0: i32, %arg1: i32) -> (i32, i32) {
    %c0_i32 = arith.constant 0 : i32
    %c0_i32_0 = arith.constant 0 : i32
    %c0_i32_1 = arith.constant 0 : i32
    return %c0_i32, %c0_i32_0 : i32, i32
  }
  func.func @transform_4(%arg0: i32, %arg1: i32) -> (i32, i32, i32) {
    %c0_i32 = arith.constant 0 : i32
    %c0_i32_0 = arith.constant 0 : i32
    return %arg0, %arg1, %c0_i32 : i32, i32, i32
  }
}

module attributes {stable_mosaic.version = 11 : i64} {
  func.func @kernel(%arg0: i32, %arg1: i32, %arg2: memref<1x64x192xbf16, #tpu.memory_space<vmem>>, %arg3: memref<1x16x192xbf16, #tpu.memory_space<vmem>>, %arg4: memref<2x192x128xbf16, #tpu.memory_space<vmem>>, %arg5: memref<1x128xf32, #tpu.memory_space<vmem>>, %arg6: memref<1x64x128xf32, #tpu.memory_space<vmem>>, %arg7: memref<64x128xf32, #tpu.memory_space<vmem>>) attributes {dimension_semantics = [#tpu.dimension_semantics<parallel>, #tpu.dimension_semantics<parallel>], iteration_bounds = array<i64: 2, 2>, scalar_prefetch = 0 : i64, scratch_operands = 1 : i64, tpu.core_type = #tpu.core_type<tc>, window_params = [{transform_indices = @transform_0, window_bounds = array<i64: 1, 64, 192>}, {transform_indices = @transform_1, window_bounds = array<i64: 1, 16, 192>}, {pipeline_mode = #tpu.pipeline_mode<synchronous>, transform_indices = @transform_2, window_bounds = array<i64: 2, 192, 128>}, {pipeline_mode = #tpu.pipeline_mode<synchronous>, transform_indices = @transform_3, window_bounds = array<i64: 1, 128>}, {transform_indices = @transform_4, window_bounds = array<i64: 1, 64, 128>}]} {
    %c0 = arith.constant 0 : index
    %c0_0 = arith.constant 0 : index
    %c0_1 = arith.constant 0 : index
    %0 = vector.load %arg2[%c0, %c0_0, %c0_1] : memref<1x64x192xbf16, #tpu.memory_space<vmem>>, vector<1x64x192xbf16>
    %1 = vector.shape_cast %0 : vector<1x64x192xbf16> to vector<64x192xbf16>
    %c0_2 = arith.constant 0 : index
    %c0_3 = arith.constant 0 : index
    %c0_4 = arith.constant 0 : index
    %2 = vector.load %arg4[%c0_2, %c0_3, %c0_4] : memref<2x192x128xbf16, #tpu.memory_space<vmem>>, vector<1x192x128xbf16>
    %3 = vector.shape_cast %2 : vector<1x192x128xbf16> to vector<192x128xbf16>
    %cst = arith.constant dense<0.000000e+00> : vector<64x128xf32>
    %4 = tpu.matmul %1, %3, %cst {dimension_numbers = #tpu.dot_dimension_numbers<[1], [0], [0], [1], [0, 0, 1, 1], [], []>} : vector<64x192xbf16>, vector<192x128xbf16>, vector<64x128xf32> -> vector<64x128xf32>
    %c0_5 = arith.constant 0 : index
    %c0_6 = arith.constant 0 : index
    %5 = vector.load %arg7[%c0_5, %c0_6] : memref<64x128xf32, #tpu.memory_space<vmem>>, vector<64x128xf32>
    tpu.vector_store %arg7[%c0_5, %c0_6], %4 {strides = array<i32>} : memref<64x128xf32, #tpu.memory_space<vmem>>, vector<64x128xf32>,
    %6 = vector.extract_strided_slice %1 {offsets = [16, 0], sizes = [48, 192], strides = [1, 1]} : vector<64x192xbf16> to vector<48x192xbf16>
    %c0_7 = arith.constant 0 : index
    %c0_8 = arith.constant 0 : index
    %c0_9 = arith.constant 0 : index
    %7 = vector.load %arg3[%c0_7, %c0_8, %c0_9] : memref<1x16x192xbf16, #tpu.memory_space<vmem>>, vector<1x16x192xbf16>
    %8 = vector.shape_cast %7 : vector<1x16x192xbf16> to vector<16x192xbf16>
    %9 = tpu.concatenate %6, %8 in 0 : vector<48x192xbf16>, vector<16x192xbf16> -> vector<64x192xbf16>
    %c0_10 = arith.constant 0 : index
    %c0_11 = arith.constant 0 : index
    %10 = vector.load %arg7[%c0_10, %c0_11] : memref<64x128xf32, #tpu.memory_space<vmem>>, vector<64x128xf32>
    %c1 = arith.constant 1 : index
    %c0_12 = arith.constant 0 : index
    %c0_13 = arith.constant 0 : index
    %11 = vector.load %arg4[%c1, %c0_12, %c0_13] : memref<2x192x128xbf16, #tpu.memory_space<vmem>>, vector<1x192x128xbf16>
    %12 = vector.shape_cast %11 : vector<1x192x128xbf16> to vector<192x128xbf16>
    %cst_14 = arith.constant dense<0.000000e+00> : vector<64x128xf32>
    %13 = tpu.matmul %9, %12, %cst_14 {dimension_numbers = #tpu.dot_dimension_numbers<[1], [0], [0], [1], [0, 0, 1, 1], [], []>} : vector<64x192xbf16>, vector<192x128xbf16>, vector<64x128xf32> -> vector<64x128xf32>
    %14 = arith.addf %10, %13 : vector<64x128xf32>
    %c0_15 = arith.constant 0 : index
    %c0_16 = arith.constant 0 : index
    %15 = vector.load %arg7[%c0_15, %c0_16] : memref<64x128xf32, #tpu.memory_space<vmem>>, vector<64x128xf32>
    tpu.vector_store %arg7[%c0_15, %c0_16], %14 {strides = array<i32>} : memref<64x128xf32, #tpu.memory_space<vmem>>, vector<64x128xf32>,
    %c0_17 = arith.constant 0 : index
    %c0_18 = arith.constant 0 : index
    %16 = vector.load %arg7[%c0_17, %c0_18] : memref<64x128xf32, #tpu.memory_space<vmem>>, vector<64x128xf32>
    %c0_19 = arith.constant 0 : index
    %c0_20 = arith.constant 0 : index
    %17 = vector.load %arg5[%c0_19, %c0_20] : memref<1x128xf32, #tpu.memory_space<vmem>>, vector<1x128xf32>
    %18 = vector.broadcast %17 : vector<1x128xf32> to vector<64x128xf32>
    %19 = arith.addf %16, %18 : vector<64x128xf32>
    %cst_21 = arith.constant 1.000000e-01 : f32
    %20 = vector.broadcast %cst_21 : f32 to vector<64x128xf32>
    %21 = arith.mulf %20, %19 : vector<64x128xf32>
    %22 = arith.maximumf %19, %21 : vector<64x128xf32>
    %c0_22 = arith.constant 0 : index
    %c0_23 = arith.constant 0 : index
    %c0_24 = arith.constant 0 : index
    %23 = vector.load %arg6[%c0_22, %c0_23, %c0_24] : memref<1x64x128xf32, #tpu.memory_space<vmem>>, vector<1x64x128xf32>
    %24 = vector.shape_cast %23 : vector<1x64x128xf32> to vector<64x128xf32>
    %25 = vector.shape_cast %22 : vector<64x128xf32> to vector<1x64x128xf32>
    tpu.vector_store %arg6[%c0_22, %c0_23, %c0_24], %25 {strides = array<i32>} : memref<1x64x128xf32, #tpu.memory_space<vmem>>, vector<1x64x128xf32>,
    return
  }
  func.func @transform_0(%arg0: i32, %arg1: i32) -> (i32, i32, i32) {
    %c0_i32 = arith.constant 0 : i32
    %c0_i32_0 = arith.constant 0 : i32
    return %arg0, %arg1, %c0_i32 : i32, i32, i32
  }
  func.func @transform_1(%arg0: i32, %arg1: i32) -> (i32, i32, i32) {
    %c1_i32 = arith.constant 1 : i32
    %0 = arith.addi %arg1, %c1_i32 : i32
    %c4_i32 = arith.constant 4 : i32
    %1 = arith.muli %0, %c4_i32 : i32
    %c0_i32 = arith.constant 0 : i32
    %c0_i32_0 = arith.constant 0 : i32
    return %arg0, %1, %c0_i32 : i32, i32, i32
  }
  func.func @transform_2(%arg0: i32, %arg1: i32) -> (i32, i32, i32) {
    %c0_i32 = arith.constant 0 : i32
    %c0_i32_0 = arith.constant 0 : i32
    %c0_i32_1 = arith.constant 0 : i32
    %c0_i32_2 = arith.constant 0 : i32
    return %c0_i32, %c0_i32_0, %c0_i32_1 : i32, i32, i32
  }
  func.func @transform_3(%arg0: i32, %arg1: i32) -> (i32, i32) {
    %c0_i32 = arith.constant 0 : i32
    %c0_i32_0 = arith.constant 0 : i32
    %c0_i32_1 = arith.constant 0 : i32
    return %c0_i32, %c0_i32_0 : i32, i32
  }
  func.func @transform_4(%arg0: i32, %arg1: i32) -> (i32, i32, i32) {
    %c0_i32 = arith.constant 0 : i32
    %c0_i32_0 = arith.constant 0 : i32
    return %arg0, %arg1, %c0_i32 : i32, i32, i32
  }
}

</mosaic_0001>

<llo_original>
// kernel: squeeze.8
$region0: #{squeeze.8}
  %s0 = inlined_call_operand.vmem [shape: bf16[1,3,6,16], index: 0, kind: input, shape index: {}]
  %s1 = inlined_call_operand.vmem [shape: bf16[18,16], index: 1, kind: output, shape index: {}]
  $region1: #{squeeze.8} parent=0
    #allocation0 [shape = 'u8[12288]{0}', space=vmem, size = 0x3000, scoped, tag = 'scoped mem for output reshape']
    #allocation1 [shape = 'u8[12288]{0}', space=vmem, size = 0x3000, scoped, tag = 'scoped mem for input reshape']
    %s3 = smul.u32 4, 2
    %s4 = sshllo.u32 0, %s3
    %s5 = smul.addr 4, 2
    %s6 = scalar_lea.vmem %s0, %s5
    %s7 = sshrl.u32 %s4, 1
    %s8 = sor.u32 %s4, %s7
    %s9 = sand.u32 %s8, 85
    %s10 = sshrl.u32 %s9, 1
    %s11 = sor.u32 %s9, %s10
    %s12 = sand.u32 51, %s11
    %s13 = sshrl.u32 %s12, 2
    %s14 = sor.u32 %s12, %s13
    %s15 = sand.u32 15, %s14
    %v16 = vld [vmem:[%s6] sm:%s15]
    %v17 = vunpack.c.l.bf16 %v16
    %v18 = vunpack.c.h.bf16 %v16
    %s19 = scalar_lea.vmem [#allocation1], 16
    %20 = vst [vmem:[%s19] sm:%s4] %v17
    %s21 = scalar_lea.vmem %s0, 4
    %s22 = sshrl.u32 %s4, 1
    %s23 = sor.u32 %s4, %s22
    %s24 = sand.u32 %s23, 85
    %s25 = sshrl.u32 %s24, 1
    %s26 = sor.u32 %s24, %s25
    %s27 = sand.u32 51, %s26
    %s28 = sshrl.u32 %s27, 2
    %s29 = sor.u32 %s27, %s28
    %s30 = sand.u32 15, %s29
    %v31 = vld [vmem:[%s21] sm:%s30]
    %v32 = vunpack.c.l.bf16 %v31
    %v33 = vunpack.c.h.bf16 %v31
    %s34 = scalar_lea.vmem [#allocation1], 8
    %35 = vst [vmem:[%s34] sm:%s4] %v32
    %s36 = sshrl.u32 %s4, 1
    %s37 = sor.u32 %s4, %s36
    %s38 = sand.u32 %s37, 85
    %s39 = sshrl.u32 %s38, 1
    %s40 = sor.u32 %s38, %s39
    %s41 = sand.u32 51, %s40
    %s42 = sshrl.u32 %s41, 2
    %s43 = sor.u32 %s41, %s42
    %s44 = sand.u32 15, %s43
    %v45 = vld [vmem:[%s0] sm:%s44]
    %v46 = vunpack.c.l.bf16 %v45
    %v47 = vunpack.c.h.bf16 %v45
    %48 = vst [vmem:[#allocation1] sm:%s4] %v46
    %v49 = vld [vmem:[#allocation1] sm:$0x3f]
    %vm50 = vcmask 130048
    %51 = vst.msk [vmem:[#allocation0] sm:$0x3f] %vm50, %v49
    %s52 = scalar_lea.vmem [#allocation1], 8
    %v53 = vld [vmem:[%s52] sm:$0x3f]
    %vm54 = vcmask 130048
    %s55 = scalar_lea.vmem [#allocation0], 6
    %56 = vst.msk [vmem:[%s55] sm:$0x3f] %vm54, %v53
    %s57 = scalar_lea.vmem [#allocation1], 16
    %v58 = vld [vmem:[%s57] sm:$0x3f]
    %vm59 = vcmask 130048
    %s60 = scalar_lea.vmem [#allocation0], 12
    %61 = vst.msk [vmem:[%s60] sm:$0x3f] %vm59, %v58
    %s63 = smul.u32 4, 2
    %s64 = sshllo.u32 0, %s63
    %s65 = sshrl.u32 %s63, 1
    %v66 = vld [vmem:[#allocation0] sm:%s64]
    %v67 = vpack.c.bf16 0.0, %v66
    %s68 = sshllo.u32 0, %s65
    %69 = vst [vmem:[%s1] sm:%s68] %v67
    %s70 = scalar_lea.vmem [#allocation0], 8
    %v71 = vld [vmem:[%s70] sm:%s64]
    %v72 = vpack.c.bf16 0.0, %v71
    %s73 = sshllo.u32 0, %s65
    %s74 = scalar_lea.vmem %s1, 4
    %75 = vst [vmem:[%s74] sm:%s73] %v72
    %s76 = scalar_lea.vmem [#allocation0], 16
    %v77 = vld [vmem:[%s76] sm:%s64]
    %v78 = vpack.c.bf16 0.0, %v77
    %s79 = sshllo.u32 0, %s65
    %s80 = smul.addr 4, 2
    %s81 = scalar_lea.vmem %s1, %s80
    %82 = vst [vmem:[%s81] sm:%s79] %v78

// kernel: flownet_forward.3
$region0: #{flownet_forward.3}
  #allocation0 [shape = 'u32[]', space=smem, size = 0x4, offset = 0x4, fixed_abs, tag = 'smem constant byte address 0x4 - core index']
  #allocation1 [shape = 'u32[144,128]{1,0:T(1,128)}', space=vmem, size = 0x12000, scoped, tag = 'internal scratch']
  #allocation2 [shape = 'f32[512,128]{1,0:T(8,128)}', space=vmem, size = 0x40000, scoped, tag = 'scratch operand']
  %s0 = inlined_call_operand.vmem [shape: bf16[2,1056,36], index: 0, kind: input, shape index: {}, may-alias: {0,1}]
  %s1 = inlined_call_operand.vmem [shape: bf16[2,1056,36], index: 1, kind: input, shape index: {}, may-alias: {0,1}]
  %s2 = inlined_call_operand.vmem [shape: bf16[2,36,128], index: 2, kind: input, shape index: {}]
  %s3 = inlined_call_operand.vmem [shape: f32[1,128], index: 3, kind: input, shape index: {}]
  %s4 = inlined_call_operand.vmem [shape: bf16[2,1024,128], index: 4, kind: output, shape index: {}]
  %s5 = sld [smem:[#allocation0]]
  $region49: #{flownet_forward.3} parent=0
    _
  %s7 = ssub.s32 1, %s5
  %s8 = scalar_select 0, %s7, %s5
  loop: start=0, step=1, limit=6
  $region2: #{flownet_forward.3} parent=0 // loop_pre_header
    _
  $region3: #{flownet_forward.3} parent=0 // loop_header
    %s10 = sphi 0, %s14
    %p11 = scmp.ge.s32.totalorder %s10, 6
    %s17 = sphi 0, %s29
    %s18 = sphi 0, %s25
    %s19 = sphi 0, %s17
    %s20 = sphi 0, %s18
    %s21 = sphi 0, %s19
    %s22 = sphi 0, %s20
    %s34 = sphi 0, %s36
    %s37 = sphi 0, %s34
    %s38 = sphi 0, %s37
    %s54 = sphi 0, %s38
    %s66 = sphi 0, %s68
    %s69 = sphi 0, %s66
    %s70 = sphi 0, %s69
    %s86 = sphi 0, %s70
    %s90 = sphi 0, %s90
    %s92 = sphi 0, %s90
    %s93 = sphi 0, %s92
    %s107 = sphi 0, %s93
    %s111 = sphi 0, %s111
    %s113 = sphi 0, %s111
    %s114 = sphi 0, %s113
    %s128 = sphi 0, %s114
    %s136 = sphi 0, %s138
    %s139 = sphi 0, %s136
    %s140 = sphi 0, %s139
    %s156 = sphi 0, %s140
  $region4: #{flownet_forward.3} parent=0 // loop_header_branch
    %13 = sbr.rel (%p11) target = $region8
  $region5: #{flownet_forward.3} parent=0 // loop_body
    %s15 = ssub.s32 %s10, 1
    %s16 = ssub.s32 %s10, 2
    %s23 = sadd.s32 1, %s18
    %p24 = scmp.ge.s32.totalorder %s23, 2
    %s25 = scalar_select %p24, 0, %s23
    %s26 = sadd.s32 1, %s17
    %s27 = scalar_select %p24, %s26, %s17
    %p28 = scmp.ge.s32.totalorder %s27, 2
    %s29 = scalar_select %p28, 0, %s27
    %s30 = ssub.s32 %s17, %s29
    %s31 = ssub.s32 %s18, %s25
    %s32 = sor.u32 %s30, %s31
    %p33 = scmp.eq.s32.totalorder %s32, 0
    %s35 = sadd.s32 %s34, 1
    %s36 = scalar_select %p33, %s34, %s35
    %p39 = pneg %p33
    %p40 = scmp.eq.s32.totalorder %s10, 3
    %p41 = por %p39, %p40
    %p42 = scmp.ne.s32.totalorder %s34, %s37
    %p43 = scmp.eq.s32.totalorder %s10, 0
    %p44 = por %p42, %p43
    %p45 = scmp.ne.s32.totalorder %s34, %s37
    %p46 = scmp.eq.s32.totalorder %s15, 3
    %p47 = por %p45, %p46
    %p48 = scmp.ne.s32.totalorder %s37, %s38
    %p49 = scmp.eq.s32.totalorder %s15, 0
    %p50 = por %p48, %p49
    %p51 = scmp.ne.s32.totalorder %s37, %s38
    %p52 = scmp.eq.s32.totalorder %s16, 3
    %p53 = por %p51, %p52
    %p55 = scmp.ne.s32.totalorder %s38, %s54
    %p56 = scmp.eq.s32.totalorder %s16, 0
    %p57 = por %p55, %p56
    %s58 = sadd.s32 %s18, 1
    %s59 = smul.u32 %s58, 16
    %s60 = sadd.s32 %s25, 1
    %s61 = smul.u32 %s60, 16
    %s62 = ssub.s32 %s17, %s29
    %s63 = ssub.s32 %s59, %s61
    %s64 = sor.u32 %s62, %s63
    %p65 = scmp.eq.s32.totalorder %s64, 0
    %s67 = sadd.s32 %s66, 1
    %s68 = scalar_select %p65, %s66, %s67
    %p71 = pneg %p65
    %p72 = scmp.eq.s32.totalorder %s10, 3
    %p73 = por %p71, %p72
    %p74 = scmp.ne.s32.totalorder %s66, %s69
    %p75 = scmp.eq.s32.totalorder %s10, 0
    %p76 = por %p74, %p75
    %p77 = scmp.ne.s32.totalorder %s66, %s69
    %p78 = scmp.eq.s32.totalorder %s15, 3
    %p79 = por %p77, %p78
    %p80 = scmp.ne.s32.totalorder %s69, %s70
    %p81 = scmp.eq.s32.totalorder %s15, 0
    %p82 = por %p80, %p81
    %p83 = scmp.ne.s32.totalorder %s69, %s70
    %p84 = scmp.eq.s32.totalorder %s16, 3
    %p85 = por %p83, %p84
    %p87 = scmp.ne.s32.totalorder %s70, %s86
    %p88 = scmp.eq.s32.totalorder %s16, 0
    %p89 = por %p87, %p88
    %s91 = sadd.s32 %s90, 1
    %p94 = scmp.eq.s32.totalorder %s10, 3
    %p95 = scmp.ne.s32.totalorder %s90, %s92
    %p96 = scmp.eq.s32.totalorder %s10, 0
    %p97 = por %p95, %p96
    %p98 = scmp.ne.s32.totalorder %s90, %s92
    %p99 = scmp.eq.s32.totalorder %s15, 3
    %p100 = por %p98, %p99
    %p101 = scmp.ne.s32.totalorder %s92, %s93
    %p102 = scmp.eq.s32.totalorder %s15, 0
    %p103 = por %p101, %p102
    %p104 = scmp.ne.s32.totalorder %s92, %s93
    %p105 = scmp.eq.s32.totalorder %s16, 3
    %p106 = por %p104, %p105
    %p108 = scmp.ne.s32.totalorder %s93, %s107
    %p109 = scmp.eq.s32.totalorder %s16, 0
    %p110 = por %p108, %p109
    %s112 = sadd.s32 %s111, 1
    %p115 = scmp.eq.s32.totalorder %s10, 3
    %p116 = scmp.ne.s32.totalorder %s111, %s113
    %p117 = scmp.eq.s32.totalorder %s10, 0
    %p118 = por %p116, %p117
    %p119 = scmp.ne.s32.totalorder %s111, %s113
    %p120 = scmp.eq.s32.totalorder %s15, 3
    %p121 = por %p119, %p120
    %p122 = scmp.ne.s32.totalorder %s113, %s114
    %p123 = scmp.eq.s32.totalorder %s15, 0
    %p124 = por %p122, %p123
    %p125 = scmp.ne.s32.totalorder %s113, %s114
    %p126 = scmp.eq.s32.totalorder %s16, 3
    %p127 = por %p125, %p126
    %p129 = scmp.ne.s32.totalorder %s114, %s128
    %p130 = scmp.eq.s32.totalorder %s16, 0
    %p131 = por %p129, %p130
    %s132 = ssub.s32 %s17, %s29
    %s133 = ssub.s32 %s18, %s25
    %s134 = sor.u32 %s132, %s133
    %p135 = scmp.eq.s32.totalorder %s134, 0
    %s137 = sadd.s32 %s136, 1
    %s138 = scalar_select %p135, %s136, %s137
    %p141 = pneg %p135
    %p142 = scmp.eq.s32.totalorder %s10, 3
    %p143 = por %p141, %p142
    %p144 = scmp.ne.s32.totalorder %s136, %s139
    %p145 = scmp.eq.s32.totalorder %s10, 0
    %p146 = por %p144, %p145
    %p147 = scmp.ne.s32.totalorder %s136, %s139
    %p148 = scmp.eq.s32.totalorder %s15, 3
    %p149 = por %p147, %p148
    %p150 = scmp.ne.s32.totalorder %s139, %s140
    %p151 = scmp.eq.s32.totalorder %s15, 0
    %p152 = por %p150, %p151
    %p153 = scmp.ne.s32.totalorder %s139, %s140
    %p154 = scmp.eq.s32.totalorder %s16, 3
    %p155 = por %p153, %p154
    %p157 = scmp.ne.s32.totalorder %s140, %s156
    %p158 = scmp.eq.s32.totalorder %s16, 0
    %p159 = por %p157, %p158
    %p160 = scmp.le.s32.totalorder 1, %s10
    %p161 = scmp.lt.s32.totalorder %s10, 5
    %p162 = pnand %p160, %p161
    %p163 = pneg %p162
    // Predicated region
    $region9: #{flownet_forward.3} parent=5 // pred_check
      _
    $region10: #{flownet_forward.3} parent=5 // pred_check_branch
      %165 = sbr.rel (%p162) target = $region12
    $region11: #{flownet_forward.3} parent=5 // pred_region
      %s166 = ssub.s32 %s10, 1
      // Predicated region
      $region13: #{flownet_forward.3} parent=11 // pred_check
        %p167 = pneg %p103
      $region14: #{flownet_forward.3} parent=11 // pred_check_branch
        %169 = sbr.rel (%p167) target = $region16
      $region15: #{flownet_forward.3} parent=11 // pred_region
        _
      $region16: #{flownet_forward.3} parent=11 // pred_fallthru
        _
      // Predicated region
      $region17: #{flownet_forward.3} parent=11 // pred_check
        %p170 = pneg %p124
      $region18: #{flownet_forward.3} parent=11 // pred_check_branch
        %172 = sbr.rel (%p170) target = $region20
      $region19: #{flownet_forward.3} parent=11 // pred_region
        _
      $region20: #{flownet_forward.3} parent=11 // pred_fallthru
        _
    $region12: #{flownet_forward.3} parent=5 // pred_fallthru
      _
    %p173 = scmp.lt.s32.totalorder %s10, 4
    // Predicated region
    $region21: #{flownet_forward.3} parent=5 // pred_check
      %p174 = pneg %p173
    $region22: #{flownet_forward.3} parent=5 // pred_check_branch
      %176 = sbr.rel (%p174) target = $region24
    $region23: #{flownet_forward.3} parent=5 // pred_region
      // Predicated region
      $region25: #{flownet_forward.3} parent=23 // pred_check
        %p177 = pneg %p44
      $region26: #{flownet_forward.3} parent=23 // pred_check_branch
        %179 = sbr.rel (%p177) target = $region28
      $region27: #{flownet_forward.3} parent=23 // pred_region
        %s180 = smul.u32 64, %s18
        %s181 = ssub.s32 132, %s180
        %p182 = scmp.lt.s32.totalorder %s181, 64
        %s183 = scalar_select %p182, %s181, 64
        %s184 = smul.u32 64, %s183
        %p185 = scmp.lt.s32.totalorder %s17, 1
        %s186 = scalar_select %p185, %s17, 1
        %p187 = scmp.lt.s32.totalorder %s180, 131
        %s188 = scalar_select %p187, %s180, 131
        %s189 = smul.addr %s186, 132
        %s190 = sadd.s32 %s188, %s189
        %s191 = smul.addr %s190, 4
        %s192 = scalar_lea.vmem %s0, %s191
        %s193 = smul.u32 64, %s18
        %s194 = ssub.s32 132, %s193
        %p195 = scmp.lt.s32.totalorder %s194, 64
        %s196 = scalar_select %p195, %s194, 64
        %s197 = smul.u32 64, %s196
      $region28: #{flownet_forward.3} parent=23 // pred_fallthru
        _
      // Predicated region
      $region29: #{flownet_forward.3} parent=23 // pred_check
        %p198 = pneg %p76
      $region30: #{flownet_forward.3} parent=23 // pred_check_branch
        %200 = sbr.rel (%p198) target = $region32
      $region31: #{flownet_forward.3} parent=23 // pred_region
        %s201 = sadd.s32 %s18, 1
        %s202 = smul.u32 %s201, 16
        %s203 = smul.u32 4, %s202
        %p204 = scmp.lt.s32.totalorder %s17, 1
        %s205 = scalar_select %p204, %s17, 1
        %p206 = scmp.lt.s32.totalorder %s203, 131
        %s207 = scalar_select %p206, %s203, 131
        %s208 = smul.addr %s205, 132
        %s209 = sadd.s32 %s207, %s208
        %s210 = smul.addr %s209, 4
        %s211 = scalar_lea.vmem %s1, %s210
        %s212 = sadd.s32 %s18, 1
        %s213 = smul.u32 %s212, 16
        %s214 = smul.u32 4, %s213
      $region32: #{flownet_forward.3} parent=23 // pred_fallthru
        _
    $region24: #{flownet_forward.3} parent=5 // pred_fallthru
      _
    %p215 = scmp.le.s32.totalorder 1, %s10
    %p216 = scmp.lt.s32.totalorder %s10, 5
    %p217 = pnand %p215, %p216
    %p218 = pneg %p217
    // Predicated region
    $region33: #{flownet_forward.3} parent=5 // pred_check
      _
    $region34: #{flownet_forward.3} parent=5 // pred_check_branch
      %220 = sbr.rel (%p217) target = $region36
    $region35: #{flownet_forward.3} parent=5 // pred_region
      %s221 = ssub.s32 %s10, 1
      %s222 = smul.u32 64, %s20
      %s223 = ssub.s32 132, %s222
      %p224 = scmp.lt.s32.totalorder %s223, 64
      %s225 = scalar_select %p224, %s223, 64
      %s226 = smul.u32 64, %s225
      %p227 = scmp.lt.s32.totalorder %s19, 1
      %s228 = scalar_select %p227, %s19, 1
      %p229 = scmp.lt.s32.totalorder %s222, 131
      %s230 = scalar_select %p229, %s222, 131
      %s231 = smul.addr %s228, 132
      %s232 = sadd.s32 %s230, %s231
      %s233 = smul.addr %s232, 4
      %s234 = scalar_lea.vmem %s0, %s233
      %p235 = pneg %p50
      %p236 = pneg %p47
      %s237 = sadd.s32 %s20, 1
      %s238 = smul.u32 %s237, 16
      %s239 = smul.u32 4, %s238
      %p240 = scmp.lt.s32.totalorder %s19, 1
      %s241 = scalar_select %p240, %s19, 1
      %p242 = scmp.lt.s32.totalorder %s239, 131
      %s243 = scalar_select %p242, %s239, 131
      %s244 = smul.addr %s241, 132
      %s245 = sadd.s32 %s243, %s244
      %s246 = smul.addr %s245, 4
      %s247 = scalar_lea.vmem %s1, %s246
      %p248 = pneg %p82
      %p249 = pneg %p79
      %p250 = pneg %p103
      %p251 = pneg %p100
      %p252 = pneg %p124
      %p253 = pneg %p121
      %p254 = pneg %p152
      %p255 = pneg %p149
      %s256 = smul.u32 64, %s20
      %p257 = scmp.lt.s32.totalorder %s19, 1
      %s258 = scalar_select %p257, %s19, 1
      %p259 = scmp.lt.s32.totalorder %s256, 127
      %s260 = scalar_select %p259, %s256, 127
      %s261 = smul.addr %s258, 128
      %s262 = sadd.s32 %s260, %s261
      %s263 = smul.addr %s262, 4
      %s264 = scalar_lea.vmem %s4, %s263
      %s265 = smul.u32 64, %s20
      %s266 = ssub.s32 132, %s265
      %p267 = scmp.lt.s32.totalorder %s266, 64
      %s268 = scalar_select %p267, %s266, 64
      %s269 = smul.u32 64, %s268
      %p270 = scmp.lt.s32.totalorder %s19, 1
      %s271 = scalar_select %p270, %s19, 1
      %p272 = scmp.lt.s32.totalorder %s265, 131
      %s273 = scalar_select %p272, %s265, 131
      %s274 = smul.addr %s271, 132
      %s275 = sadd.s32 %s273, %s274
      %s276 = smul.addr %s275, 4
      %s277 = scalar_lea.vmem %s0, %s276
      %s278 = smul.u32 64, %s20
      %s279 = ssub.s32 132, %s278
      %p280 = scmp.lt.s32.totalorder %s279, 64
      %s281 = scalar_select %p280, %s279, 64
      %s282 = smul.u32 64, %s281
      %s283 = sadd.s32 %s20, 1
      %s284 = smul.u32 %s283, 16
      %s285 = smul.u32 4, %s284
      %p286 = scmp.lt.s32.totalorder %s19, 1
      %s287 = scalar_select %p286, %s19, 1
      %p288 = scmp.lt.s32.totalorder %s285, 131
      %s289 = scalar_select %p288, %s285, 131
      %s290 = smul.addr %s287, 132
      %s291 = sadd.s32 %s289, %s290
      %s292 = smul.addr %s291, 4
      %s293 = scalar_lea.vmem %s1, %s292
      %s294 = sadd.s32 %s20, 1
      %s295 = smul.u32 %s294, 16
      %s296 = smul.u32 4, %s295
      %s297 = smul.u32 64, %s20
      %p298 = scmp.lt.s32.totalorder %s19, 1
      %s299 = scalar_select %p298, %s19, 1
      %p300 = scmp.lt.s32.totalorder %s297, 127
      %s301 = scalar_select %p300, %s297, 127
      %s302 = smul.addr %s299, 128
      %s303 = sadd.s32 %s301, %s302
      %s304 = smul.addr %s303, 4
      %s305 = scalar_lea.vmem %s4, %s304
      %s306 = smul.u32 64, %s20
      %v308 = vld [vmem:[%s277] sm:$0xf]
      %v309 = vld [vmem:[%s277 + $0x4] sm:$0xf]
      %v310 = vld [vmem:[%s277 + $0x8] sm:$0xf]
      %v311 = vld [vmem:[%s277 + $0xc] sm:$0xf]
      %v312 = vld [vmem:[%s277 + $0x10] sm:$0xf]
      %v313 = vld [vmem:[%s277 + $0x14] sm:$0xf]
      %v314 = vld [vmem:[%s277 + $0x18] sm:$0xf]
      %v315 = vld [vmem:[%s277 + $0x1c] sm:$0xf]
      %v316 = vld [vmem:[%s277 + $0x20] sm:$0xf]
      %v317 = vld [vmem:[%s277 + $0x24] sm:$0xf]
      %v318 = vld [vmem:[%s277 + $0x28] sm:$0xf]
      %v319 = vld [vmem:[%s277 + $0x2c] sm:$0xf]
      %v320 = vld [vmem:[%s277 + $0x30] sm:$0xf]
      %v321 = vld [vmem:[%s277 + $0x34] sm:$0xf]
      %v322 = vld [vmem:[%s277 + $0x38] sm:$0xf]
      %v323 = vld [vmem:[%s277 + $0x3c] sm:$0xf]
      %v324 = vld [vmem:[%s277 + $0x40] sm:$0xf]
      %v325 = vld [vmem:[%s277 + $0x44] sm:$0xf]
      %v326 = vld [vmem:[%s277 + $0x48] sm:$0xf]
      %v327 = vld [vmem:[%s277 + $0x4c] sm:$0xf]
      %v328 = vld [vmem:[%s277 + $0x50] sm:$0xf]
      %v329 = vld [vmem:[%s277 + $0x54] sm:$0xf]
      %v330 = vld [vmem:[%s277 + $0x58] sm:$0xf]
      %v331 = vld [vmem:[%s277 + $0x5c] sm:$0xf]
      %v332 = vld [vmem:[%s277 + $0x60] sm:$0xf]
      %v333 = vld [vmem:[%s277 + $0x64] sm:$0xf]
      %v334 = vld [vmem:[%s277 + $0x68] sm:$0xf]
      %v335 = vld [vmem:[%s277 + $0x6c] sm:$0xf]
      %v336 = vld [vmem:[%s277 + $0x70] sm:$0xf]
      %v337 = vld [vmem:[%s277 + $0x74] sm:$0xf]
      %v338 = vld [vmem:[%s277 + $0x78] sm:$0xf]
      %v339 = vld [vmem:[%s277 + $0x7c] sm:$0xf]
      %v340 = vld [vmem:[%s277 + $0x80] sm:$0xf]
      %v341 = vld [vmem:[%s277 + $0x84] sm:$0xf]
      %v342 = vld [vmem:[%s277 + $0x88] sm:$0xf]
      %v343 = vld [vmem:[%s277 + $0x8c] sm:$0xf]
      %v344 = vld [vmem:[%s277 + $0x90] sm:$0xf]
      %v345 = vld [vmem:[%s277 + $0x94] sm:$0xf]
      %v346 = vld [vmem:[%s277 + $0x98] sm:$0xf]
      %v347 = vld [vmem:[%s277 + $0x9c] sm:$0xf]
      %v348 = vld [vmem:[%s277 + $0xa0] sm:$0xf]
      %v349 = vld [vmem:[%s277 + $0xa4] sm:$0xf]
      %v350 = vld [vmem:[%s277 + $0xa8] sm:$0xf]
      %v351 = vld [vmem:[%s277 + $0xac] sm:$0xf]
      %v352 = vld [vmem:[%s277 + $0xb0] sm:$0xf]
      %v353 = vld [vmem:[%s277 + $0xb4] sm:$0xf]
      %v354 = vld [vmem:[%s277 + $0xb8] sm:$0xf]
      %v355 = vld [vmem:[%s277 + $0xbc] sm:$0xf]
      %v356 = vld [vmem:[%s277 + $0xc0] sm:$0xf]
      %v357 = vld [vmem:[%s277 + $0xc4] sm:$0xf]
      %v358 = vld [vmem:[%s277 + $0xc8] sm:$0xf]
      %v359 = vld [vmem:[%s277 + $0xcc] sm:$0xf]
      %v360 = vld [vmem:[%s277 + $0xd0] sm:$0xf]
      %v361 = vld [vmem:[%s277 + $0xd4] sm:$0xf]
      %v362 = vld [vmem:[%s277 + $0xd8] sm:$0xf]
      %v363 = vld [vmem:[%s277 + $0xdc] sm:$0xf]
      %v364 = vld [vmem:[%s277 + $0xe0] sm:$0xf]
      %v365 = vld [vmem:[%s277 + $0xe4] sm:$0xf]
      %v366 = vld [vmem:[%s277 + $0xe8] sm:$0xf]
      %v367 = vld [vmem:[%s277 + $0xec] sm:$0xf]
      %v368 = vld [vmem:[%s277 + $0xf0] sm:$0xf]
      %v369 = vld [vmem:[%s277 + $0xf4] sm:$0xf]
      %v370 = vld [vmem:[%s277 + $0xf8] sm:$0xf]
      %v371 = vld [vmem:[%s277 + $0xfc] sm:$0xf]
      %v372 = vld [vmem:[%s2] sm:$0xf]
      %v373 = vld [vmem:[%s2 + $0x4] sm:$0xf]
      %v374 = vld [vmem:[%s2 + $0x8] sm:$0xf]
      %v375 = vld [vmem:[%s2 + $0xc] sm:$0xf]
      %v376 = vld [vmem:[%s2 + $0x10] sm:$0x3]
      %v441 = vunpack.c.l.b16 %v308
      %v442 = vunpack.c.l.b16 %v309
      %v443 = vunpack.c.l.b16 %v310
      %v444 = vunpack.c.l.b16 %v311
      %v445 = vunpack.c.l.b16 %v312
      %v446 = vunpack.c.l.b16 %v313
      %v447 = vunpack.c.l.b16 %v314
      %v448 = vunpack.c.l.b16 %v315
      %v449 = vunpack.c.l.b16 %v316
      %v450 = vunpack.c.l.b16 %v317
      %v451 = vunpack.c.l.b16 %v318
      %v452 = vunpack.c.l.b16 %v319
      %v453 = vunpack.c.l.b16 %v320
      %v454 = vunpack.c.l.b16 %v321
      %v455 = vunpack.c.l.b16 %v322
      %v456 = vunpack.c.l.b16 %v323
      %v457 = vunpack.c.l.b16 %v324
      %v458 = vunpack.c.l.b16 %v325
      %v459 = vunpack.c.l.b16 %v326
      %v460 = vunpack.c.l.b16 %v327
      %v461 = vunpack.c.l.b16 %v328
      %v462 = vunpack.c.l.b16 %v329
      %v463 = vunpack.c.l.b16 %v330
      %v464 = vunpack.c.l.b16 %v331
      %v465 = vunpack.c.l.b16 %v332
      %v466 = vunpack.c.l.b16 %v333
      %v467 = vunpack.c.l.b16 %v334
      %v468 = vunpack.c.l.b16 %v335
      %v469 = vunpack.c.l.b16 %v336
      %v470 = vunpack.c.l.b16 %v337
      %v471 = vunpack.c.l.b16 %v338
      %v472 = vunpack.c.l.b16 %v339
      %v473 = vunpack.c.l.b16 %v340
      %v474 = vunpack.c.l.b16 %v341
      %v475 = vunpack.c.l.b16 %v342
      %v476 = vunpack.c.l.b16 %v343
      %v477 = vunpack.c.l.b16 %v344
      %v478 = vunpack.c.l.b16 %v345
      %v479 = vunpack.c.l.b16 %v346
      %v480 = vunpack.c.l.b16 %v347
      %v481 = vunpack.c.l.b16 %v348
      %v482 = vunpack.c.l.b16 %v349
      %v483 = vunpack.c.l.b16 %v350
      %v484 = vunpack.c.l.b16 %v351
      %v485 = vunpack.c.l.b16 %v352
      %v486 = vunpack.c.l.b16 %v353
      %v487 = vunpack.c.l.b16 %v354
      %v488 = vunpack.c.l.b16 %v355
      %v489 = vunpack.c.l.b16 %v356
      %v490 = vunpack.c.l.b16 %v357
      %v491 = vunpack.c.l.b16 %v358
      %v492 = vunpack.c.l.b16 %v359
      %v493 = vunpack.c.l.b16 %v360
      %v494 = vunpack.c.l.b16 %v361
      %v495 = vunpack.c.l.b16 %v362
      %v496 = vunpack.c.l.b16 %v363
      %v497 = vunpack.c.l.b16 %v364
      %v498 = vunpack.c.l.b16 %v365
      %v499 = vunpack.c.l.b16 %v366
      %v500 = vunpack.c.l.b16 %v367
      %v501 = vunpack.c.l.b16 %v368
      %v502 = vunpack.c.l.b16 %v369
      %v503 = vunpack.c.l.b16 %v370
      %v504 = vunpack.c.l.b16 %v371
      %v505 = vpack.c.b16 %v442, %v441
      %v506 = vpack.c.b16 %v444, %v443
      %v507 = vpack.c.b16 %v446, %v445
      %v508 = vpack.c.b16 %v448, %v447
      %v509 = vpack.c.b16 %v450, %v449
      %v510 = vpack.c.b16 %v452, %v451
      %v511 = vpack.c.b16 %v454, %v453
      %v512 = vpack.c.b16 %v456, %v455
      %v513 = vpack.c.b16 %v458, %v457
      %v514 = vpack.c.b16 %v460, %v459
      %v515 = vpack.c.b16 %v462, %v461
      %v516 = vpack.c.b16 %v464, %v463
      %v517 = vpack.c.b16 %v466, %v465
      %v518 = vpack.c.b16 %v468, %v467
      %v519 = vpack.c.b16 %v470, %v469
      %v520 = vpack.c.b16 %v472, %v471
      %v521 = vpack.c.b16 %v474, %v473
      %v522 = vpack.c.b16 %v476, %v475
      %v523 = vpack.c.b16 %v478, %v477
      %v524 = vpack.c.b16 %v480, %v479
      %v525 = vpack.c.b16 %v482, %v481
      %v526 = vpack.c.b16 %v484, %v483
      %v527 = vpack.c.b16 %v486, %v485
      %v528 = vpack.c.b16 %v488, %v487
      %v529 = vpack.c.b16 %v490, %v489
      %v530 = vpack.c.b16 %v492, %v491
      %v531 = vpack.c.b16 %v494, %v493
      %v532 = vpack.c.b16 %v496, %v495
      %v533 = vpack.c.b16 %v498, %v497
      %v534 = vpack.c.b16 %v500, %v499
      %v535 = vpack.c.b16 %v502, %v501
      %v536 = vpack.c.b16 %v504, %v503
      %v542 = vunpack.c.l.b16 %v372
      %v543 = vunpack.c.l.b16 %v373
      %v544 = vunpack.c.l.b16 %v374
      %v545 = vunpack.c.l.b16 %v375
      %v546 = vunpack.c.l.b16 %v376
      %v547 = vpack.c.b16 %v543, %v542
      %v548 = vpack.c.b16 %v545, %v544
      %v549 = vpack.c.b16 %v546, %v546
      %vm552 = vcmask 293888
      %v554 = vsel %vm552, %v505, 0
      %v557 = vsel %vm552, %v506, 0
      %v560 = vsel %vm552, %v507, 0
      %v563 = vsel %vm552, %v508, 0
      %v566 = vsel %vm552, %v509, 0
      %v569 = vsel %vm552, %v510, 0
      %v572 = vsel %vm552, %v511, 0
      %v575 = vsel %vm552, %v512, 0
      %v578 = vsel %vm552, %v513, 0
      %v581 = vsel %vm552, %v514, 0
      %v584 = vsel %vm552, %v515, 0
      %v587 = vsel %vm552, %v516, 0
      %v590 = vsel %vm552, %v517, 0
      %v593 = vsel %vm552, %v518, 0
      %v596 = vsel %vm552, %v519, 0
      %v599 = vsel %vm552, %v520, 0
      %v602 = vsel %vm552, %v521, 0
      %v605 = vsel %vm552, %v522, 0
      %v608 = vsel %vm552, %v523, 0
      %v611 = vsel %vm552, %v524, 0
      %v614 = vsel %vm552, %v525, 0
      %v617 = vsel %vm552, %v526, 0
      %v620 = vsel %vm552, %v527, 0
      %v623 = vsel %vm552, %v528, 0
      %v626 = vsel %vm552, %v529, 0
      %v629 = vsel %vm552, %v530, 0
      %v632 = vsel %vm552, %v531, 0
      %v635 = vsel %vm552, %v532, 0
      %v638 = vsel %vm552, %v533, 0
      %v641 = vsel %vm552, %v534, 0
      %v644 = vsel %vm552, %v535, 0
      %v647 = vsel %vm552, %v536, 0
      %vm649 = vcmask 1041408
      %v651 = vsel %vm649, %v549, 0
      %653 = vmatprep.subr.bf16.mxu0 0
      %654 = vmatpush1.bf16.msra.mxu0 %v547
      %655 = vmatprep.subr.bf16.mxu0 0
      %656 = vmatpush1.bf16.msra.mxu0 %v548
      %657 = vmatprep.subr.bf16.mxu0 0
      %658 = vmatpush1.bf16.msra.mxu0 %v651
      %659 = vmatprep.subr.bf16.mxu0 0
      %660 = vmatpush1.bf16.msra.mxu0 0
      %661 = vmatprep.subr.bf16.mxu0 0
      %662 = vmatpush1.bf16.msra.mxu0 0
      %663 = vmatprep.subr.bf16.mxu0 0
      %664 = vmatpush1.bf16.msra.mxu0 0
      %665 = vmatprep.subr.bf16.mxu0 0
      %666 = vmatpush1.bf16.msra.mxu0 0
      %667 = vmatprep.subr.bf16.mxu0 0
      %668 = vmatpush1.bf16.msra.mxu0 0
      %669 = vmatprep.subr.bf16.mxu0 0
      %670 = vmatpush1.bf16.msra.mxu0 0
      %671 = vmatprep.subr.bf16.mxu0 0
      %672 = vmatpush1.bf16.msra.mxu0 0
      %673 = vmatprep.subr.bf16.mxu0 0
      %674 = vmatpush1.bf16.msra.mxu0 0
      %675 = vmatprep.subr.bf16.mxu0 0
      %676 = vmatpush1.bf16.msra.mxu0 0
      %677 = vmatprep.subr.bf16.mxu0 0
      %678 = vmatpush1.bf16.msra.mxu0 0
      %679 = vmatprep.subr.bf16.mxu0 0
      %680 = vmatpush1.bf16.msra.mxu0 0
      %681 = vmatprep.subr.bf16.mxu0 0
      %682 = vmatpush1.bf16.msra.mxu0 0
      %683 = vmatprep.subr.bf16.mxu0 0
      %684 = vmatpush1.bf16.msra.mxu0 0
      %685 = vmatprep.mubr.bf16.mxu0 0
      %686 = vmatmul.mubr.bf16.gmra.mrb[0].mxu0 %v554
      %v687 = vpop.f32.mrb[0].mxu0
      %v688 = vadd.f32 0.0, %v687
      %v689 = vpop.f32.mrb[0].mxu0
      %v690 = vpop.f32.mrb[0].mxu0
      %v691 = vadd.f32 0.0, %v690
      %v692 = vpop.f32.mrb[0].mxu0
      %693 = vmatprep.mubr.bf16.mxu0 0
      %694 = vmatmul.mubr.bf16.gmra.mrb[0].mxu0 %v557
      %v695 = vpop.f32.mrb[0].mxu0
      %v696 = vadd.f32 0.0, %v695
      %v697 = vpop.f32.mrb[0].mxu0
      %v698 = vpop.f32.mrb[0].mxu0
      %v699 = vadd.f32 0.0, %v698
      %v700 = vpop.f32.mrb[0].mxu0
      %701 = vmatprep.mubr.bf16.mxu0 0
      %702 = vmatmul.mubr.bf16.gmra.mrb[0].mxu0 %v560
      %v703 = vpop.f32.mrb[0].mxu0
      %v704 = vadd.f32 0.0, %v703
      %v705 = vpop.f32.mrb[0].mxu0
      %v706 = vpop.f32.mrb[0].mxu0
      %v707 = vadd.f32 0.0, %v706
      %v708 = vpop.f32.mrb[0].mxu0
      %709 = vmatprep.mubr.bf16.mxu0 0
      %710 = vmatmul.mubr.bf16.gmra.mrb[0].mxu0 %v563
      %v711 = vpop.f32.mrb[0].mxu0
      %v712 = vadd.f32 0.0, %v711
      %v713 = vpop.f32.mrb[0].mxu0
      %v714 = vpop.f32.mrb[0].mxu0
      %v715 = vadd.f32 0.0, %v714
      %v716 = vpop.f32.mrb[0].mxu0
      %717 = vmatprep.mubr.bf16.mxu0 0
      %718 = vmatmul.mubr.bf16.gmra.mrb[0].mxu0 %v566
      %v719 = vpop.f32.mrb[0].mxu0
      %v720 = vadd.f32 0.0, %v719
      %v721 = vpop.f32.mrb[0].mxu0
      %v722 = vpop.f32.mrb[0].mxu0
      %v723 = vadd.f32 0.0, %v722
      %v724 = vpop.f32.mrb[0].mxu0
      %725 = vmatprep.mubr.bf16.mxu0 0
      %726 = vmatmul.mubr.bf16.gmra.mrb[0].mxu0 %v569
      %v727 = vpop.f32.mrb[0].mxu0
      %v728 = vadd.f32 0.0, %v727
      %v729 = vpop.f32.mrb[0].mxu0
      %v730 = vpop.f32.mrb[0].mxu0
      %v731 = vadd.f32 0.0, %v730
      %v732 = vpop.f32.mrb[0].mxu0
      %733 = vmatprep.mubr.bf16.mxu0 0
      %734 = vmatmul.mubr.bf16.gmra.mrb[0].mxu0 %v572
      %v735 = vpop.f32.mrb[0].mxu0
      %v736 = vadd.f32 0.0, %v735
      %v737 = vpop.f32.mrb[0].mxu0
      %v738 = vpop.f32.mrb[0].mxu0
      %v739 = vadd.f32 0.0, %v738
      %v740 = vpop.f32.mrb[0].mxu0
      %741 = vmatprep.mubr.bf16.mxu0 0
      %742 = vmatmul.mubr.bf16.gmra.mrb[0].mxu0 %v575
      %v743 = vpop.f32.mrb[0].mxu0
      %v744 = vadd.f32 0.0, %v743
      %v745 = vpop.f32.mrb[0].mxu0
      %v746 = vpop.f32.mrb[0].mxu0
      %v747 = vadd.f32 0.0, %v746
      %v748 = vpop.f32.mrb[0].mxu0
      %749 = vmatprep.mubr.bf16.mxu0 0
      %750 = vmatmul.mubr.bf16.gmra.mrb[0].mxu0 %v578
      %v751 = vpop.f32.mrb[0].mxu0
      %v752 = vadd.f32 0.0, %v751
      %v753 = vpop.f32.mrb[0].mxu0
      %v754 = vpop.f32.mrb[0].mxu0
      %v755 = vadd.f32 0.0, %v754
      %v756 = vpop.f32.mrb[0].mxu0
      %757 = vmatprep.mubr.bf16.mxu0 0
      %758 = vmatmul.mubr.bf16.gmra.mrb[0].mxu0 %v581
      %v759 = vpop.f32.mrb[0].mxu0
      %v760 = vadd.f32 0.0, %v759
      %v761 = vpop.f32.mrb[0].mxu0
      %v762 = vpop.f32.mrb[0].mxu0
      %v763 = vadd.f32 0.0, %v762
      %v764 = vpop.f32.mrb[0].mxu0
      %765 = vmatprep.mubr.bf16.mxu0 0
      %766 = vmatmul.mubr.bf16.gmra.mrb[0].mxu0 %v584
      %v767 = vpop.f32.mrb[0].mxu0
      %v768 = vadd.f32 0.0, %v767
      %v769 = vpop.f32.mrb[0].mxu0
      %v770 = vpop.f32.mrb[0].mxu0
      %v771 = vadd.f32 0.0, %v770
      %v772 = vpop.f32.mrb[0].mxu0
      %773 = vmatprep.mubr.bf16.mxu0 0
      %774 = vmatmul.mubr.bf16.gmra.mrb[0].mxu0 %v587
      %v775 = vpop.f32.mrb[0].mxu0
      %v776 = vadd.f32 0.0, %v775
      %v777 = vpop.f32.mrb[0].mxu0
      %v778 = vpop.f32.mrb[0].mxu0
      %v779 = vadd.f32 0.0, %v778
      %v780 = vpop.f32.mrb[0].mxu0
      %781 = vmatprep.mubr.bf16.mxu0 0
      %782 = vmatmul.mubr.bf16.gmra.mrb[0].mxu0 %v590
      %v783 = vpop.f32.mrb[0].mxu0
      %v784 = vadd.f32 0.0, %v783
      %v785 = vpop.f32.mrb[0].mxu0
      %v786 = vpop.f32.mrb[0].mxu0
      %v787 = vadd.f32 0.0, %v786
      %v788 = vpop.f32.mrb[0].mxu0
      %789 = vmatprep.mubr.bf16.mxu0 0
      %790 = vmatmul.mubr.bf16.gmra.mrb[0].mxu0 %v593
      %v791 = vpop.f32.mrb[0].mxu0
      %v792 = vadd.f32 0.0, %v791
      %v793 = vpop.f32.mrb[0].mxu0
      %v794 = vpop.f32.mrb[0].mxu0
      %v795 = vadd.f32 0.0, %v794
      %v796 = vpop.f32.mrb[0].mxu0
      %797 = vmatprep.mubr.bf16.mxu0 0
      %798 = vmatmul.mubr.bf16.gmra.mrb[0].mxu0 %v596
      %v799 = vpop.f32.mrb[0].mxu0
      %v800 = vadd.f32 0.0, %v799
      %v801 = vpop.f32.mrb[0].mxu0
      %v802 = vpop.f32.mrb[0].mxu0
      %v803 = vadd.f32 0.0, %v802
      %v804 = vpop.f32.mrb[0].mxu0
      %805 = vmatprep.mubr.bf16.mxu0 0
      %806 = vmatmul.mubr.bf16.gmra.mrb[0].mxu0 %v599
      %v807 = vpop.f32.mrb[0].mxu0
      %v808 = vadd.f32 0.0, %v807
      %v809 = vpop.f32.mrb[0].mxu0
      %v810 = vpop.f32.mrb[0].mxu0
      %v811 = vadd.f32 0.0, %v810
      %v812 = vpop.f32.mrb[0].mxu0
      %813 = vmatprep.mubr.bf16.mxu0 0
      %814 = vmatmul.mubr.bf16.gmra.mrb[0].mxu0 %v602
      %v815 = vpop.f32.mrb[0].mxu0
      %v816 = vadd.f32 0.0, %v815
      %v817 = vpop.f32.mrb[0].mxu0
      %v818 = vpop.f32.mrb[0].mxu0
      %v819 = vadd.f32 0.0, %v818
      %v820 = vpop.f32.mrb[0].mxu0
      %821 = vmatprep.mubr.bf16.mxu0 0
      %822 = vmatmul.mubr.bf16.gmra.mrb[0].mxu0 %v605
      %v823 = vpop.f32.mrb[0].mxu0
      %v824 = vadd.f32 0.0, %v823
      %v825 = vpop.f32.mrb[0].mxu0
      %v826 = vpop.f32.mrb[0].mxu0
      %v827 = vadd.f32 0.0, %v826
      %v828 = vpop.f32.mrb[0].mxu0
      %829 = vmatprep.mubr.bf16.mxu0 0
      %830 = vmatmul.mubr.bf16.gmra.mrb[0].mxu0 %v608
      %v831 = vpop.f32.mrb[0].mxu0
      %v832 = vadd.f32 0.0, %v831
      %v833 = vpop.f32.mrb[0].mxu0
      %v834 = vpop.f32.mrb[0].mxu0
      %v835 = vadd.f32 0.0, %v834
      %v836 = vpop.f32.mrb[0].mxu0
      %837 = vmatprep.mubr.bf16.mxu0 0
      %838 = vmatmul.mubr.bf16.gmra.mrb[0].mxu0 %v611
      %v839 = vpop.f32.mrb[0].mxu0
      %v840 = vadd.f32 0.0, %v839
      %v841 = vpop.f32.mrb[0].mxu0
      %v842 = vpop.f32.mrb[0].mxu0
      %v843 = vadd.f32 0.0, %v842
      %v844 = vpop.f32.mrb[0].mxu0
      %845 = vmatprep.mubr.bf16.mxu0 0
      %846 = vmatmul.mubr.bf16.gmra.mrb[0].mxu0 %v614
      %v847 = vpop.f32.mrb[0].mxu0
      %v848 = vadd.f32 0.0, %v847
      %v849 = vpop.f32.mrb[0].mxu0
      %v850 = vpop.f32.mrb[0].mxu0
      %v851 = vadd.f32 0.0, %v850
      %v852 = vpop.f32.mrb[0].mxu0
      %853 = vmatprep.mubr.bf16.mxu0 0
      %854 = vmatmul.mubr.bf16.gmra.mrb[0].mxu0 %v617
      %v855 = vpop.f32.mrb[0].mxu0
      %v856 = vadd.f32 0.0, %v855
      %v857 = vpop.f32.mrb[0].mxu0
      %v858 = vpop.f32.mrb[0].mxu0
      %v859 = vadd.f32 0.0, %v858
      %v860 = vpop.f32.mrb[0].mxu0
      %861 = vmatprep.mubr.bf16.mxu0 0
      %862 = vmatmul.mubr.bf16.gmra.mrb[0].mxu0 %v620
      %v863 = vpop.f32.mrb[0].mxu0
      %v864 = vadd.f32 0.0, %v863
      %v865 = vpop.f32.mrb[0].mxu0
      %v866 = vpop.f32.mrb[0].mxu0
      %v867 = vadd.f32 0.0, %v866
      %v868 = vpop.f32.mrb[0].mxu0
      %869 = vmatprep.mubr.bf16.mxu0 0
      %870 = vmatmul.mubr.bf16.gmra.mrb[0].mxu0 %v623
      %v871 = vpop.f32.mrb[0].mxu0
      %v872 = vadd.f32 0.0, %v871
      %v873 = vpop.f32.mrb[0].mxu0
      %v874 = vpop.f32.mrb[0].mxu0
      %v875 = vadd.f32 0.0, %v874
      %v876 = vpop.f32.mrb[0].mxu0
      %877 = vmatprep.mubr.bf16.mxu0 0
      %878 = vmatmul.mubr.bf16.gmra.mrb[0].mxu0 %v626
      %v879 = vpop.f32.mrb[0].mxu0
      %v880 = vadd.f32 0.0, %v879
      %v881 = vpop.f32.mrb[0].mxu0
      %v882 = vpop.f32.mrb[0].mxu0
      %v883 = vadd.f32 0.0, %v882
      %v884 = vpop.f32.mrb[0].mxu0
      %885 = vmatprep.mubr.bf16.mxu0 0
      %886 = vmatmul.mubr.bf16.gmra.mrb[0].mxu0 %v629
      %v887 = vpop.f32.mrb[0].mxu0
      %v888 = vadd.f32 0.0, %v887
      %v889 = vpop.f32.mrb[0].mxu0
      %v890 = vpop.f32.mrb[0].mxu0
      %v891 = vadd.f32 0.0, %v890
      %v892 = vpop.f32.mrb[0].mxu0
      %893 = vmatprep.mubr.bf16.mxu0 0
      %894 = vmatmul.mubr.bf16.gmra.mrb[0].mxu0 %v632
      %v895 = vpop.f32.mrb[0].mxu0
      %v896 = vadd.f32 0.0, %v895
      %v897 = vpop.f32.mrb[0].mxu0
      %v898 = vpop.f32.mrb[0].mxu0
      %v899 = vadd.f32 0.0, %v898
      %v900 = vpop.f32.mrb[0].mxu0
      %901 = vmatprep.mubr.bf16.mxu0 0
      %902 = vmatmul.mubr.bf16.gmra.mrb[0].mxu0 %v635
      %v903 = vpop.f32.mrb[0].mxu0
      %v904 = vadd.f32 0.0, %v903
      %v905 = vpop.f32.mrb[0].mxu0
      %v906 = vpop.f32.mrb[0].mxu0
      %v907 = vadd.f32 0.0, %v906
      %v908 = vpop.f32.mrb[0].mxu0
      %909 = vmatprep.mubr.bf16.mxu0 0
      %910 = vmatmul.mubr.bf16.gmra.mrb[0].mxu0 %v638
      %v911 = vpop.f32.mrb[0].mxu0
      %v912 = vadd.f32 0.0, %v911
      %v913 = vpop.f32.mrb[0].mxu0
      %v914 = vpop.f32.mrb[0].mxu0
      %v915 = vadd.f32 0.0, %v914
      %v916 = vpop.f32.mrb[0].mxu0
      %917 = vmatprep.mubr.bf16.mxu0 0
      %918 = vmatmul.mubr.bf16.gmra.mrb[0].mxu0 %v641
      %v919 = vpop.f32.mrb[0].mxu0
      %v920 = vadd.f32 0.0, %v919
      %v921 = vpop.f32.mrb[0].mxu0
      %v922 = vpop.f32.mrb[0].mxu0
      %v923 = vadd.f32 0.0, %v922
      %v924 = vpop.f32.mrb[0].mxu0
      %925 = vmatprep.mubr.bf16.mxu0 0
      %926 = vmatmul.mubr.bf16.gmra.mrb[0].mxu0 %v644
      %v927 = vpop.f32.mrb[0].mxu0
      %v928 = vadd.f32 0.0, %v927
      %v929 = vpop.f32.mrb[0].mxu0
      %v930 = vpop.f32.mrb[0].mxu0
      %v931 = vadd.f32 0.0, %v930
      %v932 = vpop.f32.mrb[0].mxu0
      %933 = vmatprep.mubr.bf16.mxu0 0
      %934 = vmatmul.mubr.bf16.gmra.mrb[0].mxu0 %v647
      %v935 = vpop.f32.mrb[0].mxu0
      %v936 = vadd.f32 0.0, %v935
      %v937 = vpop.f32.mrb[0].mxu0
      %v938 = vpop.f32.mrb[0].mxu0
      %v939 = vadd.f32 0.0, %v938
      %v940 = vpop.f32.mrb[0].mxu0
      %941 = vdwg.mxu0
      %942 = vst [vmem:[#allocation2] sm:$0xff] %v688
      %943 = vst [vmem:[#allocation2 + $0x8] sm:$0xff] %v691
      %944 = vst [vmem:[#allocation2 + $0x10] sm:$0xff] %v696
      %945 = vst [vmem:[#allocation2 + $0x18] sm:$0xff] %v699
      %946 = vst [vmem:[#allocation2 + $0x20] sm:$0xff] %v704
      %947 = vst [vmem:[#allocation2 + $0x28] sm:$0xff] %v707
      %948 = vst [vmem:[#allocation2 + $0x30] sm:$0xff] %v712
      %949 = vst [vmem:[#allocation2 + $0x38] sm:$0xff] %v715
      %950 = vst [vmem:[#allocation2 + $0x40] sm:$0xff] %v720
      %951 = vst [vmem:[#allocation2 + $0x48] sm:$0xff] %v723
      %952 = vst [vmem:[#allocation2 + $0x50] sm:$0xff] %v728
      %953 = vst [vmem:[#allocation2 + $0x58] sm:$0xff] %v731
      %954 = vst [vmem:[#allocation2 + $0x60] sm:$0xff] %v736
      %955 = vst [vmem:[#allocation2 + $0x68] sm:$0xff] %v739
      %956 = vst [vmem:[#allocation2 + $0x70] sm:$0xff] %v744
      %957 = vst [vmem:[#allocation2 + $0x78] sm:$0xff] %v747
      %958 = vst [vmem:[#allocation2 + $0x80] sm:$0xff] %v752
      %959 = vst [vmem:[#allocation2 + $0x88] sm:$0xff] %v755
      %960 = vst [vmem:[#allocation2 + $0x90] sm:$0xff] %v760
      %961 = vst [vmem:[#allocation2 + $0x98] sm:$0xff] %v763
      %962 = vst [vmem:[#allocation2 + $0xa0] sm:$0xff] %v768
      %963 = vst [vmem:[#allocation2 + $0xa8] sm:$0xff] %v771
      %964 = vst [vmem:[#allocation2 + $0xb0] sm:$0xff] %v776
      %965 = vst [vmem:[#allocation2 + $0xb8] sm:$0xff] %v779
      %966 = vst [vmem:[#allocation2 + $0xc0] sm:$0xff] %v784
      %967 = vst [vmem:[#allocation2 + $0xc8] sm:$0xff] %v787
      %968 = vst [vmem:[#allocation2 + $0xd0] sm:$0xff] %v792
      %969 = vst [vmem:[#allocation2 + $0xd8] sm:$0xff] %v795
      %970 = vst [vmem:[#allocation2 + $0xe0] sm:$0xff] %v800
      %971 = vst [vmem:[#allocation2 + $0xe8] sm:$0xff] %v803
      %972 = vst [vmem:[#allocation2 + $0xf0] sm:$0xff] %v808
      %973 = vst [vmem:[#allocation2 + $0xf8] sm:$0xff] %v811
      %974 = vst [vmem:[#allocation2 + $0x100] sm:$0xff] %v816
      %975 = vst [vmem:[#allocation2 + $0x108] sm:$0xff] %v819
      %976 = vst [vmem:[#allocation2 + $0x110] sm:$0xff] %v824
      %977 = vst [vmem:[#allocation2 + $0x118] sm:$0xff] %v827
      %978 = vst [vmem:[#allocation2 + $0x120] sm:$0xff] %v832
      %979 = vst [vmem:[#allocation2 + $0x128] sm:$0xff] %v835
      %980 = vst [vmem:[#allocation2 + $0x130] sm:$0xff] %v840
      %981 = vst [vmem:[#allocation2 + $0x138] sm:$0xff] %v843
      %982 = vst [vmem:[#allocation2 + $0x140] sm:$0xff] %v848
      %983 = vst [vmem:[#allocation2 + $0x148] sm:$0xff] %v851
      %984 = vst [vmem:[#allocation2 + $0x150] sm:$0xff] %v856
      %985 = vst [vmem:[#allocation2 + $0x158] sm:$0xff] %v859
      %986 = vst [vmem:[#allocation2 + $0x160] sm:$0xff] %v864
      %987 = vst [vmem:[#allocation2 + $0x168] sm:$0xff] %v867
      %988 = vst [vmem:[#allocation2 + $0x170] sm:$0xff] %v872
      %989 = vst [vmem:[#allocation2 + $0x178] sm:$0xff] %v875
      %990 = vst [vmem:[#allocation2 + $0x180] sm:$0xff] %v880
      %991 = vst [vmem:[#allocation2 + $0x188] sm:$0xff] %v883
      %992 = vst [vmem:[#allocation2 + $0x190] sm:$0xff] %v888
      %993 = vst [vmem:[#allocation2 + $0x198] sm:$0xff] %v891
      %994 = vst [vmem:[#allocation2 + $0x1a0] sm:$0xff] %v896
      %995 = vst [vmem:[#allocation2 + $0x1a8] sm:$0xff] %v899
      %996 = vst [vmem:[#allocation2 + $0x1b0] sm:$0xff] %v904
      %997 = vst [vmem:[#allocation2 + $0x1b8] sm:$0xff] %v907
      %998 = vst [vmem:[#allocation2 + $0x1c0] sm:$0xff] %v912
      %999 = vst [vmem:[#allocation2 + $0x1c8] sm:$0xff] %v915
      %1000 = vst [vmem:[#allocation2 + $0x1d0] sm:$0xff] %v920
      %1001 = vst [vmem:[#allocation2 + $0x1d8] sm:$0xff] %v923
      %1002 = vst [vmem:[#allocation2 + $0x1e0] sm:$0xff] %v928
      %1003 = vst [vmem:[#allocation2 + $0x1e8] sm:$0xff] %v931
      %1004 = vst [vmem:[#allocation2 + $0x1f0] sm:$0xff] %v936
      %1005 = vst [vmem:[#allocation2 + $0x1f8] sm:$0xff] %v939
      %v1006 = vld [vmem:[%s293] sm:$0xf]
      %v1007 = vld [vmem:[%s293 + $0x4] sm:$0xf]
      %v1008 = vld [vmem:[%s293 + $0x8] sm:$0xf]
      %v1009 = vld [vmem:[%s293 + $0xc] sm:$0xf]
      %v1014 = vunpack.c.l.b16 %v1006
      %v1015 = vunpack.c.l.b16 %v1007
      %v1016 = vunpack.c.l.b16 %v1008
      %v1017 = vunpack.c.l.b16 %v1009
      %v1018 = vpack.c.b16 %v1015, %v1014
      %v1019 = vpack.c.b16 %v1017, %v1016
      %v1020 = vld [vmem:[#allocation2] sm:$0xff]
      %v1021 = vld [vmem:[#allocation2 + $0x8] sm:$0xff]
      %v1022 = vld [vmem:[#allocation2 + $0x10] sm:$0xff]
      %v1023 = vld [vmem:[#allocation2 + $0x18] sm:$0xff]
      %v1024 = vld [vmem:[#allocation2 + $0x20] sm:$0xff]
      %v1025 = vld [vmem:[#allocation2 + $0x28] sm:$0xff]
      %v1026 = vld [vmem:[#allocation2 + $0x30] sm:$0xff]
      %v1027 = vld [vmem:[#allocation2 + $0x38] sm:$0xff]
      %v1028 = vld [vmem:[#allocation2 + $0x40] sm:$0xff]
      %v1029 = vld [vmem:[#allocation2 + $0x48] sm:$0xff]
      %v1030 = vld [vmem:[#allocation2 + $0x50] sm:$0xff]
      %v1031 = vld [vmem:[#allocation2 + $0x58] sm:$0xff]
      %v1032 = vld [vmem:[#allocation2 + $0x60] sm:$0xff]
      %v1033 = vld [vmem:[#allocation2 + $0x68] sm:$0xff]
      %v1034 = vld [vmem:[#allocation2 + $0x70] sm:$0xff]
      %v1035 = vld [vmem:[#allocation2 + $0x78] sm:$0xff]
      %v1036 = vld [vmem:[#allocation2 + $0x80] sm:$0xff]
      %v1037 = vld [vmem:[#allocation2 + $0x88] sm:$0xff]
      %v1038 = vld [vmem:[#allocation2 + $0x90] sm:$0xff]
      %v1039 = vld [vmem:[#allocation2 + $0x98] sm:$0xff]
      %v1040 = vld [vmem:[#allocation2 + $0xa0] sm:$0xff]
      %v1041 = vld [vmem:[#allocation2 + $0xa8] sm:$0xff]
      %v1042 = vld [vmem:[#allocation2 + $0xb0] sm:$0xff]
      %v1043 = vld [vmem:[#allocation2 + $0xb8] sm:$0xff]
      %v1044 = vld [vmem:[#allocation2 + $0xc0] sm:$0xff]
      %v1045 = vld [vmem:[#allocation2 + $0xc8] sm:$0xff]
      %v1046 = vld [vmem:[#allocation2 + $0xd0] sm:$0xff]
      %v1047 = vld [vmem:[#allocation2 + $0xd8] sm:$0xff]
      %v1048 = vld [vmem:[#allocation2 + $0xe0] sm:$0xff]
      %v1049 = vld [vmem:[#allocation2 + $0xe8] sm:$0xff]
      %v1050 = vld [vmem:[#allocation2 + $0xf0] sm:$0xff]
      %v1051 = vld [vmem:[#allocation2 + $0xf8] sm:$0xff]
      %v1052 = vld [vmem:[#allocation2 + $0x100] sm:$0xff]
      %v1053 = vld [vmem:[#allocation2 + $0x108] sm:$0xff]
      %v1054 = vld [vmem:[#allocation2 + $0x110] sm:$0xff]
      %v1055 = vld [vmem:[#allocation2 + $0x118] sm:$0xff]
      %v1056 = vld [vmem:[#allocation2 + $0x120] sm:$0xff]
      %v1057 = vld [vmem:[#allocation2 + $0x128] sm:$0xff]
      %v1058 = vld [vmem:[#allocation2 + $0x130] sm:$0xff]
      %v1059 = vld [vmem:[#allocation2 + $0x138] sm:$0xff]
      %v1060 = vld [vmem:[#allocation2 + $0x140] sm:$0xff]
      %v1061 = vld [vmem:[#allocation2 + $0x148] sm:$0xff]
      %v1062 = vld [vmem:[#allocation2 + $0x150] sm:$0xff]
      %v1063 = vld [vmem:[#allocation2 + $0x158] sm:$0xff]
      %v1064 = vld [vmem:[#allocation2 + $0x160] sm:$0xff]
      %v1065 = vld [vmem:[#allocation2 + $0x168] sm:$0xff]
      %v1066 = vld [vmem:[#allocation2 + $0x170] sm:$0xff]
      %v1067 = vld [vmem:[#allocation2 + $0x178] sm:$0xff]
      %v1068 = vld [vmem:[#allocation2 + $0x180] sm:$0xff]
      %v1069 = vld [vmem:[#allocation2 + $0x188] sm:$0xff]
      %v1070 = vld [vmem:[#allocation2 + $0x190] sm:$0xff]
      %v1071 = vld [vmem:[#allocation2 + $0x198] sm:$0xff]
      %v1072 = vld [vmem:[#allocation2 + $0x1a0] sm:$0xff]
      %v1073 = vld [vmem:[#allocation2 + $0x1a8] sm:$0xff]
      %v1074 = vld [vmem:[#allocation2 + $0x1b0] sm:$0xff]
      %v1075 = vld [vmem:[#allocation2 + $0x1b8] sm:$0xff]
      %v1076 = vld [vmem:[#allocation2 + $0x1c0] sm:$0xff]
      %v1077 = vld [vmem:[#allocation2 + $0x1c8] sm:$0xff]
      %v1078 = vld [vmem:[#allocation2 + $0x1d0] sm:$0xff]
      %v1079 = vld [vmem:[#allocation2 + $0x1d8] sm:$0xff]
      %v1080 = vld [vmem:[#allocation2 + $0x1e0] sm:$0xff]
      %v1081 = vld [vmem:[#allocation2 + $0x1e8] sm:$0xff]
      %v1082 = vld [vmem:[#allocation2 + $0x1f0] sm:$0xff]
      %v1083 = vld [vmem:[#allocation2 + $0x1f8] sm:$0xff]
      %s1084 = scalar_lea.vmem %s2, 20
      %v1085 = vld [vmem:[%s1084] sm:$0xf]
      %v1086 = vld [vmem:[%s1084 + $0x4] sm:$0xf]
      %v1087 = vld [vmem:[%s1084 + $0x8] sm:$0xf]
      %v1088 = vld [vmem:[%s1084 + $0xc] sm:$0xf]
      %v1089 = vld [vmem:[%s1084 + $0x10] sm:$0x3]
      %v1095 = vunpack.c.l.b16 %v1085
      %v1096 = vunpack.c.l.b16 %v1086
      %v1097 = vunpack.c.l.b16 %v1087
      %v1098 = vunpack.c.l.b16 %v1088
      %v1099 = vunpack.c.l.b16 %v1089
      %v1100 = vpack.c.b16 %v1096, %v1095
      %v1101 = vpack.c.b16 %v1098, %v1097
      %v1102 = vpack.c.b16 %v1099, %v1099
      %v1106 = vsel %vm552, %v1018, 0
      %v1109 = vsel %vm552, %v1019, 0
      %v1112 = vsel %vm649, %v1102, 0
      %1114 = vmatprep.subr.bf16.mxu0 0
      %1115 = vmatpush1.bf16.msra.mxu0 %v1100
      %1116 = vmatprep.subr.bf16.mxu0 0
      %1117 = vmatpush1.bf16.msra.mxu0 %v1101
      %1118 = vmatprep.subr.bf16.mxu0 0
      %1119 = vmatpush1.bf16.msra.mxu0 %v1112
      %1120 = vmatprep.subr.bf16.mxu0 0
      %1121 = vmatpush1.bf16.msra.mxu0 0
      %1122 = vmatprep.subr.bf16.mxu0 0
      %1123 = vmatpush1.bf16.msra.mxu0 0
      %1124 = vmatprep.subr.bf16.mxu0 0
      %1125 = vmatpush1.bf16.msra.mxu0 0
      %1126 = vmatprep.subr.bf16.mxu0 0
      %1127 = vmatpush1.bf16.msra.mxu0 0
      %1128 = vmatprep.subr.bf16.mxu0 0
      %1129 = vmatpush1.bf16.msra.mxu0 0
      %1130 = vmatprep.subr.bf16.mxu0 0
      %1131 = vmatpush1.bf16.msra.mxu0 0
      %1132 = vmatprep.subr.bf16.mxu0 0
      %1133 = vmatpush1.bf16.msra.mxu0 0
      %1134 = vmatprep.subr.bf16.mxu0 0
      %1135 = vmatpush1.bf16.msra.mxu0 0
      %1136 = vmatprep.subr.bf16.mxu0 0
      %1137 = vmatpush1.bf16.msra.mxu0 0
      %1138 = vmatprep.subr.bf16.mxu0 0
      %1139 = vmatpush1.bf16.msra.mxu0 0
      %1140 = vmatprep.subr.bf16.mxu0 0
      %1141 = vmatpush1.bf16.msra.mxu0 0
      %1142 = vmatprep.subr.bf16.mxu0 0
      %1143 = vmatpush1.bf16.msra.mxu0 0
      %1144 = vmatprep.subr.bf16.mxu0 0
      %1145 = vmatpush1.bf16.msra.mxu0 0
      %1146 = vmatprep.mubr.bf16.mxu0 0
      %1147 = vmatmul.mubr.bf16.gmra.mrb[0].mxu0 %v560
      %v1148 = vpop.f32.mrb[0].mxu0
      %v1149 = vadd.f32 0.0, %v1148
      %v1150 = vpop.f32.mrb[0].mxu0
      %v1151 = vpop.f32.mrb[0].mxu0
      %v1152 = vadd.f32 0.0, %v1151
      %v1153 = vpop.f32.mrb[0].mxu0
      %1154 = vmatprep.mubr.bf16.mxu0 0
      %1155 = vmatmul.mubr.bf16.gmra.mrb[0].mxu0 %v563
      %v1156 = vpop.f32.mrb[0].mxu0
      %v1157 = vadd.f32 0.0, %v1156
      %v1158 = vpop.f32.mrb[0].mxu0
      %v1159 = vpop.f32.mrb[0].mxu0
      %v1160 = vadd.f32 0.0, %v1159
      %v1161 = vpop.f32.mrb[0].mxu0
      %1162 = vmatprep.mubr.bf16.mxu0 0
      %1163 = vmatmul.mubr.bf16.gmra.mrb[0].mxu0 %v566
      %v1164 = vpop.f32.mrb[0].mxu0
      %v1165 = vadd.f32 0.0, %v1164
      %v1166 = vpop.f32.mrb[0].mxu0
      %v1167 = vpop.f32.mrb[0].mxu0
      %v1168 = vadd.f32 0.0, %v1167
      %v1169 = vpop.f32.mrb[0].mxu0
      %1170 = vmatprep.mubr.bf16.mxu0 0
      %1171 = vmatmul.mubr.bf16.gmra.mrb[0].mxu0 %v569
      %v1172 = vpop.f32.mrb[0].mxu0
      %v1173 = vadd.f32 0.0, %v1172
      %v1174 = vpop.f32.mrb[0].mxu0
      %v1175 = vpop.f32.mrb[0].mxu0
      %v1176 = vadd.f32 0.0, %v1175
      %v1177 = vpop.f32.mrb[0].mxu0
      %1178 = vmatprep.mubr.bf16.mxu0 0
      %1179 = vmatmul.mubr.bf16.gmra.mrb[0].mxu0 %v572
      %v1180 = vpop.f32.mrb[0].mxu0
      %v1181 = vadd.f32 0.0, %v1180
      %v1182 = vpop.f32.mrb[0].mxu0
      %v1183 = vpop.f32.mrb[0].mxu0
      %v1184 = vadd.f32 0.0, %v1183
      %v1185 = vpop.f32.mrb[0].mxu0
      %1186 = vmatprep.mubr.bf16.mxu0 0
      %1187 = vmatmul.mubr.bf16.gmra.mrb[0].mxu0 %v575
      %v1188 = vpop.f32.mrb[0].mxu0
      %v1189 = vadd.f32 0.0, %v1188
      %v1190 = vpop.f32.mrb[0].mxu0
      %v1191 = vpop.f32.mrb[0].mxu0
      %v1192 = vadd.f32 0.0, %v1191
      %v1193 = vpop.f32.mrb[0].mxu0
      %1194 = vmatprep.mubr.bf16.mxu0 0
      %1195 = vmatmul.mubr.bf16.gmra.mrb[0].mxu0 %v578
      %v1196 = vpop.f32.mrb[0].mxu0
      %v1197 = vadd.f32 0.0, %v1196
      %v1198 = vpop.f32.mrb[0].mxu0
      %v1199 = vpop.f32.mrb[0].mxu0
      %v1200 = vadd.f32 0.0, %v1199
      %v1201 = vpop.f32.mrb[0].mxu0
      %1202 = vmatprep.mubr.bf16.mxu0 0
      %1203 = vmatmul.mubr.bf16.gmra.mrb[0].mxu0 %v581
      %v1204 = vpop.f32.mrb[0].mxu0
      %v1205 = vadd.f32 0.0, %v1204
      %v1206 = vpop.f32.mrb[0].mxu0
      %v1207 = vpop.f32.mrb[0].mxu0
      %v1208 = vadd.f32 0.0, %v1207
      %v1209 = vpop.f32.mrb[0].mxu0
      %1210 = vmatprep.mubr.bf16.mxu0 0
      %1211 = vmatmul.mubr.bf16.gmra.mrb[0].mxu0 %v584
      %v1212 = vpop.f32.mrb[0].mxu0
      %v1213 = vadd.f32 0.0, %v1212
      %v1214 = vpop.f32.mrb[0].mxu0
      %v1215 = vpop.f32.mrb[0].mxu0
      %v1216 = vadd.f32 0.0, %v1215
      %v1217 = vpop.f32.mrb[0].mxu0
      %1218 = vmatprep.mubr.bf16.mxu0 0
      %1219 = vmatmul.mubr.bf16.gmra.mrb[0].mxu0 %v587
      %v1220 = vpop.f32.mrb[0].mxu0
      %v1221 = vadd.f32 0.0, %v1220
      %v1222 = vpop.f32.mrb[0].mxu0
      %v1223 = vpop.f32.mrb[0].mxu0
      %v1224 = vadd.f32 0.0, %v1223
      %v1225 = vpop.f32.mrb[0].mxu0
      %1226 = vmatprep.mubr.bf16.mxu0 0
      %1227 = vmatmul.mubr.bf16.gmra.mrb[0].mxu0 %v590
      %v1228 = vpop.f32.mrb[0].mxu0
      %v1229 = vadd.f32 0.0, %v1228
      %v1230 = vpop.f32.mrb[0].mxu0
      %v1231 = vpop.f32.mrb[0].mxu0
      %v1232 = vadd.f32 0.0, %v1231
      %v1233 = vpop.f32.mrb[0].mxu0
      %1234 = vmatprep.mubr.bf16.mxu0 0
      %1235 = vmatmul.mubr.bf16.gmra.mrb[0].mxu0 %v593
      %v1236 = vpop.f32.mrb[0].mxu0
      %v1237 = vadd.f32 0.0, %v1236
      %v1238 = vpop.f32.mrb[0].mxu0
      %v1239 = vpop.f32.mrb[0].mxu0
      %v1240 = vadd.f32 0.0, %v1239
      %v1241 = vpop.f32.mrb[0].mxu0
      %1242 = vmatprep.mubr.bf16.mxu0 0
      %1243 = vmatmul.mubr.bf16.gmra.mrb[0].mxu0 %v596
      %v1244 = vpop.f32.mrb[0].mxu0
      %v1245 = vadd.f32 0.0, %v1244
      %v1246 = vpop.f32.mrb[0].mxu0
      %v1247 = vpop.f32.mrb[0].mxu0
      %v1248 = vadd.f32 0.0, %v1247
      %v1249 = vpop.f32.mrb[0].mxu0
      %1250 = vmatprep.mubr.bf16.mxu0 0
      %1251 = vmatmul.mubr.bf16.gmra.mrb[0].mxu0 %v599
      %v1252 = vpop.f32.mrb[0].mxu0
      %v1253 = vadd.f32 0.0, %v1252
      %v1254 = vpop.f32.mrb[0].mxu0
      %v1255 = vpop.f32.mrb[0].mxu0
      %v1256 = vadd.f32 0.0, %v1255
      %v1257 = vpop.f32.mrb[0].mxu0
      %1258 = vmatprep.mubr.bf16.mxu0 0
      %1259 = vmatmul.mubr.bf16.gmra.mrb[0].mxu0 %v602
      %v1260 = vpop.f32.mrb[0].mxu0
      %v1261 = vadd.f32 0.0, %v1260
      %v1262 = vpop.f32.mrb[0].mxu0
      %v1263 = vpop.f32.mrb[0].mxu0
      %v1264 = vadd.f32 0.0, %v1263
      %v1265 = vpop.f32.mrb[0].mxu0
      %1266 = vmatprep.mubr.bf16.mxu0 0
      %1267 = vmatmul.mubr.bf16.gmra.mrb[0].mxu0 %v605
      %v1268 = vpop.f32.mrb[0].mxu0
      %v1269 = vadd.f32 0.0, %v1268
      %v1270 = vpop.f32.mrb[0].mxu0
      %v1271 = vpop.f32.mrb[0].mxu0
      %v1272 = vadd.f32 0.0, %v1271
      %v1273 = vpop.f32.mrb[0].mxu0
      %1274 = vmatprep.mubr.bf16.mxu0 0
      %1275 = vmatmul.mubr.bf16.gmra.mrb[0].mxu0 %v608
      %v1276 = vpop.f32.mrb[0].mxu0
      %v1277 = vadd.f32 0.0, %v1276
      %v1278 = vpop.f32.mrb[0].mxu0
      %v1279 = vpop.f32.mrb[0].mxu0
      %v1280 = vadd.f32 0.0, %v1279
      %v1281 = vpop.f32.mrb[0].mxu0
      %1282 = vmatprep.mubr.bf16.mxu0 0
      %1283 = vmatmul.mubr.bf16.gmra.mrb[0].mxu0 %v611
      %v1284 = vpop.f32.mrb[0].mxu0
      %v1285 = vadd.f32 0.0, %v1284
      %v1286 = vpop.f32.mrb[0].mxu0
      %v1287 = vpop.f32.mrb[0].mxu0
      %v1288 = vadd.f32 0.0, %v1287
      %v1289 = vpop.f32.mrb[0].mxu0
      %1290 = vmatprep.mubr.bf16.mxu0 0
      %1291 = vmatmul.mubr.bf16.gmra.mrb[0].mxu0 %v614
      %v1292 = vpop.f32.mrb[0].mxu0
      %v1293 = vadd.f32 0.0, %v1292
      %v1294 = vpop.f32.mrb[0].mxu0
      %v1295 = vpop.f32.mrb[0].mxu0
      %v1296 = vadd.f32 0.0, %v1295
      %v1297 = vpop.f32.mrb[0].mxu0
      %1298 = vmatprep.mubr.bf16.mxu0 0
      %1299 = vmatmul.mubr.bf16.gmra.mrb[0].mxu0 %v617
      %v1300 = vpop.f32.mrb[0].mxu0
      %v1301 = vadd.f32 0.0, %v1300
      %v1302 = vpop.f32.mrb[0].mxu0
      %v1303 = vpop.f32.mrb[0].mxu0
      %v1304 = vadd.f32 0.0, %v1303
      %v1305 = vpop.f32.mrb[0].mxu0
      %1306 = vmatprep.mubr.bf16.mxu0 0
      %1307 = vmatmul.mubr.bf16.gmra.mrb[0].mxu0 %v620
      %v1308 = vpop.f32.mrb[0].mxu0
      %v1309 = vadd.f32 0.0, %v1308
      %v1310 = vpop.f32.mrb[0].mxu0
      %v1311 = vpop.f32.mrb[0].mxu0
      %v1312 = vadd.f32 0.0, %v1311
      %v1313 = vpop.f32.mrb[0].mxu0
      %1314 = vmatprep.mubr.bf16.mxu0 0
      %1315 = vmatmul.mubr.bf16.gmra.mrb[0].mxu0 %v623
      %v1316 = vpop.f32.mrb[0].mxu0
      %v1317 = vadd.f32 0.0, %v1316
      %v1318 = vpop.f32.mrb[0].mxu0
      %v1319 = vpop.f32.mrb[0].mxu0
      %v1320 = vadd.f32 0.0, %v1319
      %v1321 = vpop.f32.mrb[0].mxu0
      %1322 = vmatprep.mubr.bf16.mxu0 0
      %1323 = vmatmul.mubr.bf16.gmra.mrb[0].mxu0 %v626
      %v1324 = vpop.f32.mrb[0].mxu0
      %v1325 = vadd.f32 0.0, %v1324
      %v1326 = vpop.f32.mrb[0].mxu0
      %v1327 = vpop.f32.mrb[0].mxu0
      %v1328 = vadd.f32 0.0, %v1327
      %v1329 = vpop.f32.mrb[0].mxu0
      %1330 = vmatprep.mubr.bf16.mxu0 0
      %1331 = vmatmul.mubr.bf16.gmra.mrb[0].mxu0 %v629
      %v1332 = vpop.f32.mrb[0].mxu0
      %v1333 = vadd.f32 0.0, %v1332
      %v1334 = vpop.f32.mrb[0].mxu0
      %v1335 = vpop.f32.mrb[0].mxu0
      %v1336 = vadd.f32 0.0, %v1335
      %v1337 = vpop.f32.mrb[0].mxu0
      %1338 = vmatprep.mubr.bf16.mxu0 0
      %1339 = vmatmul.mubr.bf16.gmra.mrb[0].mxu0 %v632
      %v1340 = vpop.f32.mrb[0].mxu0
      %v1341 = vadd.f32 0.0, %v1340
      %v1342 = vpop.f32.mrb[0].mxu0
      %v1343 = vpop.f32.mrb[0].mxu0
      %v1344 = vadd.f32 0.0, %v1343
      %v1345 = vpop.f32.mrb[0].mxu0
      %1346 = vmatprep.mubr.bf16.mxu0 0
      %1347 = vmatmul.mubr.bf16.gmra.mrb[0].mxu0 %v635
      %v1348 = vpop.f32.mrb[0].mxu0
      %v1349 = vadd.f32 0.0, %v1348
      %v1350 = vpop.f32.mrb[0].mxu0
      %v1351 = vpop.f32.mrb[0].mxu0
      %v1352 = vadd.f32 0.0, %v1351
      %v1353 = vpop.f32.mrb[0].mxu0
      %1354 = vmatprep.mubr.bf16.mxu0 0
      %1355 = vmatmul.mubr.bf16.gmra.mrb[0].mxu0 %v638
      %v1356 = vpop.f32.mrb[0].mxu0
      %v1357 = vadd.f32 0.0, %v1356
      %v1358 = vpop.f32.mrb[0].mxu0
      %v1359 = vpop.f32.mrb[0].mxu0
      %v1360 = vadd.f32 0.0, %v1359
      %v1361 = vpop.f32.mrb[0].mxu0
      %1362 = vmatprep.mubr.bf16.mxu0 0
      %1363 = vmatmul.mubr.bf16.gmra.mrb[0].mxu0 %v641
      %v1364 = vpop.f32.mrb[0].mxu0
      %v1365 = vadd.f32 0.0, %v1364
      %v1366 = vpop.f32.mrb[0].mxu0
      %v1367 = vpop.f32.mrb[0].mxu0
      %v1368 = vadd.f32 0.0, %v1367
      %v1369 = vpop.f32.mrb[0].mxu0
      %1370 = vmatprep.mubr.bf16.mxu0 0
      %1371 = vmatmul.mubr.bf16.gmra.mrb[0].mxu0 %v644
      %v1372 = vpop.f32.mrb[0].mxu0
      %v1373 = vadd.f32 0.0, %v1372
      %v1374 = vpop.f32.mrb[0].mxu0
      %v1375 = vpop.f32.mrb[0].mxu0
      %v1376 = vadd.f32 0.0, %v1375
      %v1377 = vpop.f32.mrb[0].mxu0
      %1378 = vmatprep.mubr.bf16.mxu0 0
      %1379 = vmatmul.mubr.bf16.gmra.mrb[0].mxu0 %v647
      %v1380 = vpop.f32.mrb[0].mxu0
      %v1381 = vadd.f32 0.0, %v1380
      %v1382 = vpop.f32.mrb[0].mxu0
      %v1383 = vpop.f32.mrb[0].mxu0
      %v1384 = vadd.f32 0.0, %v1383
      %v1385 = vpop.f32.mrb[0].mxu0
      %1386 = vmatprep.mubr.bf16.mxu0 0
      %1387 = vmatmul.mubr.bf16.gmra.mrb[0].mxu0 %v1106
      %v1388 = vpop.f32.mrb[0].mxu0
      %v1389 = vadd.f32 0.0, %v1388
      %v1390 = vpop.f32.mrb[0].mxu0
      %v1391 = vpop.f32.mrb[0].mxu0
      %v1392 = vadd.f32 0.0, %v1391
      %v1393 = vpop.f32.mrb[0].mxu0
      %1394 = vmatprep.mubr.bf16.mxu0 0
      %1395 = vmatmul.mubr.bf16.gmra.mrb[0].mxu0 %v1109
      %v1396 = vpop.f32.mrb[0].mxu0
      %v1397 = vadd.f32 0.0, %v1396
      %v1398 = vpop.f32.mrb[0].mxu0
      %v1399 = vpop.f32.mrb[0].mxu0
      %v1400 = vadd.f32 0.0, %v1399
      %v1401 = vpop.f32.mrb[0].mxu0
      %1402 = vdwg.mxu0
      %v1403 = vadd.f32 %v1020, %v1149
      %v1404 = vadd.f32 %v1021, %v1152
      %v1405 = vadd.f32 %v1022, %v1157
      %v1406 = vadd.f32 %v1023, %v1160
      %v1407 = vadd.f32 %v1024, %v1165
      %v1408 = vadd.f32 %v1025, %v1168
      %v1409 = vadd.f32 %v1026, %v1173
      %v1410 = vadd.f32 %v1027, %v1176
      %v1411 = vadd.f32 %v1028, %v1181
      %v1412 = vadd.f32 %v1029, %v1184
      %v1413 = vadd.f32 %v1030, %v1189
      %v1414 = vadd.f32 %v1031, %v1192
      %v1415 = vadd.f32 %v1032, %v1197
      %v1416 = vadd.f32 %v1033, %v1200
      %v1417 = vadd.f32 %v1034, %v1205
      %v1418 = vadd.f32 %v1035, %v1208
      %v1419 = vadd.f32 %v1036, %v1213
      %v1420 = vadd.f32 %v1037, %v1216
      %v1421 = vadd.f32 %v1038, %v1221
      %v1422 = vadd.f32 %v1039, %v1224
      %v1423 = vadd.f32 %v1040, %v1229
      %v1424 = vadd.f32 %v1041, %v1232
      %v1425 = vadd.f32 %v1042, %v1237
      %v1426 = vadd.f32 %v1043, %v1240
      %v1427 = vadd.f32 %v1044, %v1245
      %v1428 = vadd.f32 %v1045, %v1248
      %v1429 = vadd.f32 %v1046, %v1253
      %v1430 = vadd.f32 %v1047, %v1256
      %v1431 = vadd.f32 %v1048, %v1261
      %v1432 = vadd.f32 %v1049, %v1264
      %v1433 = vadd.f32 %v1050, %v1269
      %v1434 = vadd.f32 %v1051, %v1272
      %v1435 = vadd.f32 %v1052, %v1277
      %v1436 = vadd.f32 %v1053, %v1280
      %v1437 = vadd.f32 %v1054, %v1285
      %v1438 = vadd.f32 %v1055, %v1288
      %v1439 = vadd.f32 %v1056, %v1293
      %v1440 = vadd.f32 %v1057, %v1296
      %v1441 = vadd.f32 %v1058, %v1301
      %v1442 = vadd.f32 %v1059, %v1304
      %v1443 = vadd.f32 %v1060, %v1309
      %v1444 = vadd.f32 %v1061, %v1312
      %v1445 = vadd.f32 %v1062, %v1317
      %v1446 = vadd.f32 %v1063, %v1320
      %v1447 = vadd.f32 %v1064, %v1325
      %v1448 = vadd.f32 %v1065, %v1328
      %v1449 = vadd.f32 %v1066, %v1333
      %v1450 = vadd.f32 %v1067, %v1336
      %v1451 = vadd.f32 %v1068, %v1341
      %v1452 = vadd.f32 %v1069, %v1344
      %v1453 = vadd.f32 %v1070, %v1349
      %v1454 = vadd.f32 %v1071, %v1352
      %v1455 = vadd.f32 %v1072, %v1357
      %v1456 = vadd.f32 %v1073, %v1360
      %v1457 = vadd.f32 %v1074, %v1365
      %v1458 = vadd.f32 %v1075, %v1368
      %v1459 = vadd.f32 %v1076, %v1373
      %v1460 = vadd.f32 %v1077, %v1376
      %v1461 = vadd.f32 %v1078, %v1381
      %v1462 = vadd.f32 %v1079, %v1384
      %v1463 = vadd.f32 %v1080, %v1389
      %v1464 = vadd.f32 %v1081, %v1392
      %v1465 = vadd.f32 %v1082, %v1397
      %v1466 = vadd.f32 %v1083, %v1400
      %1467 = vst [vmem:[#allocation2] sm:$0xff] %v1403
      %1468 = vst [vmem:[#allocation2 + $0x8] sm:$0xff] %v1404
      %1469 = vst [vmem:[#allocation2 + $0x10] sm:$0xff] %v1405
      %1470 = vst [vmem:[#allocation2 + $0x18] sm:$0xff] %v1406
      %1471 = vst [vmem:[#allocation2 + $0x20] sm:$0xff] %v1407
      %1472 = vst [vmem:[#allocation2 + $0x28] sm:$0xff] %v1408
      %1473 = vst [vmem:[#allocation2 + $0x30] sm:$0xff] %v1409
      %1474 = vst [vmem:[#allocation2 + $0x38] sm:$0xff] %v1410
      %1475 = vst [vmem:[#allocation2 + $0x40] sm:$0xff] %v1411
      %1476 = vst [vmem:[#allocation2 + $0x48] sm:$0xff] %v1412
      %1477 = vst [vmem:[#allocation2 + $0x50] sm:$0xff] %v1413
      %1478 = vst [vmem:[#allocation2 + $0x58] sm:$0xff] %v1414
      %1479 = vst [vmem:[#allocation2 + $0x60] sm:$0xff] %v1415
      %1480 = vst [vmem:[#allocation2 + $0x68] sm:$0xff] %v1416
      %1481 = vst [vmem:[#allocation2 + $0x70] sm:$0xff] %v1417
      %1482 = vst [vmem:[#allocation2 + $0x78] sm:$0xff] %v1418
      %1483 = vst [vmem:[#allocation2 + $0x80] sm:$0xff] %v1419
      %1484 = vst [vmem:[#allocation2 + $0x88] sm:$0xff] %v1420
      %1485 = vst [vmem:[#allocation2 + $0x90] sm:$0xff] %v1421
      %1486 = vst [vmem:[#allocation2 + $0x98] sm:$0xff] %v1422
      %1487 = vst [vmem:[#allocation2 + $0xa0] sm:$0xff] %v1423
      %1488 = vst [vmem:[#allocation2 + $0xa8] sm:$0xff] %v1424
      %1489 = vst [vmem:[#allocation2 + $0xb0] sm:$0xff] %v1425
      %1490 = vst [vmem:[#allocation2 + $0xb8] sm:$0xff] %v1426
      %1491 = vst [vmem:[#allocation2 + $0xc0] sm:$0xff] %v1427
      %1492 = vst [vmem:[#allocation2 + $0xc8] sm:$0xff] %v1428
      %1493 = vst [vmem:[#allocation2 + $0xd0] sm:$0xff] %v1429
      %1494 = vst [vmem:[#allocation2 + $0xd8] sm:$0xff] %v1430
      %1495 = vst [vmem:[#allocation2 + $0xe0] sm:$0xff] %v1431
      %1496 = vst [vmem:[#allocation2 + $0xe8] sm:$0xff] %v1432
      %1497 = vst [vmem:[#allocation2 + $0xf0] sm:$0xff] %v1433
      %1498 = vst [vmem:[#allocation2 + $0xf8] sm:$0xff] %v1434
      %1499 = vst [vmem:[#allocation2 + $0x100] sm:$0xff] %v1435
      %1500 = vst [vmem:[#allocation2 + $0x108] sm:$0xff] %v1436
      %1501 = vst [vmem:[#allocation2 + $0x110] sm:$0xff] %v1437
      %1502 = vst [vmem:[#allocation2 + $0x118] sm:$0xff] %v1438
      %1503 = vst [vmem:[#allocation2 + $0x120] sm:$0xff] %v1439
      %1504 = vst [vmem:[#allocation2 + $0x128] sm:$0xff] %v1440
      %1505 = vst [vmem:[#allocation2 + $0x130] sm:$0xff] %v1441
      %1506 = vst [vmem:[#allocation2 + $0x138] sm:$0xff] %v1442
      %1507 = vst [vmem:[#allocation2 + $0x140] sm:$0xff] %v1443
      %1508 = vst [vmem:[#allocation2 + $0x148] sm:$0xff] %v1444
      %1509 = vst [vmem:[#allocation2 + $0x150] sm:$0xff] %v1445
      %1510 = vst [vmem:[#allocation2 + $0x158] sm:$0xff] %v1446
      %1511 = vst [vmem:[#allocation2 + $0x160] sm:$0xff] %v1447
      %1512 = vst [vmem:[#allocation2 + $0x168] sm:$0xff] %v1448
      %1513 = vst [vmem:[#allocation2 + $0x170] sm:$0xff] %v1449
      %1514 = vst [vmem:[#allocation2 + $0x178] sm:$0xff] %v1450
      %1515 = vst [vmem:[#allocation2 + $0x180] sm:$0xff] %v1451
      %1516 = vst [vmem:[#allocation2 + $0x188] sm:$0xff] %v1452
      %1517 = vst [vmem:[#allocation2 + $0x190] sm:$0xff] %v1453
      %1518 = vst [vmem:[#allocation2 + $0x198] sm:$0xff] %v1454
      %1519 = vst [vmem:[#allocation2 + $0x1a0] sm:$0xff] %v1455
      %1520 = vst [vmem:[#allocation2 + $0x1a8] sm:$0xff] %v1456
      %1521 = vst [vmem:[#allocation2 + $0x1b0] sm:$0xff] %v1457
      %1522 = vst [vmem:[#allocation2 + $0x1b8] sm:$0xff] %v1458
      %1523 = vst [vmem:[#allocation2 + $0x1c0] sm:$0xff] %v1459
      %1524 = vst [vmem:[#allocation2 + $0x1c8] sm:$0xff] %v1460
      %1525 = vst [vmem:[#allocation2 + $0x1d0] sm:$0xff] %v1461
      %1526 = vst [vmem:[#allocation2 + $0x1d8] sm:$0xff] %v1462
      %1527 = vst [vmem:[#allocation2 + $0x1e0] sm:$0xff] %v1463
      %1528 = vst [vmem:[#allocation2 + $0x1e8] sm:$0xff] %v1464
      %1529 = vst [vmem:[#allocation2 + $0x1f0] sm:$0xff] %v1465
      %1530 = vst [vmem:[#allocation2 + $0x1f8] sm:$0xff] %v1466
      %v1531 = vld [vmem:[#allocation2] sm:$0xff]
      %v1532 = vld [vmem:[#allocation2 + $0x8] sm:$0xff]
      %v1533 = vld [vmem:[#allocation2 + $0x10] sm:$0xff]
      %v1534 = vld [vmem:[#allocation2 + $0x18] sm:$0xff]
      %v1535 = vld [vmem:[#allocation2 + $0x20] sm:$0xff]
      %v1536 = vld [vmem:[#allocation2 + $0x28] sm:$0xff]
      %v1537 = vld [vmem:[#allocation2 + $0x30] sm:$0xff]
      %v1538 = vld [vmem:[#allocation2 + $0x38] sm:$0xff]
      %v1539 = vld [vmem:[#allocation2 + $0x40] sm:$0xff]
      %v1540 = vld [vmem:[#allocation2 + $0x48] sm:$0xff]
      %v1541 = vld [vmem:[#allocation2 + $0x50] sm:$0xff]
      %v1542 = vld [vmem:[#allocation2 + $0x58] sm:$0xff]
      %v1543 = vld [vmem:[#allocation2 + $0x60] sm:$0xff]
      %v1544 = vld [vmem:[#allocation2 + $0x68] sm:$0xff]
      %v1545 = vld [vmem:[#allocation2 + $0x70] sm:$0xff]
      %v1546 = vld [vmem:[#allocation2 + $0x78] sm:$0xff]
      %v1547 = vld [vmem:[#allocation2 + $0x80] sm:$0xff]
      %v1548 = vld [vmem:[#allocation2 + $0x88] sm:$0xff]
      %v1549 = vld [vmem:[#allocation2 + $0x90] sm:$0xff]
      %v1550 = vld [vmem:[#allocation2 + $0x98] sm:$0xff]
      %v1551 = vld [vmem:[#allocation2 + $0xa0] sm:$0xff]
      %v1552 = vld [vmem:[#allocation2 + $0xa8] sm:$0xff]
      %v1553 = vld [vmem:[#allocation2 + $0xb0] sm:$0xff]
      %v1554 = vld [vmem:[#allocation2 + $0xb8] sm:$0xff]
      %v1555 = vld [vmem:[#allocation2 + $0xc0] sm:$0xff]
      %v1556 = vld [vmem:[#allocation2 + $0xc8] sm:$0xff]
      %v1557 = vld [vmem:[#allocation2 + $0xd0] sm:$0xff]
      %v1558 = vld [vmem:[#allocation2 + $0xd8] sm:$0xff]
      %v1559 = vld [vmem:[#allocation2 + $0xe0] sm:$0xff]
      %v1560 = vld [vmem:[#allocation2 + $0xe8] sm:$0xff]
      %v1561 = vld [vmem:[#allocation2 + $0xf0] sm:$0xff]
      %v1562 = vld [vmem:[#allocation2 + $0xf8] sm:$0xff]
      %v1563 = vld [vmem:[#allocation2 + $0x100] sm:$0xff]
      %v1564 = vld [vmem:[#allocation2 + $0x108] sm:$0xff]
      %v1565 = vld [vmem:[#allocation2 + $0x110] sm:$0xff]
      %v1566 = vld [vmem:[#allocation2 + $0x118] sm:$0xff]
      %v1567 = vld [vmem:[#allocation2 + $0x120] sm:$0xff]
      %v1568 = vld [vmem:[#allocation2 + $0x128] sm:$0xff]
      %v1569 = vld [vmem:[#allocation2 + $0x130] sm:$0xff]
      %v1570 = vld [vmem:[#allocation2 + $0x138] sm:$0xff]
      %v1571 = vld [vmem:[#allocation2 + $0x140] sm:$0xff]
      %v1572 = vld [vmem:[#allocation2 + $0x148] sm:$0xff]
      %v1573 = vld [vmem:[#allocation2 + $0x150] sm:$0xff]
      %v1574 = vld [vmem:[#allocation2 + $0x158] sm:$0xff]
      %v1575 = vld [vmem:[#allocation2 + $0x160] sm:$0xff]
      %v1576 = vld [vmem:[#allocation2 + $0x168] sm:$0xff]
      %v1577 = vld [vmem:[#allocation2 + $0x170] sm:$0xff]
      %v1578 = vld [vmem:[#allocation2 + $0x178] sm:$0xff]
      %v1579 = vld [vmem:[#allocation2 + $0x180] sm:$0xff]
      %v1580 = vld [vmem:[#allocation2 + $0x188] sm:$0xff]
      %v1581 = vld [vmem:[#allocation2 + $0x190] sm:$0xff]
      %v1582 = vld [vmem:[#allocation2 + $0x198] sm:$0xff]
      %v1583 = vld [vmem:[#allocation2 + $0x1a0] sm:$0xff]
      %v1584 = vld [vmem:[#allocation2 + $0x1a8] sm:$0xff]
      %v1585 = vld [vmem:[#allocation2 + $0x1b0] sm:$0xff]
      %v1586 = vld [vmem:[#allocation2 + $0x1b8] sm:$0xff]
      %v1587 = vld [vmem:[#allocation2 + $0x1c0] sm:$0xff]
      %v1588 = vld [vmem:[#allocation2 + $0x1c8] sm:$0xff]
      %v1589 = vld [vmem:[#allocation2 + $0x1d0] sm:$0xff]
      %v1590 = vld [vmem:[#allocation2 + $0x1d8] sm:$0xff]
      %v1591 = vld [vmem:[#allocation2 + $0x1e0] sm:$0xff]
      %v1592 = vld [vmem:[#allocation2 + $0x1e8] sm:$0xff]
      %v1593 = vld [vmem:[#allocation2 + $0x1f0] sm:$0xff]
      %v1594 = vld [vmem:[#allocation2 + $0x1f8] sm:$0xff]
      %v1595 = vld [vmem:[%s3] sm:$0x1]
      %v1597 = vlaneseq
      %v1598 = vshrl.u32 %v1597, 7
      %v1599 = vsub.s32 0, %v1598
      %v1600 = vrot.slane %v1595, %v1599
      %v1602 = vadd.f32 %v1531, %v1600
      %v1603 = vadd.f32 %v1532, %v1600
      %v1604 = vadd.f32 %v1533, %v1600
      %v1605 = vadd.f32 %v1534, %v1600
      %v1606 = vadd.f32 %v1535, %v1600
      %v1607 = vadd.f32 %v1536, %v1600
      %v1608 = vadd.f32 %v1537, %v1600
      %v1609 = vadd.f32 %v1538, %v1600
      %v1610 = vadd.f32 %v1539, %v1600
      %v1611 = vadd.f32 %v1540, %v1600
      %v1612 = vadd.f32 %v1541, %v1600
      %v1613 = vadd.f32 %v1542, %v1600
      %v1614 = vadd.f32 %v1543, %v1600
      %v1615 = vadd.f32 %v1544, %v1600
      %v1616 = vadd.f32 %v1545, %v1600
      %v1617 = vadd.f32 %v1546, %v1600
      %v1618 = vadd.f32 %v1547, %v1600
      %v1619 = vadd.f32 %v1548, %v1600
      %v1620 = vadd.f32 %v1549, %v1600
      %v1621 = vadd.f32 %v1550, %v1600
      %v1622 = vadd.f32 %v1551, %v1600
      %v1623 = vadd.f32 %v1552, %v1600
      %v1624 = vadd.f32 %v1553, %v1600
      %v1625 = vadd.f32 %v1554, %v1600
      %v1626 = vadd.f32 %v1555, %v1600
      %v1627 = vadd.f32 %v1556, %v1600
      %v1628 = vadd.f32 %v1557, %v1600
      %v1629 = vadd.f32 %v1558, %v1600
      %v1630 = vadd.f32 %v1559, %v1600
      %v1631 = vadd.f32 %v1560, %v1600
      %v1632 = vadd.f32 %v1561, %v1600
      %v1633 = vadd.f32 %v1562, %v1600
      %v1634 = vadd.f32 %v1563, %v1600
      %v1635 = vadd.f32 %v1564, %v1600
      %v1636 = vadd.f32 %v1565, %v1600
      %v1637 = vadd.f32 %v1566, %v1600
      %v1638 = vadd.f32 %v1567, %v1600
      %v1639 = vadd.f32 %v1568, %v1600
      %v1640 = vadd.f32 %v1569, %v1600
      %v1641 = vadd.f32 %v1570, %v1600
      %v1642 = vadd.f32 %v1571, %v1600
      %v1643 = vadd.f32 %v1572, %v1600
      %v1644 = vadd.f32 %v1573, %v1600
      %v1645 = vadd.f32 %v1574, %v1600
      %v1646 = vadd.f32 %v1575, %v1600
      %v1647 = vadd.f32 %v1576, %v1600
      %v1648 = vadd.f32 %v1577, %v1600
      %v1649 = vadd.f32 %v1578, %v1600
      %v1650 = vadd.f32 %v1579, %v1600
      %v1651 = vadd.f32 %v1580, %v1600
      %v1652 = vadd.f32 %v1581, %v1600
      %v1653 = vadd.f32 %v1582, %v1600
      %v1654 = vadd.f32 %v1583, %v1600
      %v1655 = vadd.f32 %v1584, %v1600
      %v1656 = vadd.f32 %v1585, %v1600
      %v1657 = vadd.f32 %v1586, %v1600
      %v1658 = vadd.f32 %v1587, %v1600
      %v1659 = vadd.f32 %v1588, %v1600
      %v1660 = vadd.f32 %v1589, %v1600
      %v1661 = vadd.f32 %v1590, %v1600
      %v1662 = vadd.f32 %v1591, %v1600
      %v1663 = vadd.f32 %v1592, %v1600
      %v1664 = vadd.f32 %v1593, %v1600
      %v1665 = vadd.f32 %v1594, %v1600
      %v1666 = vmul.f32 %v1602, 0.1
      %v1667 = vmul.f32 %v1603, 0.1
      %v1668 = vmul.f32 %v1604, 0.1
      %v1669 = vmul.f32 %v1605, 0.1
      %v1670 = vmul.f32 %v1606, 0.1
      %v1671 = vmul.f32 %v1607, 0.1
      %v1672 = vmul.f32 %v1608, 0.1
      %v1673 = vmul.f32 %v1609, 0.1
      %v1674 = vmul.f32 %v1610, 0.1
      %v1675 = vmul.f32 %v1611, 0.1
      %v1676 = vmul.f32 %v1612, 0.1
      %v1677 = vmul.f32 %v1613, 0.1
      %v1678 = vmul.f32 %v1614, 0.1
      %v1679 = vmul.f32 %v1615, 0.1
      %v1680 = vmul.f32 %v1616, 0.1
      %v1681 = vmul.f32 %v1617, 0.1
      %v1682 = vmul.f32 %v1618, 0.1
      %v1683 = vmul.f32 %v1619, 0.1
      %v1684 = vmul.f32 %v1620, 0.1
      %v1685 = vmul.f32 %v1621, 0.1
      %v1686 = vmul.f32 %v1622, 0.1
      %v1687 = vmul.f32 %v1623, 0.1
      %v1688 = vmul.f32 %v1624, 0.1
      %v1689 = vmul.f32 %v1625, 0.1
      %v1690 = vmul.f32 %v1626, 0.1
      %v1691 = vmul.f32 %v1627, 0.1
      %v1692 = vmul.f32 %v1628, 0.1
      %v1693 = vmul.f32 %v1629, 0.1
      %v1694 = vmul.f32 %v1630, 0.1
      %v1695 = vmul.f32 %v1631, 0.1
      %v1696 = vmul.f32 %v1632, 0.1
      %v1697 = vmul.f32 %v1633, 0.1
      %v1698 = vmul.f32 %v1634, 0.1
      %v1699 = vmul.f32 %v1635, 0.1
      %v1700 = vmul.f32 %v1636, 0.1
      %v1701 = vmul.f32 %v1637, 0.1
      %v1702 = vmul.f32 %v1638, 0.1
      %v1703 = vmul.f32 %v1639, 0.1
      %v1704 = vmul.f32 %v1640, 0.1
      %v1705 = vmul.f32 %v1641, 0.1
      %v1706 = vmul.f32 %v1642, 0.1
      %v1707 = vmul.f32 %v1643, 0.1
      %v1708 = vmul.f32 %v1644, 0.1
      %v1709 = vmul.f32 %v1645, 0.1
      %v1710 = vmul.f32 %v1646, 0.1
      %v1711 = vmul.f32 %v1647, 0.1
      %v1712 = vmul.f32 %v1648, 0.1
      %v1713 = vmul.f32 %v1649, 0.1
      %v1714 = vmul.f32 %v1650, 0.1
      %v1715 = vmul.f32 %v1651, 0.1
      %v1716 = vmul.f32 %v1652, 0.1
      %v1717 = vmul.f32 %v1653, 0.1
      %v1718 = vmul.f32 %v1654, 0.1
      %v1719 = vmul.f32 %v1655, 0.1
      %v1720 = vmul.f32 %v1656, 0.1
      %v1721 = vmul.f32 %v1657, 0.1
      %v1722 = vmul.f32 %v1658, 0.1
      %v1723 = vmul.f32 %v1659, 0.1
      %v1724 = vmul.f32 %v1660, 0.1
      %v1725 = vmul.f32 %v1661, 0.1
      %v1726 = vmul.f32 %v1662, 0.1
      %v1727 = vmul.f32 %v1663, 0.1
      %v1728 = vmul.f32 %v1664, 0.1
      %v1729 = vmul.f32 %v1665, 0.1
      %v1730 = vmax.f32 %v1602, %v1666
      %v1731 = vmax.f32 %v1603, %v1667
      %v1732 = vmax.f32 %v1604, %v1668
      %v1733 = vmax.f32 %v1605, %v1669
      %v1734 = vmax.f32 %v1606, %v1670
      %v1735 = vmax.f32 %v1607, %v1671
      %v1736 = vmax.f32 %v1608, %v1672
      %v1737 = vmax.f32 %v1609, %v1673
      %v1738 = vmax.f32 %v1610, %v1674
      %v1739 = vmax.f32 %v1611, %v1675
      %v1740 = vmax.f32 %v1612, %v1676
      %v1741 = vmax.f32 %v1613, %v1677
      %v1742 = vmax.f32 %v1614, %v1678
      %v1743 = vmax.f32 %v1615, %v1679
      %v1744 = vmax.f32 %v1616, %v1680
      %v1745 = vmax.f32 %v1617, %v1681
      %v1746 = vmax.f32 %v1618, %v1682
      %v1747 = vmax.f32 %v1619, %v1683
      %v1748 = vmax.f32 %v1620, %v1684
      %v1749 = vmax.f32 %v1621, %v1685
      %v1750 = vmax.f32 %v1622, %v1686
      %v1751 = vmax.f32 %v1623, %v1687
      %v1752 = vmax.f32 %v1624, %v1688
      %v1753 = vmax.f32 %v1625, %v1689
      %v1754 = vmax.f32 %v1626, %v1690
      %v1755 = vmax.f32 %v1627, %v1691
      %v1756 = vmax.f32 %v1628, %v1692
      %v1757 = vmax.f32 %v1629, %v1693
      %v1758 = vmax.f32 %v1630, %v1694
      %v1759 = vmax.f32 %v1631, %v1695
      %v1760 = vmax.f32 %v1632, %v1696
      %v1761 = vmax.f32 %v1633, %v1697
      %v1762 = vmax.f32 %v1634, %v1698
      %v1763 = vmax.f32 %v1635, %v1699
      %v1764 = vmax.f32 %v1636, %v1700
      %v1765 = vmax.f32 %v1637, %v1701
      %v1766 = vmax.f32 %v1638, %v1702
      %v1767 = vmax.f32 %v1639, %v1703
      %v1768 = vmax.f32 %v1640, %v1704
      %v1769 = vmax.f32 %v1641, %v1705
      %v1770 = vmax.f32 %v1642, %v1706
      %v1771 = vmax.f32 %v1643, %v1707
      %v1772 = vmax.f32 %v1644, %v1708
      %v1773 = vmax.f32 %v1645, %v1709
      %v1774 = vmax.f32 %v1646, %v1710
      %v1775 = vmax.f32 %v1647, %v1711
      %v1776 = vmax.f32 %v1648, %v1712
      %v1777 = vmax.f32 %v1649, %v1713
      %v1778 = vmax.f32 %v1650, %v1714
      %v1779 = vmax.f32 %v1651, %v1715
      %v1780 = vmax.f32 %v1652, %v1716
      %v1781 = vmax.f32 %v1653, %v1717
      %v1782 = vmax.f32 %v1654, %v1718
      %v1783 = vmax.f32 %v1655, %v1719
      %v1784 = vmax.f32 %v1656, %v1720
      %v1785 = vmax.f32 %v1657, %v1721
      %v1786 = vmax.f32 %v1658, %v1722
      %v1787 = vmax.f32 %v1659, %v1723
      %v1788 = vmax.f32 %v1660, %v1724
      %v1789 = vmax.f32 %v1661, %v1725
      %v1790 = vmax.f32 %v1662, %v1726
      %v1791 = vmax.f32 %v1663, %v1727
      %v1792 = vmax.f32 %v1664, %v1728
      %v1793 = vmax.f32 %v1665, %v1729
      %v1794 = vpack.c.bf16 %v1731, %v1730
      %v1795 = vpack.c.bf16 %v1733, %v1732
      %v1796 = vpack.c.bf16 %v1735, %v1734
      %v1797 = vpack.c.bf16 %v1737, %v1736
      %v1798 = vpack.c.bf16 %v1739, %v1738
      %v1799 = vpack.c.bf16 %v1741, %v1740
      %v1800 = vpack.c.bf16 %v1743, %v1742
      %v1801 = vpack.c.bf16 %v1745, %v1744
      %v1802 = vpack.c.bf16 %v1747, %v1746
      %v1803 = vpack.c.bf16 %v1749, %v1748
      %v1804 = vpack.c.bf16 %v1751, %v1750
      %v1805 = vpack.c.bf16 %v1753, %v1752
      %v1806 = vpack.c.bf16 %v1755, %v1754
      %v1807 = vpack.c.bf16 %v1757, %v1756
      %v1808 = vpack.c.bf16 %v1759, %v1758
      %v1809 = vpack.c.bf16 %v1761, %v1760
      %v1810 = vpack.c.bf16 %v1763, %v1762
      %v1811 = vpack.c.bf16 %v1765, %v1764
      %v1812 = vpack.c.bf16 %v1767, %v1766
      %v1813 = vpack.c.bf16 %v1769, %v1768
      %v1814 = vpack.c.bf16 %v1771, %v1770
      %v1815 = vpack.c.bf16 %v1773, %v1772
      %v1816 = vpack.c.bf16 %v1775, %v1774
      %v1817 = vpack.c.bf16 %v1777, %v1776
      %v1818 = vpack.c.bf16 %v1779, %v1778
      %v1819 = vpack.c.bf16 %v1781, %v1780
      %v1820 = vpack.c.bf16 %v1783, %v1782
      %v1821 = vpack.c.bf16 %v1785, %v1784
      %v1822 = vpack.c.bf16 %v1787, %v1786
      %v1823 = vpack.c.bf16 %v1789, %v1788
      %v1824 = vpack.c.bf16 %v1791, %v1790
      %v1825 = vpack.c.bf16 %v1793, %v1792
      %v1858 = vunpack.c.l.b16 %v1794
      %v1859 = vunpack.c.h.b16 %v1794
      %v1860 = vunpack.c.l.b16 %v1795
      %v1861 = vunpack.c.h.b16 %v1795
      %v1862 = vunpack.c.l.b16 %v1796
      %v1863 = vunpack.c.h.b16 %v1796
      %v1864 = vunpack.c.l.b16 %v1797
      %v1865 = vunpack.c.h.b16 %v1797
      %v1866 = vunpack.c.l.b16 %v1798
      %v1867 = vunpack.c.h.b16 %v1798
      %v1868 = vunpack.c.l.b16 %v1799
      %v1869 = vunpack.c.h.b16 %v1799
      %v1870 = vunpack.c.l.b16 %v1800
      %v1871 = vunpack.c.h.b16 %v1800
      %v1872 = vunpack.c.l.b16 %v1801
      %v1873 = vunpack.c.h.b16 %v1801
      %v1874 = vunpack.c.l.b16 %v1802
      %v1875 = vunpack.c.h.b16 %v1802
      %v1876 = vunpack.c.l.b16 %v1803
      %v1877 = vunpack.c.h.b16 %v1803
      %v1878 = vunpack.c.l.b16 %v1804
      %v1879 = vunpack.c.h.b16 %v1804
      %v1880 = vunpack.c.l.b16 %v1805
      %v1881 = vunpack.c.h.b16 %v1805
      %v1882 = vunpack.c.l.b16 %v1806
      %v1883 = vunpack.c.h.b16 %v1806
      %v1884 = vunpack.c.l.b16 %v1807
      %v1885 = vunpack.c.h.b16 %v1807
      %v1886 = vunpack.c.l.b16 %v1808
      %v1887 = vunpack.c.h.b16 %v1808
      %v1888 = vunpack.c.l.b16 %v1809
      %v1889 = vunpack.c.h.b16 %v1809
      %v1890 = vunpack.c.l.b16 %v1810
      %v1891 = vunpack.c.h.b16 %v1810
      %v1892 = vunpack.c.l.b16 %v1811
      %v1893 = vunpack.c.h.b16 %v1811
      %v1894 = vunpack.c.l.b16 %v1812
      %v1895 = vunpack.c.h.b16 %v1812
      %v1896 = vunpack.c.l.b16 %v1813
      %v1897 = vunpack.c.h.b16 %v1813
      %v1898 = vunpack.c.l.b16 %v1814
      %v1899 = vunpack.c.h.b16 %v1814
      %v1900 = vunpack.c.l.b16 %v1815
      %v1901 = vunpack.c.h.b16 %v1815
      %v1902 = vunpack.c.l.b16 %v1816
      %v1903 = vunpack.c.h.b16 %v1816
      %v1904 = vunpack.c.l.b16 %v1817
      %v1905 = vunpack.c.h.b16 %v1817
      %v1906 = vunpack.c.l.b16 %v1818
      %v1907 = vunpack.c.h.b16 %v1818
      %v1908 = vunpack.c.l.b16 %v1819
      %v1909 = vunpack.c.h.b16 %v1819
      %v1910 = vunpack.c.l.b16 %v1820
      %v1911 = vunpack.c.h.b16 %v1820
      %v1912 = vunpack.c.l.b16 %v1821
      %v1913 = vunpack.c.h.b16 %v1821
      %v1914 = vunpack.c.l.b16 %v1822
      %v1915 = vunpack.c.h.b16 %v1822
      %v1916 = vunpack.c.l.b16 %v1823
      %v1917 = vunpack.c.h.b16 %v1823
      %v1918 = vunpack.c.l.b16 %v1824
      %v1919 = vunpack.c.h.b16 %v1824
      %v1920 = vunpack.c.l.b16 %v1825
      %v1921 = vunpack.c.h.b16 %v1825
      %v1922 = vpack.c.b16 %v1858, %v1858
      %v1923 = vpack.c.b16 %v1859, %v1859
      %v1924 = vpack.c.b16 %v1860, %v1860
      %v1925 = vpack.c.b16 %v1861, %v1861
      %v1926 = vpack.c.b16 %v1862, %v1862
      %v1927 = vpack.c.b16 %v1863, %v1863
      %v1928 = vpack.c.b16 %v1864, %v1864
      %v1929 = vpack.c.b16 %v1865, %v1865
      %v1930 = vpack.c.b16 %v1866, %v1866
      %v1931 = vpack.c.b16 %v1867, %v1867
      %v1932 = vpack.c.b16 %v1868, %v1868
      %v1933 = vpack.c.b16 %v1869, %v1869
      %v1934 = vpack.c.b16 %v1870, %v1870
      %v1935 = vpack.c.b16 %v1871, %v1871
      %v1936 = vpack.c.b16 %v1872, %v1872
      %v1937 = vpack.c.b16 %v1873, %v1873
      %v1938 = vpack.c.b16 %v1874, %v1874
      %v1939 = vpack.c.b16 %v1875, %v1875
      %v1940 = vpack.c.b16 %v1876, %v1876
      %v1941 = vpack.c.b16 %v1877, %v1877
      %v1942 = vpack.c.b16 %v1878, %v1878
      %v1943 = vpack.c.b16 %v1879, %v1879
      %v1944 = vpack.c.b16 %v1880, %v1880
      %v1945 = vpack.c.b16 %v1881, %v1881
      %v1946 = vpack.c.b16 %v1882, %v1882
      %v1947 = vpack.c.b16 %v1883, %v1883
      %v1948 = vpack.c.b16 %v1884, %v1884
      %v1949 = vpack.c.b16 %v1885, %v1885
      %v1950 = vpack.c.b16 %v1886, %v1886
      %v1951 = vpack.c.b16 %v1887, %v1887
      %v1952 = vpack.c.b16 %v1888, %v1888
      %v1953 = vpack.c.b16 %v1889, %v1889
      %v1954 = vpack.c.b16 %v1890, %v1890
      %v1955 = vpack.c.b16 %v1891, %v1891
      %v1956 = vpack.c.b16 %v1892, %v1892
      %v1957 = vpack.c.b16 %v1893, %v1893
      %v1958 = vpack.c.b16 %v1894, %v1894
      %v1959 = vpack.c.b16 %v1895, %v1895
      %v1960 = vpack.c.b16 %v1896, %v1896
      %v1961 = vpack.c.b16 %v1897, %v1897
      %v1962 = vpack.c.b16 %v1898, %v1898
      %v1963 = vpack.c.b16 %v1899, %v1899
      %v1964 = vpack.c.b16 %v1900, %v1900
      %v1965 = vpack.c.b16 %v1901, %v1901
      %v1966 = vpack.c.b16 %v1902, %v1902
      %v1967 = vpack.c.b16 %v1903, %v1903
      %v1968 = vpack.c.b16 %v1904, %v1904
      %v1969 = vpack.c.b16 %v1905, %v1905
      %v1970 = vpack.c.b16 %v1906, %v1906
      %v1971 = vpack.c.b16 %v1907, %v1907
      %v1972 = vpack.c.b16 %v1908, %v1908
      %v1973 = vpack.c.b16 %v1909, %v1909
      %v1974 = vpack.c.b16 %v1910, %v1910
      %v1975 = vpack.c.b16 %v1911, %v1911
      %v1976 = vpack.c.b16 %v1912, %v1912
      %v1977 = vpack.c.b16 %v1913, %v1913
      %v1978 = vpack.c.b16 %v1914, %v1914
      %v1979 = vpack.c.b16 %v1915, %v1915
      %v1980 = vpack.c.b16 %v1916, %v1916
      %v1981 = vpack.c.b16 %v1917, %v1917
      %v1982 = vpack.c.b16 %v1918, %v1918
      %v1983 = vpack.c.b16 %v1919, %v1919
      %v1984 = vpack.c.b16 %v1920, %v1920
      %v1985 = vpack.c.b16 %v1921, %v1921
      %2050 = vst [vmem:[%s305] sm:$0xf] %v1922
      %2051 = vst [vmem:[%s305 + $0x4] sm:$0xf] %v1923
      %2052 = vst [vmem:[%s305 + $0x8] sm:$0xf] %v1924
      %2053 = vst [vmem:[%s305 + $0xc] sm:$0xf] %v1925
      %2054 = vst [vmem:[%s305 + $0x10] sm:$0xf] %v1926
      %2055 = vst [vmem:[%s305 + $0x14] sm:$0xf] %v1927
      %2056 = vst [vmem:[%s305 + $0x18] sm:$0xf] %v1928
      %2057 = vst [vmem:[%s305 + $0x1c] sm:$0xf] %v1929
      %2058 = vst [vmem:[%s305 + $0x20] sm:$0xf] %v1930
      %2059 = vst [vmem:[%s305 + $0x24] sm:$0xf] %v1931
      %2060 = vst [vmem:[%s305 + $0x28] sm:$0xf] %v1932
      %2061 = vst [vmem:[%s305 + $0x2c] sm:$0xf] %v1933
      %2062 = vst [vmem:[%s305 + $0x30] sm:$0xf] %v1934
      %2063 = vst [vmem:[%s305 + $0x34] sm:$0xf] %v1935
      %2064 = vst [vmem:[%s305 + $0x38] sm:$0xf] %v1936
      %2065 = vst [vmem:[%s305 + $0x3c] sm:$0xf] %v1937
      %2066 = vst [vmem:[%s305 + $0x40] sm:$0xf] %v1938
      %2067 = vst [vmem:[%s305 + $0x44] sm:$0xf] %v1939
      %2068 = vst [vmem:[%s305 + $0x48] sm:$0xf] %v1940
      %2069 = vst [vmem:[%s305 + $0x4c] sm:$0xf] %v1941
      %2070 = vst [vmem:[%s305 + $0x50] sm:$0xf] %v1942
      %2071 = vst [vmem:[%s305 + $0x54] sm:$0xf] %v1943
      %2072 = vst [vmem:[%s305 + $0x58] sm:$0xf] %v1944
      %2073 = vst [vmem:[%s305 + $0x5c] sm:$0xf] %v1945
      %2074 = vst [vmem:[%s305 + $0x60] sm:$0xf] %v1946
      %2075 = vst [vmem:[%s305 + $0x64] sm:$0xf] %v1947
      %2076 = vst [vmem:[%s305 + $0x68] sm:$0xf] %v1948
      %2077 = vst [vmem:[%s305 + $0x6c] sm:$0xf] %v1949
      %2078 = vst [vmem:[%s305 + $0x70] sm:$0xf] %v1950
      %2079 = vst [vmem:[%s305 + $0x74] sm:$0xf] %v1951
      %2080 = vst [vmem:[%s305 + $0x78] sm:$0xf] %v1952
      %2081 = vst [vmem:[%s305 + $0x7c] sm:$0xf] %v1953
      %2082 = vst [vmem:[%s305 + $0x80] sm:$0xf] %v1954
      %2083 = vst [vmem:[%s305 + $0x84] sm:$0xf] %v1955
      %2084 = vst [vmem:[%s305 + $0x88] sm:$0xf] %v1956
      %2085 = vst [vmem:[%s305 + $0x8c] sm:$0xf] %v1957
      %2086 = vst [vmem:[%s305 + $0x90] sm:$0xf] %v1958
      %2087 = vst [vmem:[%s305 + $0x94] sm:$0xf] %v1959
      %2088 = vst [vmem:[%s305 + $0x98] sm:$0xf] %v1960
      %2089 = vst [vmem:[%s305 + $0x9c] sm:$0xf] %v1961
      %2090 = vst [vmem:[%s305 + $0xa0] sm:$0xf] %v1962
      %2091 = vst [vmem:[%s305 + $0xa4] sm:$0xf] %v1963
      %2092 = vst [vmem:[%s305 + $0xa8] sm:$0xf] %v1964
      %2093 = vst [vmem:[%s305 + $0xac] sm:$0xf] %v1965
      %2094 = vst [vmem:[%s305 + $0xb0] sm:$0xf] %v1966
      %2095 = vst [vmem:[%s305 + $0xb4] sm:$0xf] %v1967
      %2096 = vst [vmem:[%s305 + $0xb8] sm:$0xf] %v1968
      %2097 = vst [vmem:[%s305 + $0xbc] sm:$0xf] %v1969
      %2098 = vst [vmem:[%s305 + $0xc0] sm:$0xf] %v1970
      %2099 = vst [vmem:[%s305 + $0xc4] sm:$0xf] %v1971
      %2100 = vst [vmem:[%s305 + $0xc8] sm:$0xf] %v1972
      %2101 = vst [vmem:[%s305 + $0xcc] sm:$0xf] %v1973
      %2102 = vst [vmem:[%s305 + $0xd0] sm:$0xf] %v1974
      %2103 = vst [vmem:[%s305 + $0xd4] sm:$0xf] %v1975
      %2104 = vst [vmem:[%s305 + $0xd8] sm:$0xf] %v1976
      %2105 = vst [vmem:[%s305 + $0xdc] sm:$0xf] %v1977
      %2106 = vst [vmem:[%s305 + $0xe0] sm:$0xf] %v1978
      %2107 = vst [vmem:[%s305 + $0xe4] sm:$0xf] %v1979
      %2108 = vst [vmem:[%s305 + $0xe8] sm:$0xf] %v1980
      %2109 = vst [vmem:[%s305 + $0xec] sm:$0xf] %v1981
      %2110 = vst [vmem:[%s305 + $0xf0] sm:$0xf] %v1982
      %2111 = vst [vmem:[%s305 + $0xf4] sm:$0xf] %v1983
      %2112 = vst [vmem:[%s305 + $0xf8] sm:$0xf] %v1984
      %2113 = vst [vmem:[%s305 + $0xfc] sm:$0xf] %v1985
      %s2114 = smul.u32 64, %s20
      %p2115 = scmp.lt.s32.totalorder %s19, 1
      %s2116 = scalar_select %p2115, %s19, 1
      %p2117 = scmp.lt.s32.totalorder %s2114, 127
      %s2118 = scalar_select %p2117, %s2114, 127
      %s2119 = smul.addr %s2116, 128
      %s2120 = sadd.s32 %s2118, %s2119
      %s2121 = smul.addr %s2120, 4
      %s2122 = scalar_lea.vmem %s4, %s2121
      // Predicated region
      $region37: #{flownet_forward.3} parent=35 // pred_check
        %p2123 = pneg %p149
      $region38: #{flownet_forward.3} parent=35 // pred_check_branch
        %2125 = sbr.rel (%p2123) target = $region40
      $region39: #{flownet_forward.3} parent=35 // pred_region
        %s2126 = smul.u32 64, %s20
      $region40: #{flownet_forward.3} parent=35 // pred_fallthru
        _
    $region36: #{flownet_forward.3} parent=5 // pred_fallthru
      _
    %p2127 = scmp.le.s32.totalorder 2, %s10
    // Predicated region
    $region41: #{flownet_forward.3} parent=5 // pred_check
      %p2128 = pneg %p2127
    $region42: #{flownet_forward.3} parent=5 // pred_check_branch
      %2130 = sbr.rel (%p2128) target = $region44
    $region43: #{flownet_forward.3} parent=5 // pred_region
      %s2131 = ssub.s32 %s10, 2
      // Predicated region
      $region45: #{flownet_forward.3} parent=43 // pred_check
        %p2132 = pneg %p155
      $region46: #{flownet_forward.3} parent=43 // pred_check_branch
        %2134 = sbr.rel (%p2132) target = $region48
      $region47: #{flownet_forward.3} parent=43 // pred_region
        %s2135 = smul.u32 64, %s22
        %p2136 = scmp.lt.s32.totalorder %s21, 1
        %s2137 = scalar_select %p2136, %s21, 1
        %p2138 = scmp.lt.s32.totalorder %s2135, 127
        %s2139 = scalar_select %p2138, %s2135, 127
        %s2140 = smul.addr %s2137, 128
        %s2141 = sadd.s32 %s2139, %s2140
        %s2142 = smul.addr %s2141, 4
        %s2143 = scalar_lea.vmem %s4, %s2142
      $region48: #{flownet_forward.3} parent=43 // pred_fallthru
        _
    $region44: #{flownet_forward.3} parent=5 // pred_fallthru
      _
  $region6: #{flownet_forward.3} parent=0 // loop_footer
    %s14 = sadd.s32 1, %s10
  $region7: #{flownet_forward.3} parent=0 // loop_footer_branch
    %9 = sbr.rel target = $region3
  $region8: #{flownet_forward.3} parent=0 // loop_exit
    _

// kernel: flownet_forward.4
$region0: #{flownet_forward.4}
  #allocation0 [shape = 'u32[]', space=smem, size = 0x4, offset = 0x4, fixed_abs, tag = 'smem constant byte address 0x4 - core index']
  #allocation1 [shape = 'u32[144,128]{1,0:T(1,128)}', space=vmem, size = 0x12000, scoped, tag = 'internal scratch']
  #allocation2 [shape = 'f32[128,128]{1,0:T(8,128)}', space=vmem, size = 0x10000, scoped, tag = 'scratch operand']
  %s0 = inlined_call_operand.vmem [shape: bf16[2,272,96], index: 0, kind: input, shape index: {}, may-alias: {0,1}]
  %s1 = inlined_call_operand.vmem [shape: bf16[2,272,96], index: 1, kind: input, shape index: {}, may-alias: {0,1}]
  %s2 = inlined_call_operand.vmem [shape: bf16[2,96,128], index: 2, kind: input, shape index: {}]
  %s3 = inlined_call_operand.vmem [shape: f32[1,128], index: 3, kind: input, shape index: {}]
  %s4 = inlined_call_operand.vmem [shape: bf16[2,256,128], index: 4, kind: output, shape index: {}]
  %s5 = sld [smem:[#allocation0]]
  $region49: #{flownet_forward.4} parent=0
    _
  %s7 = ssub.s32 1, %s5
  %s8 = scalar_select 0, %s7, %s5
  loop: start=0, step=1, limit=6
  $region2: #{flownet_forward.4} parent=0 // loop_pre_header
    _
  $region3: #{flownet_forward.4} parent=0 // loop_header
    %s10 = sphi 0, %s14
    %p11 = scmp.ge.s32.totalorder %s10, 6
    %s17 = sphi 0, %s29
    %s18 = sphi 0, %s25
    %s19 = sphi 0, %s17
    %s20 = sphi 0, %s18
    %s21 = sphi 0, %s19
    %s22 = sphi 0, %s20
    %s34 = sphi 0, %s36
    %s37 = sphi 0, %s34
    %s38 = sphi 0, %s37
    %s54 = sphi 0, %s38
    %s66 = sphi 0, %s68
    %s69 = sphi 0, %s66
    %s70 = sphi 0, %s69
    %s86 = sphi 0, %s70
    %s90 = sphi 0, %s90
    %s92 = sphi 0, %s90
    %s93 = sphi 0, %s92
    %s107 = sphi 0, %s93
    %s111 = sphi 0, %s111
    %s113 = sphi 0, %s111
    %s114 = sphi 0, %s113
    %s128 = sphi 0, %s114
    %s136 = sphi 0, %s138
    %s139 = sphi 0, %s136
    %s140 = sphi 0, %s139
    %s156 = sphi 0, %s140
  $region4: #{flownet_forward.4} parent=0 // loop_header_branch
    %13 = sbr.rel (%p11) target = $region8
  $region5: #{flownet_forward.4} parent=0 // loop_body
    %s15 = ssub.s32 %s10, 1
    %s16 = ssub.s32 %s10, 2
    %s23 = sadd.s32 1, %s18
    %p24 = scmp.ge.s32.totalorder %s23, 2
    %s25 = scalar_select %p24, 0, %s23
    %s26 = sadd.s32 1, %s17
    %s27 = scalar_select %p24, %s26, %s17
    %p28 = scmp.ge.s32.totalorder %s27, 2
    %s29 = scalar_select %p28, 0, %s27
    %s30 = ssub.s32 %s17, %s29
    %s31 = ssub.s32 %s18, %s25
    %s32 = sor.u32 %s30, %s31
    %p33 = scmp.eq.s32.totalorder %s32, 0
    %s35 = sadd.s32 %s34, 1
    %s36 = scalar_select %p33, %s34, %s35
    %p39 = pneg %p33
    %p40 = scmp.eq.s32.totalorder %s10, 3
    %p41 = por %p39, %p40
    %p42 = scmp.ne.s32.totalorder %s34, %s37
    %p43 = scmp.eq.s32.totalorder %s10, 0
    %p44 = por %p42, %p43
    %p45 = scmp.ne.s32.totalorder %s34, %s37
    %p46 = scmp.eq.s32.totalorder %s15, 3
    %p47 = por %p45, %p46
    %p48 = scmp.ne.s32.totalorder %s37, %s38
    %p49 = scmp.eq.s32.totalorder %s15, 0
    %p50 = por %p48, %p49
    %p51 = scmp.ne.s32.totalorder %s37, %s38
    %p52 = scmp.eq.s32.totalorder %s16, 3
    %p53 = por %p51, %p52
    %p55 = scmp.ne.s32.totalorder %s38, %s54
    %p56 = scmp.eq.s32.totalorder %s16, 0
    %p57 = por %p55, %p56
    %s58 = sadd.s32 %s18, 1
    %s59 = smul.u32 %s58, 8
    %s60 = sadd.s32 %s25, 1
    %s61 = smul.u32 %s60, 8
    %s62 = ssub.s32 %s17, %s29
    %s63 = ssub.s32 %s59, %s61
    %s64 = sor.u32 %s62, %s63
    %p65 = scmp.eq.s32.totalorder %s64, 0
    %s67 = sadd.s32 %s66, 1
    %s68 = scalar_select %p65, %s66, %s67
    %p71 = pneg %p65
    %p72 = scmp.eq.s32.totalorder %s10, 3
    %p73 = por %p71, %p72
    %p74 = scmp.ne.s32.totalorder %s66, %s69
    %p75 = scmp.eq.s32.totalorder %s10, 0
    %p76 = por %p74, %p75
    %p77 = scmp.ne.s32.totalorder %s66, %s69
    %p78 = scmp.eq.s32.totalorder %s15, 3
    %p79 = por %p77, %p78
    %p80 = scmp.ne.s32.totalorder %s69, %s70
    %p81 = scmp.eq.s32.totalorder %s15, 0
    %p82 = por %p80, %p81
    %p83 = scmp.ne.s32.totalorder %s69, %s70
    %p84 = scmp.eq.s32.totalorder %s16, 3
    %p85 = por %p83, %p84
    %p87 = scmp.ne.s32.totalorder %s70, %s86
    %p88 = scmp.eq.s32.totalorder %s16, 0
    %p89 = por %p87, %p88
    %s91 = sadd.s32 %s90, 1
    %p94 = scmp.eq.s32.totalorder %s10, 3
    %p95 = scmp.ne.s32.totalorder %s90, %s92
    %p96 = scmp.eq.s32.totalorder %s10, 0
    %p97 = por %p95, %p96
    %p98 = scmp.ne.s32.totalorder %s90, %s92
    %p99 = scmp.eq.s32.totalorder %s15, 3
    %p100 = por %p98, %p99
    %p101 = scmp.ne.s32.totalorder %s92, %s93
    %p102 = scmp.eq.s32.totalorder %s15, 0
    %p103 = por %p101, %p102
    %p104 = scmp.ne.s32.totalorder %s92, %s93
    %p105 = scmp.eq.s32.totalorder %s16, 3
    %p106 = por %p104, %p105
    %p108 = scmp.ne.s32.totalorder %s93, %s107
    %p109 = scmp.eq.s32.totalorder %s16, 0
    %p110 = por %p108, %p109
    %s112 = sadd.s32 %s111, 1
    %p115 = scmp.eq.s32.totalorder %s10, 3
    %p116 = scmp.ne.s32.totalorder %s111, %s113
    %p117 = scmp.eq.s32.totalorder %s10, 0
    %p118 = por %p116, %p117
    %p119 = scmp.ne.s32.totalorder %s111, %s113
    %p120 = scmp.eq.s32.totalorder %s15, 3
    %p121 = por %p119, %p120
    %p122 = scmp.ne.s32.totalorder %s113, %s114
    %p123 = scmp.eq.s32.totalorder %s15, 0
    %p124 = por %p122, %p123
    %p125 = scmp.ne.s32.totalorder %s113, %s114
    %p126 = scmp.eq.s32.totalorder %s16, 3
    %p127 = por %p125, %p126
    %p129 = scmp.ne.s32.totalorder %s114, %s128
    %p130 = scmp.eq.s32.totalorder %s16, 0
    %p131 = por %p129, %p130
    %s132 = ssub.s32 %s17, %s29
    %s133 = ssub.s32 %s18, %s25
    %s134 = sor.u32 %s132, %s133
    %p135 = scmp.eq.s32.totalorder %s134, 0
    %s137 = sadd.s32 %s136, 1
    %s138 = scalar_select %p135, %s136, %s137
    %p141 = pneg %p135
    %p142 = scmp.eq.s32.totalorder %s10, 3
    %p143 = por %p141, %p142
    %p144 = scmp.ne.s32.totalorder %s136, %s139
    %p145 = scmp.eq.s32.totalorder %s10, 0
    %p146 = por %p144, %p145
    %p147 = scmp.ne.s32.totalorder %s136, %s139
    %p148 = scmp.eq.s32.totalorder %s15, 3
    %p149 = por %p147, %p148
    %p150 = scmp.ne.s32.totalorder %s139, %s140
    %p151 = scmp.eq.s32.totalorder %s15, 0
    %p152 = por %p150, %p151
    %p153 = scmp.ne.s32.totalorder %s139, %s140
    %p154 = scmp.eq.s32.totalorder %s16, 3
    %p155 = por %p153, %p154
    %p157 = scmp.ne.s32.totalorder %s140, %s156
    %p158 = scmp.eq.s32.totalorder %s16, 0
    %p159 = por %p157, %p158
    %p160 = scmp.le.s32.totalorder 1, %s10
    %p161 = scmp.lt.s32.totalorder %s10, 5
    %p162 = pnand %p160, %p161
    %p163 = pneg %p162
    // Predicated region
    $region9: #{flownet_forward.4} parent=5 // pred_check
      _
    $region10: #{flownet_forward.4} parent=5 // pred_check_branch
      %165 = sbr.rel (%p162) target = $region12
    $region11: #{flownet_forward.4} parent=5 // pred_region
      %s166 = ssub.s32 %s10, 1
      // Predicated region
      $region13: #{flownet_forward.4} parent=11 // pred_check
        %p167 = pneg %p103
      $region14: #{flownet_forward.4} parent=11 // pred_check_branch
        %169 = sbr.rel (%p167) target = $region16
      $region15: #{flownet_forward.4} parent=11 // pred_region
        _
      $region16: #{flownet_forward.4} parent=11 // pred_fallthru
        _
      // Predicated region
      $region17: #{flownet_forward.4} parent=11 // pred_check
        %p170 = pneg %p124
      $region18: #{flownet_forward.4} parent=11 // pred_check_branch
        %172 = sbr.rel (%p170) target = $region20
      $region19: #{flownet_forward.4} parent=11 // pred_region
        _
      $region20: #{flownet_forward.4} parent=11 // pred_fallthru
        _
    $region12: #{flownet_forward.4} parent=5 // pred_fallthru
      _
    %p173 = scmp.lt.s32.totalorder %s10, 4
    // Predicated region
    $region21: #{flownet_forward.4} parent=5 // pred_check
      %p174 = pneg %p173
    $region22: #{flownet_forward.4} parent=5 // pred_check_branch
      %176 = sbr.rel (%p174) target = $region24
    $region23: #{flownet_forward.4} parent=5 // pred_region
      // Predicated region
      $region25: #{flownet_forward.4} parent=23 // pred_check
        %p177 = pneg %p44
      $region26: #{flownet_forward.4} parent=23 // pred_check_branch
        %179 = sbr.rel (%p177) target = $region28
      $region27: #{flownet_forward.4} parent=23 // pred_region
        %s180 = smul.u32 16, %s18
        %s181 = ssub.s32 34, %s180
        %p182 = scmp.lt.s32.totalorder %s181, 16
        %s183 = scalar_select %p182, %s181, 16
        %s184 = smul.u32 64, %s183
        %p185 = scmp.lt.s32.totalorder %s17, 1
        %s186 = scalar_select %p185, %s17, 1
        %p187 = scmp.lt.s32.totalorder %s180, 33
        %s188 = scalar_select %p187, %s180, 33
        %s189 = smul.addr %s186, 34
        %s190 = sadd.s32 %s188, %s189
        %s191 = smul.addr %s190, 4
        %s192 = scalar_lea.vmem %s0, %s191
        %s193 = smul.u32 16, %s18
        %s194 = ssub.s32 34, %s193
        %p195 = scmp.lt.s32.totalorder %s194, 16
        %s196 = scalar_select %p195, %s194, 16
        %s197 = smul.u32 64, %s196
      $region28: #{flownet_forward.4} parent=23 // pred_fallthru
        _
      // Predicated region
      $region29: #{flownet_forward.4} parent=23 // pred_check
        %p198 = pneg %p76
      $region30: #{flownet_forward.4} parent=23 // pred_check_branch
        %200 = sbr.rel (%p198) target = $region32
      $region31: #{flownet_forward.4} parent=23 // pred_region
        %s201 = sadd.s32 %s18, 1
        %s202 = smul.u32 %s201, 8
        %s203 = smul.u32 2, %s202
        %p204 = scmp.lt.s32.totalorder %s17, 1
        %s205 = scalar_select %p204, %s17, 1
        %p206 = scmp.lt.s32.totalorder %s203, 33
        %s207 = scalar_select %p206, %s203, 33
        %s208 = smul.addr %s205, 34
        %s209 = sadd.s32 %s207, %s208
        %s210 = smul.addr %s209, 4
        %s211 = scalar_lea.vmem %s1, %s210
        %s212 = sadd.s32 %s18, 1
        %s213 = smul.u32 %s212, 8
        %s214 = smul.u32 2, %s213
      $region32: #{flownet_forward.4} parent=23 // pred_fallthru
        _
    $region24: #{flownet_forward.4} parent=5 // pred_fallthru
      _
    %p215 = scmp.le.s32.totalorder 1, %s10
    %p216 = scmp.lt.s32.totalorder %s10, 5
    %p217 = pnand %p215, %p216
    %p218 = pneg %p217
    // Predicated region
    $region33: #{flownet_forward.4} parent=5 // pred_check
      _
    $region34: #{flownet_forward.4} parent=5 // pred_check_branch
      %220 = sbr.rel (%p217) target = $region36
    $region35: #{flownet_forward.4} parent=5 // pred_region
      %s221 = ssub.s32 %s10, 1
      %s222 = smul.u32 16, %s20
      %s223 = ssub.s32 34, %s222
      %p224 = scmp.lt.s32.totalorder %s223, 16
      %s225 = scalar_select %p224, %s223, 16
      %s226 = smul.u32 64, %s225
      %p227 = scmp.lt.s32.totalorder %s19, 1
      %s228 = scalar_select %p227, %s19, 1
      %p229 = scmp.lt.s32.totalorder %s222, 33
      %s230 = scalar_select %p229, %s222, 33
      %s231 = smul.addr %s228, 34
      %s232 = sadd.s32 %s230, %s231
      %s233 = smul.addr %s232, 4
      %s234 = scalar_lea.vmem %s0, %s233
      %p235 = pneg %p50
      %p236 = pneg %p47
      %s237 = sadd.s32 %s20, 1
      %s238 = smul.u32 %s237, 8
      %s239 = smul.u32 2, %s238
      %p240 = scmp.lt.s32.totalorder %s19, 1
      %s241 = scalar_select %p240, %s19, 1
      %p242 = scmp.lt.s32.totalorder %s239, 33
      %s243 = scalar_select %p242, %s239, 33
      %s244 = smul.addr %s241, 34
      %s245 = sadd.s32 %s243, %s244
      %s246 = smul.addr %s245, 4
      %s247 = scalar_lea.vmem %s1, %s246
      %p248 = pneg %p82
      %p249 = pneg %p79
      %p250 = pneg %p103
      %p251 = pneg %p100
      %p252 = pneg %p124
      %p253 = pneg %p121
      %p254 = pneg %p152
      %p255 = pneg %p149
      %s256 = smul.u32 16, %s20
      %p257 = scmp.lt.s32.totalorder %s19, 1
      %s258 = scalar_select %p257, %s19, 1
      %p259 = scmp.lt.s32.totalorder %s256, 31
      %s260 = scalar_select %p259, %s256, 31
      %s261 = smul.addr %s258, 32
      %s262 = sadd.s32 %s260, %s261
      %s263 = smul.addr %s262, 4
      %s264 = scalar_lea.vmem %s4, %s263
      %s265 = smul.u32 16, %s20
      %s266 = ssub.s32 34, %s265
      %p267 = scmp.lt.s32.totalorder %s266, 16
      %s268 = scalar_select %p267, %s266, 16
      %s269 = smul.u32 64, %s268
      %p270 = scmp.lt.s32.totalorder %s19, 1
      %s271 = scalar_select %p270, %s19, 1
      %p272 = scmp.lt.s32.totalorder %s265, 33
      %s273 = scalar_select %p272, %s265, 33
      %s274 = smul.addr %s271, 34
      %s275 = sadd.s32 %s273, %s274
      %s276 = smul.addr %s275, 4
      %s277 = scalar_lea.vmem %s0, %s276
      %s278 = smul.u32 16, %s20
      %s279 = ssub.s32 34, %s278
      %p280 = scmp.lt.s32.totalorder %s279, 16
      %s281 = scalar_select %p280, %s279, 16
      %s282 = smul.u32 64, %s281
      %s283 = sadd.s32 %s20, 1
      %s284 = smul.u32 %s283, 8
      %s285 = smul.u32 2, %s284
      %p286 = scmp.lt.s32.totalorder %s19, 1
      %s287 = scalar_select %p286, %s19, 1
      %p288 = scmp.lt.s32.totalorder %s285, 33
      %s289 = scalar_select %p288, %s285, 33
      %s290 = smul.addr %s287, 34
      %s291 = sadd.s32 %s289, %s290
      %s292 = smul.addr %s291, 4
      %s293 = scalar_lea.vmem %s1, %s292
      %s294 = sadd.s32 %s20, 1
      %s295 = smul.u32 %s294, 8
      %s296 = smul.u32 2, %s295
      %s297 = smul.u32 16, %s20
      %p298 = scmp.lt.s32.totalorder %s19, 1
      %s299 = scalar_select %p298, %s19, 1
      %p300 = scmp.lt.s32.totalorder %s297, 31
      %s301 = scalar_select %p300, %s297, 31
      %s302 = smul.addr %s299, 32
      %s303 = sadd.s32 %s301, %s302
      %s304 = smul.addr %s303, 4
      %s305 = scalar_lea.vmem %s4, %s304
      %s306 = smul.u32 16, %s20
      %v308 = vld [vmem:[%s277] sm:$0xf]
      %v309 = vld [vmem:[%s277 + $0x4] sm:$0xf]
      %v310 = vld [vmem:[%s277 + $0x8] sm:$0xf]
      %v311 = vld [vmem:[%s277 + $0xc] sm:$0xf]
      %v312 = vld [vmem:[%s277 + $0x10] sm:$0xf]
      %v313 = vld [vmem:[%s277 + $0x14] sm:$0xf]
      %v314 = vld [vmem:[%s277 + $0x18] sm:$0xf]
      %v315 = vld [vmem:[%s277 + $0x1c] sm:$0xf]
      %v316 = vld [vmem:[%s277 + $0x20] sm:$0xf]
      %v317 = vld [vmem:[%s277 + $0x24] sm:$0xf]
      %v318 = vld [vmem:[%s277 + $0x28] sm:$0xf]
      %v319 = vld [vmem:[%s277 + $0x2c] sm:$0xf]
      %v320 = vld [vmem:[%s277 + $0x30] sm:$0xf]
      %v321 = vld [vmem:[%s277 + $0x34] sm:$0xf]
      %v322 = vld [vmem:[%s277 + $0x38] sm:$0xf]
      %v323 = vld [vmem:[%s277 + $0x3c] sm:$0xf]
      %v324 = vld [vmem:[%s2] sm:$0xf]
      %v325 = vld [vmem:[%s2 + $0x4] sm:$0xf]
      %v326 = vld [vmem:[%s2 + $0x8] sm:$0xf]
      %v327 = vld [vmem:[%s2 + $0xc] sm:$0xf]
      %v328 = vld [vmem:[%s2 + $0x10] sm:$0xf]
      %v329 = vld [vmem:[%s2 + $0x14] sm:$0xf]
      %v330 = vld [vmem:[%s2 + $0x18] sm:$0xf]
      %v331 = vld [vmem:[%s2 + $0x1c] sm:$0xf]
      %v332 = vld [vmem:[%s2 + $0x20] sm:$0xf]
      %v333 = vld [vmem:[%s2 + $0x24] sm:$0xf]
      %v334 = vld [vmem:[%s2 + $0x28] sm:$0xf]
      %v335 = vld [vmem:[%s2 + $0x2c] sm:$0xf]
      %v352 = vunpack.c.l.b16 %v308
      %v353 = vunpack.c.l.b16 %v309
      %v354 = vunpack.c.l.b16 %v310
      %v355 = vunpack.c.l.b16 %v311
      %v356 = vunpack.c.l.b16 %v312
      %v357 = vunpack.c.l.b16 %v313
      %v358 = vunpack.c.l.b16 %v314
      %v359 = vunpack.c.l.b16 %v315
      %v360 = vunpack.c.l.b16 %v316
      %v361 = vunpack.c.l.b16 %v317
      %v362 = vunpack.c.l.b16 %v318
      %v363 = vunpack.c.l.b16 %v319
      %v364 = vunpack.c.l.b16 %v320
      %v365 = vunpack.c.l.b16 %v321
      %v366 = vunpack.c.l.b16 %v322
      %v367 = vunpack.c.l.b16 %v323
      %v368 = vpack.c.b16 %v353, %v352
      %v369 = vpack.c.b16 %v355, %v354
      %v370 = vpack.c.b16 %v357, %v356
      %v371 = vpack.c.b16 %v359, %v358
      %v372 = vpack.c.b16 %v361, %v360
      %v373 = vpack.c.b16 %v363, %v362
      %v374 = vpack.c.b16 %v365, %v364
      %v375 = vpack.c.b16 %v367, %v366
      %v388 = vunpack.c.l.b16 %v324
      %v389 = vunpack.c.l.b16 %v325
      %v390 = vunpack.c.l.b16 %v326
      %v391 = vunpack.c.l.b16 %v327
      %v392 = vunpack.c.l.b16 %v328
      %v393 = vunpack.c.l.b16 %v329
      %v394 = vunpack.c.l.b16 %v330
      %v395 = vunpack.c.l.b16 %v331
      %v396 = vunpack.c.l.b16 %v332
      %v397 = vunpack.c.l.b16 %v333
      %v398 = vunpack.c.l.b16 %v334
      %v399 = vunpack.c.l.b16 %v335
      %v400 = vpack.c.b16 %v389, %v388
      %v401 = vpack.c.b16 %v391, %v390
      %v402 = vpack.c.b16 %v393, %v392
      %v403 = vpack.c.b16 %v395, %v394
      %v404 = vpack.c.b16 %v397, %v396
      %v405 = vpack.c.b16 %v399, %v398
      %vm412 = vcmask 785408
      %v414 = vsel %vm412, %v368, 0
      %v417 = vsel %vm412, %v369, 0
      %v420 = vsel %vm412, %v370, 0
      %v423 = vsel %vm412, %v371, 0
      %v426 = vsel %vm412, %v372, 0
      %v429 = vsel %vm412, %v373, 0
      %v432 = vsel %vm412, %v374, 0
      %v435 = vsel %vm412, %v375, 0
      %437 = vmatprep.subr.bf16.mxu0 0
      %438 = vmatpush1.bf16.msra.mxu0 %v400
      %439 = vmatprep.subr.bf16.mxu0 0
      %440 = vmatpush1.bf16.msra.mxu0 %v401
      %441 = vmatprep.subr.bf16.mxu0 0
      %442 = vmatpush1.bf16.msra.mxu0 %v402
      %443 = vmatprep.subr.bf16.mxu0 0
      %444 = vmatpush1.bf16.msra.mxu0 %v403
      %445 = vmatprep.subr.bf16.mxu0 0
      %446 = vmatpush1.bf16.msra.mxu0 %v404
      %447 = vmatprep.subr.bf16.mxu0 0
      %448 = vmatpush1.bf16.msra.mxu0 %v405
      %449 = vmatprep.subr.bf16.mxu0 0
      %450 = vmatpush1.bf16.msra.mxu0 0
      %451 = vmatprep.subr.bf16.mxu0 0
      %452 = vmatpush1.bf16.msra.mxu0 0
      %453 = vmatprep.subr.bf16.mxu0 0
      %454 = vmatpush1.bf16.msra.mxu0 0
      %455 = vmatprep.subr.bf16.mxu0 0
      %456 = vmatpush1.bf16.msra.mxu0 0
      %457 = vmatprep.subr.bf16.mxu0 0
      %458 = vmatpush1.bf16.msra.mxu0 0
      %459 = vmatprep.subr.bf16.mxu0 0
      %460 = vmatpush1.bf16.msra.mxu0 0
      %461 = vmatprep.subr.bf16.mxu0 0
      %462 = vmatpush1.bf16.msra.mxu0 0
      %463 = vmatprep.subr.bf16.mxu0 0
      %464 = vmatpush1.bf16.msra.mxu0 0
      %465 = vmatprep.subr.bf16.mxu0 0
      %466 = vmatpush1.bf16.msra.mxu0 0
      %467 = vmatprep.subr.bf16.mxu0 0
      %468 = vmatpush1.bf16.msra.mxu0 0
      %469 = vmatprep.mubr.bf16.mxu0 0
      %470 = vmatmul.mubr.bf16.gmra.mrb[0].mxu0 %v414
      %v471 = vpop.f32.mrb[0].mxu0
      %v472 = vadd.f32 0.0, %v471
      %v473 = vpop.f32.mrb[0].mxu0
      %v474 = vpop.f32.mrb[0].mxu0
      %v475 = vadd.f32 0.0, %v474
      %v476 = vpop.f32.mrb[0].mxu0
      %477 = vmatprep.mubr.bf16.mxu0 0
      %478 = vmatmul.mubr.bf16.gmra.mrb[0].mxu0 %v417
      %v479 = vpop.f32.mrb[0].mxu0
      %v480 = vadd.f32 0.0, %v479
      %v481 = vpop.f32.mrb[0].mxu0
      %v482 = vpop.f32.mrb[0].mxu0
      %v483 = vadd.f32 0.0, %v482
      %v484 = vpop.f32.mrb[0].mxu0
      %485 = vmatprep.mubr.bf16.mxu0 0
      %486 = vmatmul.mubr.bf16.gmra.mrb[0].mxu0 %v420
      %v487 = vpop.f32.mrb[0].mxu0
      %v488 = vadd.f32 0.0, %v487
      %v489 = vpop.f32.mrb[0].mxu0
      %v490 = vpop.f32.mrb[0].mxu0
      %v491 = vadd.f32 0.0, %v490
      %v492 = vpop.f32.mrb[0].mxu0
      %493 = vmatprep.mubr.bf16.mxu0 0
      %494 = vmatmul.mubr.bf16.gmra.mrb[0].mxu0 %v423
      %v495 = vpop.f32.mrb[0].mxu0
      %v496 = vadd.f32 0.0, %v495
      %v497 = vpop.f32.mrb[0].mxu0
      %v498 = vpop.f32.mrb[0].mxu0
      %v499 = vadd.f32 0.0, %v498
      %v500 = vpop.f32.mrb[0].mxu0
      %501 = vmatprep.mubr.bf16.mxu0 0
      %502 = vmatmul.mubr.bf16.gmra.mrb[0].mxu0 %v426
      %v503 = vpop.f32.mrb[0].mxu0
      %v504 = vadd.f32 0.0, %v503
      %v505 = vpop.f32.mrb[0].mxu0
      %v506 = vpop.f32.mrb[0].mxu0
      %v507 = vadd.f32 0.0, %v506
      %v508 = vpop.f32.mrb[0].mxu0
      %509 = vmatprep.mubr.bf16.mxu0 0
      %510 = vmatmul.mubr.bf16.gmra.mrb[0].mxu0 %v429
      %v511 = vpop.f32.mrb[0].mxu0
      %v512 = vadd.f32 0.0, %v511
      %v513 = vpop.f32.mrb[0].mxu0
      %v514 = vpop.f32.mrb[0].mxu0
      %v515 = vadd.f32 0.0, %v514
      %v516 = vpop.f32.mrb[0].mxu0
      %517 = vmatprep.mubr.bf16.mxu0 0
      %518 = vmatmul.mubr.bf16.gmra.mrb[0].mxu0 %v432
      %v519 = vpop.f32.mrb[0].mxu0
      %v520 = vadd.f32 0.0, %v519
      %v521 = vpop.f32.mrb[0].mxu0
      %v522 = vpop.f32.mrb[0].mxu0
      %v523 = vadd.f32 0.0, %v522
      %v524 = vpop.f32.mrb[0].mxu0
      %525 = vmatprep.mubr.bf16.mxu0 0
      %526 = vmatmul.mubr.bf16.gmra.mrb[0].mxu0 %v435
      %v527 = vpop.f32.mrb[0].mxu0
      %v528 = vadd.f32 0.0, %v527
      %v529 = vpop.f32.mrb[0].mxu0
      %v530 = vpop.f32.mrb[0].mxu0
      %v531 = vadd.f32 0.0, %v530
      %v532 = vpop.f32.mrb[0].mxu0
      %533 = vdwg.mxu0
      %534 = vst [vmem:[#allocation2] sm:$0xff] %v472
      %535 = vst [vmem:[#allocation2 + $0x8] sm:$0xff] %v475
      %536 = vst [vmem:[#allocation2 + $0x10] sm:$0xff] %v480
      %537 = vst [vmem:[#allocation2 + $0x18] sm:$0xff] %v483
      %538 = vst [vmem:[#allocation2 + $0x20] sm:$0xff] %v488
      %539 = vst [vmem:[#allocation2 + $0x28] sm:$0xff] %v491
      %540 = vst [vmem:[#allocation2 + $0x30] sm:$0xff] %v496
      %541 = vst [vmem:[#allocation2 + $0x38] sm:$0xff] %v499
      %542 = vst [vmem:[#allocation2 + $0x40] sm:$0xff] %v504
      %543 = vst [vmem:[#allocation2 + $0x48] sm:$0xff] %v507
      %544 = vst [vmem:[#allocation2 + $0x50] sm:$0xff] %v512
      %545 = vst [vmem:[#allocation2 + $0x58] sm:$0xff] %v515
      %546 = vst [vmem:[#allocation2 + $0x60] sm:$0xff] %v520
      %547 = vst [vmem:[#allocation2 + $0x68] sm:$0xff] %v523
      %548 = vst [vmem:[#allocation2 + $0x70] sm:$0xff] %v528
      %549 = vst [vmem:[#allocation2 + $0x78] sm:$0xff] %v531
      %v550 = vld [vmem:[%s293] sm:$0xf]
      %v551 = vld [vmem:[%s293 + $0x4] sm:$0xf]
      %v554 = vunpack.c.l.b16 %v550
      %v555 = vunpack.c.l.b16 %v551
      %v556 = vpack.c.b16 %v555, %v554
      %v557 = vld [vmem:[#allocation2] sm:$0xff]
      %v558 = vld [vmem:[#allocation2 + $0x8] sm:$0xff]
      %v559 = vld [vmem:[#allocation2 + $0x10] sm:$0xff]
      %v560 = vld [vmem:[#allocation2 + $0x18] sm:$0xff]
      %v561 = vld [vmem:[#allocation2 + $0x20] sm:$0xff]
      %v562 = vld [vmem:[#allocation2 + $0x28] sm:$0xff]
      %v563 = vld [vmem:[#allocation2 + $0x30] sm:$0xff]
      %v564 = vld [vmem:[#allocation2 + $0x38] sm:$0xff]
      %v565 = vld [vmem:[#allocation2 + $0x40] sm:$0xff]
      %v566 = vld [vmem:[#allocation2 + $0x48] sm:$0xff]
      %v567 = vld [vmem:[#allocation2 + $0x50] sm:$0xff]
      %v568 = vld [vmem:[#allocation2 + $0x58] sm:$0xff]
      %v569 = vld [vmem:[#allocation2 + $0x60] sm:$0xff]
      %v570 = vld [vmem:[#allocation2 + $0x68] sm:$0xff]
      %v571 = vld [vmem:[#allocation2 + $0x70] sm:$0xff]
      %v572 = vld [vmem:[#allocation2 + $0x78] sm:$0xff]
      %s573 = scalar_lea.vmem %s2, 48
      %v574 = vld [vmem:[%s573] sm:$0xf]
      %v575 = vld [vmem:[%s573 + $0x4] sm:$0xf]
      %v576 = vld [vmem:[%s573 + $0x8] sm:$0xf]
      %v577 = vld [vmem:[%s573 + $0xc] sm:$0xf]
      %v578 = vld [vmem:[%s573 + $0x10] sm:$0xf]
      %v579 = vld [vmem:[%s573 + $0x14] sm:$0xf]
      %v580 = vld [vmem:[%s573 + $0x18] sm:$0xf]
      %v581 = vld [vmem:[%s573 + $0x1c] sm:$0xf]
      %v582 = vld [vmem:[%s573 + $0x20] sm:$0xf]
      %v583 = vld [vmem:[%s573 + $0x24] sm:$0xf]
      %v584 = vld [vmem:[%s573 + $0x28] sm:$0xf]
      %v585 = vld [vmem:[%s573 + $0x2c] sm:$0xf]
      %v598 = vunpack.c.l.b16 %v574
      %v599 = vunpack.c.l.b16 %v575
      %v600 = vunpack.c.l.b16 %v576
      %v601 = vunpack.c.l.b16 %v577
      %v602 = vunpack.c.l.b16 %v578
      %v603 = vunpack.c.l.b16 %v579
      %v604 = vunpack.c.l.b16 %v580
      %v605 = vunpack.c.l.b16 %v581
      %v606 = vunpack.c.l.b16 %v582
      %v607 = vunpack.c.l.b16 %v583
      %v608 = vunpack.c.l.b16 %v584
      %v609 = vunpack.c.l.b16 %v585
      %v610 = vpack.c.b16 %v599, %v598
      %v611 = vpack.c.b16 %v601, %v600
      %v612 = vpack.c.b16 %v603, %v602
      %v613 = vpack.c.b16 %v605, %v604
      %v614 = vpack.c.b16 %v607, %v606
      %v615 = vpack.c.b16 %v609, %v608
      %v623 = vsel %vm412, %v556, 0
      %625 = vmatprep.subr.bf16.mxu0 0
      %626 = vmatpush1.bf16.msra.mxu0 %v610
      %627 = vmatprep.subr.bf16.mxu0 0
      %628 = vmatpush1.bf16.msra.mxu0 %v611
      %629 = vmatprep.subr.bf16.mxu0 0
      %630 = vmatpush1.bf16.msra.mxu0 %v612
      %631 = vmatprep.subr.bf16.mxu0 0
      %632 = vmatpush1.bf16.msra.mxu0 %v613
      %633 = vmatprep.subr.bf16.mxu0 0
      %634 = vmatpush1.bf16.msra.mxu0 %v614
      %635 = vmatprep.subr.bf16.mxu0 0
      %636 = vmatpush1.bf16.msra.mxu0 %v615
      %637 = vmatprep.subr.bf16.mxu0 0
      %638 = vmatpush1.bf16.msra.mxu0 0
      %639 = vmatprep.subr.bf16.mxu0 0
      %640 = vmatpush1.bf16.msra.mxu0 0
      %641 = vmatprep.subr.bf16.mxu0 0
      %642 = vmatpush1.bf16.msra.mxu0 0
      %643 = vmatprep.subr.bf16.mxu0 0
      %644 = vmatpush1.bf16.msra.mxu0 0
      %645 = vmatprep.subr.bf16.mxu0 0
      %646 = vmatpush1.bf16.msra.mxu0 0
      %647 = vmatprep.subr.bf16.mxu0 0
      %648 = vmatpush1.bf16.msra.mxu0 0
      %649 = vmatprep.subr.bf16.mxu0 0
      %650 = vmatpush1.bf16.msra.mxu0 0
      %651 = vmatprep.subr.bf16.mxu0 0
      %652 = vmatpush1.bf16.msra.mxu0 0
      %653 = vmatprep.subr.bf16.mxu0 0
      %654 = vmatpush1.bf16.msra.mxu0 0
      %655 = vmatprep.subr.bf16.mxu0 0
      %656 = vmatpush1.bf16.msra.mxu0 0
      %657 = vmatprep.mubr.bf16.mxu0 0
      %658 = vmatmul.mubr.bf16.gmra.mrb[0].mxu0 %v417
      %v659 = vpop.f32.mrb[0].mxu0
      %v660 = vadd.f32 0.0, %v659
      %v661 = vpop.f32.mrb[0].mxu0
      %v662 = vpop.f32.mrb[0].mxu0
      %v663 = vadd.f32 0.0, %v662
      %v664 = vpop.f32.mrb[0].mxu0
      %665 = vmatprep.mubr.bf16.mxu0 0
      %666 = vmatmul.mubr.bf16.gmra.mrb[0].mxu0 %v420
      %v667 = vpop.f32.mrb[0].mxu0
      %v668 = vadd.f32 0.0, %v667
      %v669 = vpop.f32.mrb[0].mxu0
      %v670 = vpop.f32.mrb[0].mxu0
      %v671 = vadd.f32 0.0, %v670
      %v672 = vpop.f32.mrb[0].mxu0
      %673 = vmatprep.mubr.bf16.mxu0 0
      %674 = vmatmul.mubr.bf16.gmra.mrb[0].mxu0 %v423
      %v675 = vpop.f32.mrb[0].mxu0
      %v676 = vadd.f32 0.0, %v675
      %v677 = vpop.f32.mrb[0].mxu0
      %v678 = vpop.f32.mrb[0].mxu0
      %v679 = vadd.f32 0.0, %v678
      %v680 = vpop.f32.mrb[0].mxu0
      %681 = vmatprep.mubr.bf16.mxu0 0
      %682 = vmatmul.mubr.bf16.gmra.mrb[0].mxu0 %v426
      %v683 = vpop.f32.mrb[0].mxu0
      %v684 = vadd.f32 0.0, %v683
      %v685 = vpop.f32.mrb[0].mxu0
      %v686 = vpop.f32.mrb[0].mxu0
      %v687 = vadd.f32 0.0, %v686
      %v688 = vpop.f32.mrb[0].mxu0
      %689 = vmatprep.mubr.bf16.mxu0 0
      %690 = vmatmul.mubr.bf16.gmra.mrb[0].mxu0 %v429
      %v691 = vpop.f32.mrb[0].mxu0
      %v692 = vadd.f32 0.0, %v691
      %v693 = vpop.f32.mrb[0].mxu0
      %v694 = vpop.f32.mrb[0].mxu0
      %v695 = vadd.f32 0.0, %v694
      %v696 = vpop.f32.mrb[0].mxu0
      %697 = vmatprep.mubr.bf16.mxu0 0
      %698 = vmatmul.mubr.bf16.gmra.mrb[0].mxu0 %v432
      %v699 = vpop.f32.mrb[0].mxu0
      %v700 = vadd.f32 0.0, %v699
      %v701 = vpop.f32.mrb[0].mxu0
      %v702 = vpop.f32.mrb[0].mxu0
      %v703 = vadd.f32 0.0, %v702
      %v704 = vpop.f32.mrb[0].mxu0
      %705 = vmatprep.mubr.bf16.mxu0 0
      %706 = vmatmul.mubr.bf16.gmra.mrb[0].mxu0 %v435
      %v707 = vpop.f32.mrb[0].mxu0
      %v708 = vadd.f32 0.0, %v707
      %v709 = vpop.f32.mrb[0].mxu0
      %v710 = vpop.f32.mrb[0].mxu0
      %v711 = vadd.f32 0.0, %v710
      %v712 = vpop.f32.mrb[0].mxu0
      %713 = vmatprep.mubr.bf16.mxu0 0
      %714 = vmatmul.mubr.bf16.gmra.mrb[0].mxu0 %v623
      %v715 = vpop.f32.mrb[0].mxu0
      %v716 = vadd.f32 0.0, %v715
      %v717 = vpop.f32.mrb[0].mxu0
      %v718 = vpop.f32.mrb[0].mxu0
      %v719 = vadd.f32 0.0, %v718
      %v720 = vpop.f32.mrb[0].mxu0
      %721 = vdwg.mxu0
      %v722 = vadd.f32 %v557, %v660
      %v723 = vadd.f32 %v558, %v663
      %v724 = vadd.f32 %v559, %v668
      %v725 = vadd.f32 %v560, %v671
      %v726 = vadd.f32 %v561, %v676
      %v727 = vadd.f32 %v562, %v679
      %v728 = vadd.f32 %v563, %v684
      %v729 = vadd.f32 %v564, %v687
      %v730 = vadd.f32 %v565, %v692
      %v731 = vadd.f32 %v566, %v695
      %v732 = vadd.f32 %v567, %v700
      %v733 = vadd.f32 %v568, %v703
      %v734 = vadd.f32 %v569, %v708
      %v735 = vadd.f32 %v570, %v711
      %v736 = vadd.f32 %v571, %v716
      %v737 = vadd.f32 %v572, %v719
      %738 = vst [vmem:[#allocation2] sm:$0xff] %v722
      %739 = vst [vmem:[#allocation2 + $0x8] sm:$0xff] %v723
      %740 = vst [vmem:[#allocation2 + $0x10] sm:$0xff] %v724
      %741 = vst [vmem:[#allocation2 + $0x18] sm:$0xff] %v725
      %742 = vst [vmem:[#allocation2 + $0x20] sm:$0xff] %v726
      %743 = vst [vmem:[#allocation2 + $0x28] sm:$0xff] %v727
      %744 = vst [vmem:[#allocation2 + $0x30] sm:$0xff] %v728
      %745 = vst [vmem:[#allocation2 + $0x38] sm:$0xff] %v729
      %746 = vst [vmem:[#allocation2 + $0x40] sm:$0xff] %v730
      %747 = vst [vmem:[#allocation2 + $0x48] sm:$0xff] %v731
      %748 = vst [vmem:[#allocation2 + $0x50] sm:$0xff] %v732
      %749 = vst [vmem:[#allocation2 + $0x58] sm:$0xff] %v733
      %750 = vst [vmem:[#allocation2 + $0x60] sm:$0xff] %v734
      %751 = vst [vmem:[#allocation2 + $0x68] sm:$0xff] %v735
      %752 = vst [vmem:[#allocation2 + $0x70] sm:$0xff] %v736
      %753 = vst [vmem:[#allocation2 + $0x78] sm:$0xff] %v737
      %v754 = vld [vmem:[#allocation2] sm:$0xff]
      %v755 = vld [vmem:[#allocation2 + $0x8] sm:$0xff]
      %v756 = vld [vmem:[#allocation2 + $0x10] sm:$0xff]
      %v757 = vld [vmem:[#allocation2 + $0x18] sm:$0xff]
      %v758 = vld [vmem:[#allocation2 + $0x20] sm:$0xff]
      %v759 = vld [vmem:[#allocation2 + $0x28] sm:$0xff]
      %v760 = vld [vmem:[#allocation2 + $0x30] sm:$0xff]
      %v761 = vld [vmem:[#allocation2 + $0x38] sm:$0xff]
      %v762 = vld [vmem:[#allocation2 + $0x40] sm:$0xff]
      %v763 = vld [vmem:[#allocation2 + $0x48] sm:$0xff]
      %v764 = vld [vmem:[#allocation2 + $0x50] sm:$0xff]
      %v765 = vld [vmem:[#allocation2 + $0x58] sm:$0xff]
      %v766 = vld [vmem:[#allocation2 + $0x60] sm:$0xff]
      %v767 = vld [vmem:[#allocation2 + $0x68] sm:$0xff]
      %v768 = vld [vmem:[#allocation2 + $0x70] sm:$0xff]
      %v769 = vld [vmem:[#allocation2 + $0x78] sm:$0xff]
      %v770 = vld [vmem:[%s3] sm:$0x1]
      %v772 = vlaneseq
      %v773 = vshrl.u32 %v772, 7
      %v774 = vsub.s32 0, %v773
      %v775 = vrot.slane %v770, %v774
      %v777 = vadd.f32 %v754, %v775
      %v778 = vadd.f32 %v755, %v775
      %v779 = vadd.f32 %v756, %v775
      %v780 = vadd.f32 %v757, %v775
      %v781 = vadd.f32 %v758, %v775
      %v782 = vadd.f32 %v759, %v775
      %v783 = vadd.f32 %v760, %v775
      %v784 = vadd.f32 %v761, %v775
      %v785 = vadd.f32 %v762, %v775
      %v786 = vadd.f32 %v763, %v775
      %v787 = vadd.f32 %v764, %v775
      %v788 = vadd.f32 %v765, %v775
      %v789 = vadd.f32 %v766, %v775
      %v790 = vadd.f32 %v767, %v775
      %v791 = vadd.f32 %v768, %v775
      %v792 = vadd.f32 %v769, %v775
      %v793 = vmul.f32 %v777, 0.1
      %v794 = vmul.f32 %v778, 0.1
      %v795 = vmul.f32 %v779, 0.1
      %v796 = vmul.f32 %v780, 0.1
      %v797 = vmul.f32 %v781, 0.1
      %v798 = vmul.f32 %v782, 0.1
      %v799 = vmul.f32 %v783, 0.1
      %v800 = vmul.f32 %v784, 0.1
      %v801 = vmul.f32 %v785, 0.1
      %v802 = vmul.f32 %v786, 0.1
      %v803 = vmul.f32 %v787, 0.1
      %v804 = vmul.f32 %v788, 0.1
      %v805 = vmul.f32 %v789, 0.1
      %v806 = vmul.f32 %v790, 0.1
      %v807 = vmul.f32 %v791, 0.1
      %v808 = vmul.f32 %v792, 0.1
      %v809 = vmax.f32 %v777, %v793
      %v810 = vmax.f32 %v778, %v794
      %v811 = vmax.f32 %v779, %v795
      %v812 = vmax.f32 %v780, %v796
      %v813 = vmax.f32 %v781, %v797
      %v814 = vmax.f32 %v782, %v798
      %v815 = vmax.f32 %v783, %v799
      %v816 = vmax.f32 %v784, %v800
      %v817 = vmax.f32 %v785, %v801
      %v818 = vmax.f32 %v786, %v802
      %v819 = vmax.f32 %v787, %v803
      %v820 = vmax.f32 %v788, %v804
      %v821 = vmax.f32 %v789, %v805
      %v822 = vmax.f32 %v790, %v806
      %v823 = vmax.f32 %v791, %v807
      %v824 = vmax.f32 %v792, %v808
      %v825 = vpack.c.bf16 %v810, %v809
      %v826 = vpack.c.bf16 %v812, %v811
      %v827 = vpack.c.bf16 %v814, %v813
      %v828 = vpack.c.bf16 %v816, %v815
      %v829 = vpack.c.bf16 %v818, %v817
      %v830 = vpack.c.bf16 %v820, %v819
      %v831 = vpack.c.bf16 %v822, %v821
      %v832 = vpack.c.bf16 %v824, %v823
      %v841 = vunpack.c.l.b16 %v825
      %v842 = vunpack.c.h.b16 %v825
      %v843 = vunpack.c.l.b16 %v826
      %v844 = vunpack.c.h.b16 %v826
      %v845 = vunpack.c.l.b16 %v827
      %v846 = vunpack.c.h.b16 %v827
      %v847 = vunpack.c.l.b16 %v828
      %v848 = vunpack.c.h.b16 %v828
      %v849 = vunpack.c.l.b16 %v829
      %v850 = vunpack.c.h.b16 %v829
      %v851 = vunpack.c.l.b16 %v830
      %v852 = vunpack.c.h.b16 %v830
      %v853 = vunpack.c.l.b16 %v831
      %v854 = vunpack.c.h.b16 %v831
      %v855 = vunpack.c.l.b16 %v832
      %v856 = vunpack.c.h.b16 %v832
      %v857 = vpack.c.b16 %v841, %v841
      %v858 = vpack.c.b16 %v842, %v842
      %v859 = vpack.c.b16 %v843, %v843
      %v860 = vpack.c.b16 %v844, %v844
      %v861 = vpack.c.b16 %v845, %v845
      %v862 = vpack.c.b16 %v846, %v846
      %v863 = vpack.c.b16 %v847, %v847
      %v864 = vpack.c.b16 %v848, %v848
      %v865 = vpack.c.b16 %v849, %v849
      %v866 = vpack.c.b16 %v850, %v850
      %v867 = vpack.c.b16 %v851, %v851
      %v868 = vpack.c.b16 %v852, %v852
      %v869 = vpack.c.b16 %v853, %v853
      %v870 = vpack.c.b16 %v854, %v854
      %v871 = vpack.c.b16 %v855, %v855
      %v872 = vpack.c.b16 %v856, %v856
      %889 = vst [vmem:[%s305] sm:$0xf] %v857
      %890 = vst [vmem:[%s305 + $0x4] sm:$0xf] %v858
      %891 = vst [vmem:[%s305 + $0x8] sm:$0xf] %v859
      %892 = vst [vmem:[%s305 + $0xc] sm:$0xf] %v860
      %893 = vst [vmem:[%s305 + $0x10] sm:$0xf] %v861
      %894 = vst [vmem:[%s305 + $0x14] sm:$0xf] %v862
      %895 = vst [vmem:[%s305 + $0x18] sm:$0xf] %v863
      %896 = vst [vmem:[%s305 + $0x1c] sm:$0xf] %v864
      %897 = vst [vmem:[%s305 + $0x20] sm:$0xf] %v865
      %898 = vst [vmem:[%s305 + $0x24] sm:$0xf] %v866
      %899 = vst [vmem:[%s305 + $0x28] sm:$0xf] %v867
      %900 = vst [vmem:[%s305 + $0x2c] sm:$0xf] %v868
      %901 = vst [vmem:[%s305 + $0x30] sm:$0xf] %v869
      %902 = vst [vmem:[%s305 + $0x34] sm:$0xf] %v870
      %903 = vst [vmem:[%s305 + $0x38] sm:$0xf] %v871
      %904 = vst [vmem:[%s305 + $0x3c] sm:$0xf] %v872
      %s905 = smul.u32 16, %s20
      %p906 = scmp.lt.s32.totalorder %s19, 1
      %s907 = scalar_select %p906, %s19, 1
      %p908 = scmp.lt.s32.totalorder %s905, 31
      %s909 = scalar_select %p908, %s905, 31
      %s910 = smul.addr %s907, 32
      %s911 = sadd.s32 %s909, %s910
      %s912 = smul.addr %s911, 4
      %s913 = scalar_lea.vmem %s4, %s912
      // Predicated region
      $region37: #{flownet_forward.4} parent=35 // pred_check
        %p914 = pneg %p149
      $region38: #{flownet_forward.4} parent=35 // pred_check_branch
        %916 = sbr.rel (%p914) target = $region40
      $region39: #{flownet_forward.4} parent=35 // pred_region
        %s917 = smul.u32 16, %s20
      $region40: #{flownet_forward.4} parent=35 // pred_fallthru
        _
    $region36: #{flownet_forward.4} parent=5 // pred_fallthru
      _
    %p918 = scmp.le.s32.totalorder 2, %s10
    // Predicated region
    $region41: #{flownet_forward.4} parent=5 // pred_check
      %p919 = pneg %p918
    $region42: #{flownet_forward.4} parent=5 // pred_check_branch
      %921 = sbr.rel (%p919) target = $region44
    $region43: #{flownet_forward.4} parent=5 // pred_region
      %s922 = ssub.s32 %s10, 2
      // Predicated region
      $region45: #{flownet_forward.4} parent=43 // pred_check
        %p923 = pneg %p155
      $region46: #{flownet_forward.4} parent=43 // pred_check_branch
        %925 = sbr.rel (%p923) target = $region48
      $region47: #{flownet_forward.4} parent=43 // pred_region
        %s926 = smul.u32 16, %s22
        %p927 = scmp.lt.s32.totalorder %s21, 1
        %s928 = scalar_select %p927, %s21, 1
        %p929 = scmp.lt.s32.totalorder %s926, 31
        %s930 = scalar_select %p929, %s926, 31
        %s931 = smul.addr %s928, 32
        %s932 = sadd.s32 %s930, %s931
        %s933 = smul.addr %s932, 4
        %s934 = scalar_lea.vmem %s4, %s933
      $region48: #{flownet_forward.4} parent=43 // pred_fallthru
        _
    $region44: #{flownet_forward.4} parent=5 // pred_fallthru
      _
  $region6: #{flownet_forward.4} parent=0 // loop_footer
    %s14 = sadd.s32 1, %s10
  $region7: #{flownet_forward.4} parent=0 // loop_footer_branch
    %9 = sbr.rel target = $region3
  $region8: #{flownet_forward.4} parent=0 // loop_exit
    _

// kernel: flownet_forward.5
$region0: #{flownet_forward.5}
  #allocation0 [shape = 'u32[]', space=smem, size = 0x4, offset = 0x4, fixed_abs, tag = 'smem constant byte address 0x4 - core index']
  #allocation1 [shape = 'u32[144,128]{1,0:T(1,128)}', space=vmem, size = 0x12000, scoped, tag = 'internal scratch']
  #allocation2 [shape = 'f32[64,128]{1,0:T(8,128)}', space=vmem, size = 0x8000, scoped, tag = 'scratch operand']
  %s0 = inlined_call_operand.vmem [shape: bf16[2,144,192], index: 0, kind: input, shape index: {}, may-alias: {0,1}]
  %s1 = inlined_call_operand.vmem [shape: bf16[2,144,192], index: 1, kind: input, shape index: {}, may-alias: {0,1}]
  %s2 = inlined_call_operand.vmem [shape: bf16[2,192,128], index: 2, kind: input, shape index: {}]
  %s3 = inlined_call_operand.vmem [shape: f32[1,128], index: 3, kind: input, shape index: {}]
  %s4 = inlined_call_operand.vmem [shape: f32[2,128,128], index: 4, kind: output, shape index: {}]
  %s5 = sld [smem:[#allocation0]]
  $region49: #{flownet_forward.5} parent=0
    _
  %s7 = ssub.s32 1, %s5
  %s8 = scalar_select 0, %s7, %s5
  loop: start=0, step=1, limit=6
  $region2: #{flownet_forward.5} parent=0 // loop_pre_header
    _
  $region3: #{flownet_forward.5} parent=0 // loop_header
    %s10 = sphi 0, %s14
    %p11 = scmp.ge.s32.totalorder %s10, 6
    %s17 = sphi 0, %s29
    %s18 = sphi 0, %s25
    %s19 = sphi 0, %s17
    %s20 = sphi 0, %s18
    %s21 = sphi 0, %s19
    %s22 = sphi 0, %s20
    %s34 = sphi 0, %s36
    %s37 = sphi 0, %s34
    %s38 = sphi 0, %s37
    %s54 = sphi 0, %s38
    %s66 = sphi 0, %s68
    %s69 = sphi 0, %s66
    %s70 = sphi 0, %s69
    %s86 = sphi 0, %s70
    %s90 = sphi 0, %s90
    %s92 = sphi 0, %s90
    %s93 = sphi 0, %s92
    %s107 = sphi 0, %s93
    %s111 = sphi 0, %s111
    %s113 = sphi 0, %s111
    %s114 = sphi 0, %s113
    %s128 = sphi 0, %s114
    %s136 = sphi 0, %s138
    %s139 = sphi 0, %s136
    %s140 = sphi 0, %s139
    %s156 = sphi 0, %s140
  $region4: #{flownet_forward.5} parent=0 // loop_header_branch
    %13 = sbr.rel (%p11) target = $region8
  $region5: #{flownet_forward.5} parent=0 // loop_body
    %s15 = ssub.s32 %s10, 1
    %s16 = ssub.s32 %s10, 2
    %s23 = sadd.s32 1, %s18
    %p24 = scmp.ge.s32.totalorder %s23, 2
    %s25 = scalar_select %p24, 0, %s23
    %s26 = sadd.s32 1, %s17
    %s27 = scalar_select %p24, %s26, %s17
    %p28 = scmp.ge.s32.totalorder %s27, 2
    %s29 = scalar_select %p28, 0, %s27
    %s30 = ssub.s32 %s17, %s29
    %s31 = ssub.s32 %s18, %s25
    %s32 = sor.u32 %s30, %s31
    %p33 = scmp.eq.s32.totalorder %s32, 0
    %s35 = sadd.s32 %s34, 1
    %s36 = scalar_select %p33, %s34, %s35
    %p39 = pneg %p33
    %p40 = scmp.eq.s32.totalorder %s10, 3
    %p41 = por %p39, %p40
    %p42 = scmp.ne.s32.totalorder %s34, %s37
    %p43 = scmp.eq.s32.totalorder %s10, 0
    %p44 = por %p42, %p43
    %p45 = scmp.ne.s32.totalorder %s34, %s37
    %p46 = scmp.eq.s32.totalorder %s15, 3
    %p47 = por %p45, %p46
    %p48 = scmp.ne.s32.totalorder %s37, %s38
    %p49 = scmp.eq.s32.totalorder %s15, 0
    %p50 = por %p48, %p49
    %p51 = scmp.ne.s32.totalorder %s37, %s38
    %p52 = scmp.eq.s32.totalorder %s16, 3
    %p53 = por %p51, %p52
    %p55 = scmp.ne.s32.totalorder %s38, %s54
    %p56 = scmp.eq.s32.totalorder %s16, 0
    %p57 = por %p55, %p56
    %s58 = sadd.s32 %s18, 1
    %s59 = smul.u32 %s58, 4
    %s60 = sadd.s32 %s25, 1
    %s61 = smul.u32 %s60, 4
    %s62 = ssub.s32 %s17, %s29
    %s63 = ssub.s32 %s59, %s61
    %s64 = sor.u32 %s62, %s63
    %p65 = scmp.eq.s32.totalorder %s64, 0
    %s67 = sadd.s32 %s66, 1
    %s68 = scalar_select %p65, %s66, %s67
    %p71 = pneg %p65
    %p72 = scmp.eq.s32.totalorder %s10, 3
    %p73 = por %p71, %p72
    %p74 = scmp.ne.s32.totalorder %s66, %s69
    %p75 = scmp.eq.s32.totalorder %s10, 0
    %p76 = por %p74, %p75
    %p77 = scmp.ne.s32.totalorder %s66, %s69
    %p78 = scmp.eq.s32.totalorder %s15, 3
    %p79 = por %p77, %p78
    %p80 = scmp.ne.s32.totalorder %s69, %s70
    %p81 = scmp.eq.s32.totalorder %s15, 0
    %p82 = por %p80, %p81
    %p83 = scmp.ne.s32.totalorder %s69, %s70
    %p84 = scmp.eq.s32.totalorder %s16, 3
    %p85 = por %p83, %p84
    %p87 = scmp.ne.s32.totalorder %s70, %s86
    %p88 = scmp.eq.s32.totalorder %s16, 0
    %p89 = por %p87, %p88
    %s91 = sadd.s32 %s90, 1
    %p94 = scmp.eq.s32.totalorder %s10, 3
    %p95 = scmp.ne.s32.totalorder %s90, %s92
    %p96 = scmp.eq.s32.totalorder %s10, 0
    %p97 = por %p95, %p96
    %p98 = scmp.ne.s32.totalorder %s90, %s92
    %p99 = scmp.eq.s32.totalorder %s15, 3
    %p100 = por %p98, %p99
    %p101 = scmp.ne.s32.totalorder %s92, %s93
    %p102 = scmp.eq.s32.totalorder %s15, 0
    %p103 = por %p101, %p102
    %p104 = scmp.ne.s32.totalorder %s92, %s93
    %p105 = scmp.eq.s32.totalorder %s16, 3
    %p106 = por %p104, %p105
    %p108 = scmp.ne.s32.totalorder %s93, %s107
    %p109 = scmp.eq.s32.totalorder %s16, 0
    %p110 = por %p108, %p109
    %s112 = sadd.s32 %s111, 1
    %p115 = scmp.eq.s32.totalorder %s10, 3
    %p116 = scmp.ne.s32.totalorder %s111, %s113
    %p117 = scmp.eq.s32.totalorder %s10, 0
    %p118 = por %p116, %p117
    %p119 = scmp.ne.s32.totalorder %s111, %s113
    %p120 = scmp.eq.s32.totalorder %s15, 3
    %p121 = por %p119, %p120
    %p122 = scmp.ne.s32.totalorder %s113, %s114
    %p123 = scmp.eq.s32.totalorder %s15, 0
    %p124 = por %p122, %p123
    %p125 = scmp.ne.s32.totalorder %s113, %s114
    %p126 = scmp.eq.s32.totalorder %s16, 3
    %p127 = por %p125, %p126
    %p129 = scmp.ne.s32.totalorder %s114, %s128
    %p130 = scmp.eq.s32.totalorder %s16, 0
    %p131 = por %p129, %p130
    %s132 = ssub.s32 %s17, %s29
    %s133 = ssub.s32 %s18, %s25
    %s134 = sor.u32 %s132, %s133
    %p135 = scmp.eq.s32.totalorder %s134, 0
    %s137 = sadd.s32 %s136, 1
    %s138 = scalar_select %p135, %s136, %s137
    %p141 = pneg %p135
    %p142 = scmp.eq.s32.totalorder %s10, 3
    %p143 = por %p141, %p142
    %p144 = scmp.ne.s32.totalorder %s136, %s139
    %p145 = scmp.eq.s32.totalorder %s10, 0
    %p146 = por %p144, %p145
    %p147 = scmp.ne.s32.totalorder %s136, %s139
    %p148 = scmp.eq.s32.totalorder %s15, 3
    %p149 = por %p147, %p148
    %p150 = scmp.ne.s32.totalorder %s139, %s140
    %p151 = scmp.eq.s32.totalorder %s15, 0
    %p152 = por %p150, %p151
    %p153 = scmp.ne.s32.totalorder %s139, %s140
    %p154 = scmp.eq.s32.totalorder %s16, 3
    %p155 = por %p153, %p154
    %p157 = scmp.ne.s32.totalorder %s140, %s156
    %p158 = scmp.eq.s32.totalorder %s16, 0
    %p159 = por %p157, %p158
    %p160 = scmp.le.s32.totalorder 1, %s10
    %p161 = scmp.lt.s32.totalorder %s10, 5
    %p162 = pnand %p160, %p161
    %p163 = pneg %p162
    // Predicated region
    $region9: #{flownet_forward.5} parent=5 // pred_check
      _
    $region10: #{flownet_forward.5} parent=5 // pred_check_branch
      %165 = sbr.rel (%p162) target = $region12
    $region11: #{flownet_forward.5} parent=5 // pred_region
      %s166 = ssub.s32 %s10, 1
      // Predicated region
      $region13: #{flownet_forward.5} parent=11 // pred_check
        %p167 = pneg %p103
      $region14: #{flownet_forward.5} parent=11 // pred_check_branch
        %169 = sbr.rel (%p167) target = $region16
      $region15: #{flownet_forward.5} parent=11 // pred_region
        _
      $region16: #{flownet_forward.5} parent=11 // pred_fallthru
        _
      // Predicated region
      $region17: #{flownet_forward.5} parent=11 // pred_check
        %p170 = pneg %p124
      $region18: #{flownet_forward.5} parent=11 // pred_check_branch
        %172 = sbr.rel (%p170) target = $region20
      $region19: #{flownet_forward.5} parent=11 // pred_region
        _
      $region20: #{flownet_forward.5} parent=11 // pred_fallthru
        _
    $region12: #{flownet_forward.5} parent=5 // pred_fallthru
      _
    %p173 = scmp.lt.s32.totalorder %s10, 4
    // Predicated region
    $region21: #{flownet_forward.5} parent=5 // pred_check
      %p174 = pneg %p173
    $region22: #{flownet_forward.5} parent=5 // pred_check_branch
      %176 = sbr.rel (%p174) target = $region24
    $region23: #{flownet_forward.5} parent=5 // pred_region
      // Predicated region
      $region25: #{flownet_forward.5} parent=23 // pred_check
        %p177 = pneg %p44
      $region26: #{flownet_forward.5} parent=23 // pred_check_branch
        %179 = sbr.rel (%p177) target = $region28
      $region27: #{flownet_forward.5} parent=23 // pred_region
        %s180 = smul.u32 8, %s18
        %s181 = ssub.s32 18, %s180
        %p182 = scmp.lt.s32.totalorder %s181, 8
        %s183 = scalar_select %p182, %s181, 8
        %s184 = smul.u32 64, %s183
        %s185 = smul.u32 %s184, 2
        %p186 = scmp.lt.s32.totalorder %s17, 1
        %s187 = scalar_select %p186, %s17, 1
        %p188 = scmp.lt.s32.totalorder %s180, 17
        %s189 = scalar_select %p188, %s180, 17
        %s190 = smul.addr %s189, 2
        %s191 = smul.addr %s187, 36
        %s192 = sadd.s32 %s190, %s191
        %s193 = smul.addr %s192, 4
        %s194 = scalar_lea.vmem %s0, %s193
        %s195 = smul.u32 8, %s18
        %s196 = ssub.s32 18, %s195
        %p197 = scmp.lt.s32.totalorder %s196, 8
        %s198 = scalar_select %p197, %s196, 8
        %s199 = smul.u32 64, %s198
        %s200 = smul.u32 %s199, 2
      $region28: #{flownet_forward.5} parent=23 // pred_fallthru
        _
      // Predicated region
      $region29: #{flownet_forward.5} parent=23 // pred_check
        %p201 = pneg %p76
      $region30: #{flownet_forward.5} parent=23 // pred_check_branch
        %203 = sbr.rel (%p201) target = $region32
      $region31: #{flownet_forward.5} parent=23 // pred_region
        %s204 = sadd.s32 %s18, 1
        %s205 = smul.u32 %s204, 4
        %s206 = smul.u32 2, %s205
        %p207 = scmp.lt.s32.totalorder %s17, 1
        %s208 = scalar_select %p207, %s17, 1
        %p209 = scmp.lt.s32.totalorder %s206, 17
        %s210 = scalar_select %p209, %s206, 17
        %s211 = smul.addr %s210, 2
        %s212 = smul.addr %s208, 36
        %s213 = sadd.s32 %s211, %s212
        %s214 = smul.addr %s213, 4
        %s215 = scalar_lea.vmem %s1, %s214
        %s216 = sadd.s32 %s18, 1
        %s217 = smul.u32 %s216, 4
        %s218 = smul.u32 2, %s217
      $region32: #{flownet_forward.5} parent=23 // pred_fallthru
        _
    $region24: #{flownet_forward.5} parent=5 // pred_fallthru
      _
    %p219 = scmp.le.s32.totalorder 1, %s10
    %p220 = scmp.lt.s32.totalorder %s10, 5
    %p221 = pnand %p219, %p220
    %p222 = pneg %p221
    // Predicated region
    $region33: #{flownet_forward.5} parent=5 // pred_check
      _
    $region34: #{flownet_forward.5} parent=5 // pred_check_branch
      %224 = sbr.rel (%p221) target = $region36
    $region35: #{flownet_forward.5} parent=5 // pred_region
      %s225 = ssub.s32 %s10, 1
      %s226 = smul.u32 8, %s20
      %s227 = ssub.s32 18, %s226
      %p228 = scmp.lt.s32.totalorder %s227, 8
      %s229 = scalar_select %p228, %s227, 8
      %s230 = smul.u32 64, %s229
      %s231 = smul.u32 %s230, 2
      %p232 = scmp.lt.s32.totalorder %s19, 1
      %s233 = scalar_select %p232, %s19, 1
      %p234 = scmp.lt.s32.totalorder %s226, 17
      %s235 = scalar_select %p234, %s226, 17
      %s236 = smul.addr %s235, 2
      %s237 = smul.addr %s233, 36
      %s238 = sadd.s32 %s236, %s237
      %s239 = smul.addr %s238, 4
      %s240 = scalar_lea.vmem %s0, %s239
      %p241 = pneg %p50
      %p242 = pneg %p47
      %s243 = sadd.s32 %s20, 1
      %s244 = smul.u32 %s243, 4
      %s245 = smul.u32 2, %s244
      %p246 = scmp.lt.s32.totalorder %s19, 1
      %s247 = scalar_select %p246, %s19, 1
      %p248 = scmp.lt.s32.totalorder %s245, 17
      %s249 = scalar_select %p248, %s245, 17
      %s250 = smul.addr %s249, 2
      %s251 = smul.addr %s247, 36
      %s252 = sadd.s32 %s250, %s251
      %s253 = smul.addr %s252, 4
      %s254 = scalar_lea.vmem %s1, %s253
      %p255 = pneg %p82
      %p256 = pneg %p79
      %p257 = pneg %p103
      %p258 = pneg %p100
      %p259 = pneg %p124
      %p260 = pneg %p121
      %p261 = pneg %p152
      %p262 = pneg %p149
      %s263 = smul.u32 8, %s20
      %p264 = scmp.lt.s32.totalorder %s19, 1
      %s265 = scalar_select %p264, %s19, 1
      %p266 = scmp.lt.s32.totalorder %s263, 15
      %s267 = scalar_select %p266, %s263, 15
      %s268 = smul.addr %s265, 16
      %s269 = sadd.s32 %s267, %s268
      %s270 = smul.addr %s269, 8
      %s271 = scalar_lea.vmem %s4, %s270
      %s272 = smul.u32 8, %s20
      %s273 = ssub.s32 18, %s272
      %p274 = scmp.lt.s32.totalorder %s273, 8
      %s275 = scalar_select %p274, %s273, 8
      %s276 = smul.u32 64, %s275
      %s277 = smul.u32 %s276, 2
      %p278 = scmp.lt.s32.totalorder %s19, 1
      %s279 = scalar_select %p278, %s19, 1
      %p280 = scmp.lt.s32.totalorder %s272, 17
      %s281 = scalar_select %p280, %s272, 17
      %s282 = smul.addr %s281, 2
      %s283 = smul.addr %s279, 36
      %s284 = sadd.s32 %s282, %s283
      %s285 = smul.addr %s284, 4
      %s286 = scalar_lea.vmem %s0, %s285
      %s287 = smul.u32 8, %s20
      %s288 = ssub.s32 18, %s287
      %p289 = scmp.lt.s32.totalorder %s288, 8
      %s290 = scalar_select %p289, %s288, 8
      %s291 = smul.u32 64, %s290
      %s292 = smul.u32 %s291, 2
      %s293 = sadd.s32 %s20, 1
      %s294 = smul.u32 %s293, 4
      %s295 = smul.u32 2, %s294
      %p296 = scmp.lt.s32.totalorder %s19, 1
      %s297 = scalar_select %p296, %s19, 1
      %p298 = scmp.lt.s32.totalorder %s295, 17
      %s299 = scalar_select %p298, %s295, 17
      %s300 = smul.addr %s299, 2
      %s301 = smul.addr %s297, 36
      %s302 = sadd.s32 %s300, %s301
      %s303 = smul.addr %s302, 4
      %s304 = scalar_lea.vmem %s1, %s303
      %s305 = sadd.s32 %s20, 1
      %s306 = smul.u32 %s305, 4
      %s307 = smul.u32 2, %s306
      %s308 = smul.u32 8, %s20
      %p309 = scmp.lt.s32.totalorder %s19, 1
      %s310 = scalar_select %p309, %s19, 1
      %p311 = scmp.lt.s32.totalorder %s308, 15
      %s312 = scalar_select %p311, %s308, 15
      %s313 = smul.addr %s310, 16
      %s314 = sadd.s32 %s312, %s313
      %s315 = smul.addr %s314, 8
      %s316 = scalar_lea.vmem %s4, %s315
      %s317 = smul.u32 8, %s20
      %v319 = vld [vmem:[%s286] sm:$0xff]
      %v320 = vld [vmem:[%s286 + $0x8] sm:$0xff]
      %v321 = vld [vmem:[%s286 + $0x10] sm:$0xff]
      %v322 = vld [vmem:[%s286 + $0x18] sm:$0xff]
      %v323 = vld [vmem:[%s286 + $0x20] sm:$0xff]
      %v324 = vld [vmem:[%s286 + $0x28] sm:$0xff]
      %v325 = vld [vmem:[%s286 + $0x30] sm:$0xff]
      %v326 = vld [vmem:[%s286 + $0x38] sm:$0xff]
      %v327 = vld [vmem:[%s2] sm:$0xf]
      %v328 = vld [vmem:[%s2 + $0x4] sm:$0xf]
      %v329 = vld [vmem:[%s2 + $0x8] sm:$0xf]
      %v330 = vld [vmem:[%s2 + $0xc] sm:$0xf]
      %v331 = vld [vmem:[%s2 + $0x10] sm:$0xf]
      %v332 = vld [vmem:[%s2 + $0x14] sm:$0xf]
      %v333 = vld [vmem:[%s2 + $0x18] sm:$0xf]
      %v334 = vld [vmem:[%s2 + $0x1c] sm:$0xf]
      %v335 = vld [vmem:[%s2 + $0x20] sm:$0xf]
      %v336 = vld [vmem:[%s2 + $0x24] sm:$0xf]
      %v337 = vld [vmem:[%s2 + $0x28] sm:$0xf]
      %v338 = vld [vmem:[%s2 + $0x2c] sm:$0xf]
      %v339 = vld [vmem:[%s2 + $0x30] sm:$0xf]
      %v340 = vld [vmem:[%s2 + $0x34] sm:$0xf]
      %v341 = vld [vmem:[%s2 + $0x38] sm:$0xf]
      %v342 = vld [vmem:[%s2 + $0x3c] sm:$0xf]
      %v343 = vld [vmem:[%s2 + $0x40] sm:$0xf]
      %v344 = vld [vmem:[%s2 + $0x44] sm:$0xf]
      %v345 = vld [vmem:[%s2 + $0x48] sm:$0xf]
      %v346 = vld [vmem:[%s2 + $0x4c] sm:$0xf]
      %v347 = vld [vmem:[%s2 + $0x50] sm:$0xf]
      %v348 = vld [vmem:[%s2 + $0x54] sm:$0xf]
      %v349 = vld [vmem:[%s2 + $0x58] sm:$0xf]
      %v350 = vld [vmem:[%s2 + $0x5c] sm:$0xf]
      %v359 = vunpack.c.l.b16 %v319
      %v360 = vunpack.c.h.b16 %v319
      %v361 = vunpack.c.l.b16 %v320
      %v362 = vunpack.c.h.b16 %v320
      %v363 = vunpack.c.l.b16 %v321
      %v364 = vunpack.c.h.b16 %v321
      %v365 = vunpack.c.l.b16 %v322
      %v366 = vunpack.c.h.b16 %v322
      %v367 = vunpack.c.l.b16 %v323
      %v368 = vunpack.c.h.b16 %v323
      %v369 = vunpack.c.l.b16 %v324
      %v370 = vunpack.c.h.b16 %v324
      %v371 = vunpack.c.l.b16 %v325
      %v372 = vunpack.c.h.b16 %v325
      %v373 = vunpack.c.l.b16 %v326
      %v374 = vunpack.c.h.b16 %v326
      %v375 = vpack.c.b16 %v361, %v359
      %v376 = vpack.c.b16 %v362, %v360
      %v377 = vpack.c.b16 %v365, %v363
      %v378 = vpack.c.b16 %v366, %v364
      %v379 = vpack.c.b16 %v369, %v367
      %v380 = vpack.c.b16 %v370, %v368
      %v381 = vpack.c.b16 %v373, %v371
      %v382 = vpack.c.b16 %v374, %v372
      %v411 = vunpack.c.l.b16 %v327
      %v412 = vunpack.c.l.b16 %v328
      %v413 = vunpack.c.l.b16 %v329
      %v414 = vunpack.c.l.b16 %v330
      %v415 = vunpack.c.l.b16 %v331
      %v416 = vunpack.c.l.b16 %v332
      %v417 = vunpack.c.l.b16 %v333
      %v418 = vunpack.c.l.b16 %v334
      %v419 = vunpack.c.l.b16 %v335
      %v420 = vunpack.c.l.b16 %v336
      %v421 = vunpack.c.l.b16 %v337
      %v422 = vunpack.c.l.b16 %v338
      %v423 = vunpack.c.l.b16 %v339
      %v424 = vunpack.c.l.b16 %v340
      %v425 = vunpack.c.l.b16 %v341
      %v426 = vunpack.c.l.b16 %v342
      %v427 = vunpack.c.l.b16 %v343
      %v428 = vunpack.c.l.b16 %v344
      %v429 = vunpack.c.l.b16 %v345
      %v430 = vunpack.c.l.b16 %v346
      %v431 = vunpack.c.l.b16 %v347
      %v432 = vunpack.c.l.b16 %v348
      %v433 = vunpack.c.l.b16 %v349
      %v434 = vunpack.c.l.b16 %v350
      %v435 = vpack.c.b16 %v412, %v411
      %v436 = vpack.c.b16 %v414, %v413
      %v437 = vpack.c.b16 %v416, %v415
      %v438 = vpack.c.b16 %v418, %v417
      %v439 = vpack.c.b16 %v420, %v419
      %v440 = vpack.c.b16 %v422, %v421
      %v441 = vpack.c.b16 %v424, %v423
      %v442 = vpack.c.b16 %v426, %v425
      %v443 = vpack.c.b16 %v428, %v427
      %v444 = vpack.c.b16 %v430, %v429
      %v445 = vpack.c.b16 %v432, %v431
      %v446 = vpack.c.b16 %v434, %v433
      %vm459 = vcmask 523264
      %v461 = vsel %vm459, %v376, 0
      %v464 = vsel %vm459, %v378, 0
      %v467 = vsel %vm459, %v380, 0
      %v470 = vsel %vm459, %v382, 0
      %472 = vmatprep.subr.bf16.mxu0 0
      %473 = vmatpush1.bf16.msra.mxu0 %v435
      %474 = vmatprep.subr.bf16.mxu0 0
      %475 = vmatpush1.bf16.msra.mxu0 %v436
      %476 = vmatprep.subr.bf16.mxu0 0
      %477 = vmatpush1.bf16.msra.mxu0 %v437
      %478 = vmatprep.subr.bf16.mxu0 0
      %479 = vmatpush1.bf16.msra.mxu0 %v438
      %480 = vmatprep.subr.bf16.mxu0 0
      %481 = vmatpush1.bf16.msra.mxu0 %v439
      %482 = vmatprep.subr.bf16.mxu0 0
      %483 = vmatpush1.bf16.msra.mxu0 %v440
      %484 = vmatprep.subr.bf16.mxu0 0
      %485 = vmatpush1.bf16.msra.mxu0 %v441
      %486 = vmatprep.subr.bf16.mxu0 0
      %487 = vmatpush1.bf16.msra.mxu0 %v442
      %488 = vmatprep.subr.bf16.mxu0 0
      %489 = vmatpush1.bf16.msra.mxu0 %v443
      %490 = vmatprep.subr.bf16.mxu0 0
      %491 = vmatpush1.bf16.msra.mxu0 %v444
      %492 = vmatprep.subr.bf16.mxu0 0
      %493 = vmatpush1.bf16.msra.mxu0 %v445
      %494 = vmatprep.subr.bf16.mxu0 0
      %495 = vmatpush1.bf16.msra.mxu0 %v446
      %496 = vmatprep.subr.bf16.mxu0 0
      %497 = vmatpush1.bf16.msra.mxu0 0
      %498 = vmatprep.subr.bf16.mxu0 0
      %499 = vmatpush1.bf16.msra.mxu0 0
      %500 = vmatprep.subr.bf16.mxu0 0
      %501 = vmatpush1.bf16.msra.mxu0 0
      %502 = vmatprep.subr.bf16.mxu0 0
      %503 = vmatpush1.bf16.msra.mxu0 0
      %504 = vmatprep.mubr.bf16.mxu0 %v461
      %505 = vmatmul.mubr.bf16.gmra.mrb[0].mxu0 %v375
      %v506 = vpop.f32.mrb[0].mxu0
      %v507 = vadd.f32 0.0, %v506
      %v508 = vpop.f32.mrb[0].mxu0
      %v509 = vpop.f32.mrb[0].mxu0
      %v510 = vadd.f32 0.0, %v509
      %v511 = vpop.f32.mrb[0].mxu0
      %512 = vmatprep.mubr.bf16.mxu0 %v464
      %513 = vmatmul.mubr.bf16.gmra.mrb[0].mxu0 %v377
      %v514 = vpop.f32.mrb[0].mxu0
      %v515 = vadd.f32 0.0, %v514
      %v516 = vpop.f32.mrb[0].mxu0
      %v517 = vpop.f32.mrb[0].mxu0
      %v518 = vadd.f32 0.0, %v517
      %v519 = vpop.f32.mrb[0].mxu0
      %520 = vmatprep.mubr.bf16.mxu0 %v467
      %521 = vmatmul.mubr.bf16.gmra.mrb[0].mxu0 %v379
      %v522 = vpop.f32.mrb[0].mxu0
      %v523 = vadd.f32 0.0, %v522
      %v524 = vpop.f32.mrb[0].mxu0
      %v525 = vpop.f32.mrb[0].mxu0
      %v526 = vadd.f32 0.0, %v525
      %v527 = vpop.f32.mrb[0].mxu0
      %528 = vmatprep.mubr.bf16.mxu0 %v470
      %529 = vmatmul.mubr.bf16.gmra.mrb[0].mxu0 %v381
      %v530 = vpop.f32.mrb[0].mxu0
      %v531 = vadd.f32 0.0, %v530
      %v532 = vpop.f32.mrb[0].mxu0
      %v533 = vpop.f32.mrb[0].mxu0
      %v534 = vadd.f32 0.0, %v533
      %v535 = vpop.f32.mrb[0].mxu0
      %536 = vdwg.mxu0
      %537 = vst [vmem:[#allocation2] sm:$0xff] %v507
      %538 = vst [vmem:[#allocation2 + $0x8] sm:$0xff] %v510
      %539 = vst [vmem:[#allocation2 + $0x10] sm:$0xff] %v515
      %540 = vst [vmem:[#allocation2 + $0x18] sm:$0xff] %v518
      %541 = vst [vmem:[#allocation2 + $0x20] sm:$0xff] %v523
      %542 = vst [vmem:[#allocation2 + $0x28] sm:$0xff] %v526
      %543 = vst [vmem:[#allocation2 + $0x30] sm:$0xff] %v531
      %544 = vst [vmem:[#allocation2 + $0x38] sm:$0xff] %v534
      %v545 = vld [vmem:[%s304] sm:$0xff]
      %v546 = vld [vmem:[%s304 + $0x8] sm:$0xff]
      %v549 = vunpack.c.l.b16 %v545
      %v550 = vunpack.c.h.b16 %v545
      %v551 = vunpack.c.l.b16 %v546
      %v552 = vunpack.c.h.b16 %v546
      %v553 = vpack.c.b16 %v551, %v549
      %v554 = vpack.c.b16 %v552, %v550
      %v556 = vld [vmem:[#allocation2] sm:$0xff]
      %v557 = vld [vmem:[#allocation2 + $0x8] sm:$0xff]
      %v558 = vld [vmem:[#allocation2 + $0x10] sm:$0xff]
      %v559 = vld [vmem:[#allocation2 + $0x18] sm:$0xff]
      %v560 = vld [vmem:[#allocation2 + $0x20] sm:$0xff]
      %v561 = vld [vmem:[#allocation2 + $0x28] sm:$0xff]
      %v562 = vld [vmem:[#allocation2 + $0x30] sm:$0xff]
      %v563 = vld [vmem:[#allocation2 + $0x38] sm:$0xff]
      %s564 = scalar_lea.vmem %s2, 96
      %v565 = vld [vmem:[%s564] sm:$0xf]
      %v566 = vld [vmem:[%s564 + $0x4] sm:$0xf]
      %v567 = vld [vmem:[%s564 + $0x8] sm:$0xf]
      %v568 = vld [vmem:[%s564 + $0xc] sm:$0xf]
      %v569 = vld [vmem:[%s564 + $0x10] sm:$0xf]
      %v570 = vld [vmem:[%s564 + $0x14] sm:$0xf]
      %v571 = vld [vmem:[%s564 + $0x18] sm:$0xf]
      %v572 = vld [vmem:[%s564 + $0x1c] sm:$0xf]
      %v573 = vld [vmem:[%s564 + $0x20] sm:$0xf]
      %v574 = vld [vmem:[%s564 + $0x24] sm:$0xf]
      %v575 = vld [vmem:[%s564 + $0x28] sm:$0xf]
      %v576 = vld [vmem:[%s564 + $0x2c] sm:$0xf]
      %v577 = vld [vmem:[%s564 + $0x30] sm:$0xf]
      %v578 = vld [vmem:[%s564 + $0x34] sm:$0xf]
      %v579 = vld [vmem:[%s564 + $0x38] sm:$0xf]
      %v580 = vld [vmem:[%s564 + $0x3c] sm:$0xf]
      %v581 = vld [vmem:[%s564 + $0x40] sm:$0xf]
      %v582 = vld [vmem:[%s564 + $0x44] sm:$0xf]
      %v583 = vld [vmem:[%s564 + $0x48] sm:$0xf]
      %v584 = vld [vmem:[%s564 + $0x4c] sm:$0xf]
      %v585 = vld [vmem:[%s564 + $0x50] sm:$0xf]
      %v586 = vld [vmem:[%s564 + $0x54] sm:$0xf]
      %v587 = vld [vmem:[%s564 + $0x58] sm:$0xf]
      %v588 = vld [vmem:[%s564 + $0x5c] sm:$0xf]
      %v613 = vunpack.c.l.b16 %v565
      %v614 = vunpack.c.l.b16 %v566
      %v615 = vunpack.c.l.b16 %v567
      %v616 = vunpack.c.l.b16 %v568
      %v617 = vunpack.c.l.b16 %v569
      %v618 = vunpack.c.l.b16 %v570
      %v619 = vunpack.c.l.b16 %v571
      %v620 = vunpack.c.l.b16 %v572
      %v621 = vunpack.c.l.b16 %v573
      %v622 = vunpack.c.l.b16 %v574
      %v623 = vunpack.c.l.b16 %v575
      %v624 = vunpack.c.l.b16 %v576
      %v625 = vunpack.c.l.b16 %v577
      %v626 = vunpack.c.l.b16 %v578
      %v627 = vunpack.c.l.b16 %v579
      %v628 = vunpack.c.l.b16 %v580
      %v629 = vunpack.c.l.b16 %v581
      %v630 = vunpack.c.l.b16 %v582
      %v631 = vunpack.c.l.b16 %v583
      %v632 = vunpack.c.l.b16 %v584
      %v633 = vunpack.c.l.b16 %v585
      %v634 = vunpack.c.l.b16 %v586
      %v635 = vunpack.c.l.b16 %v587
      %v636 = vunpack.c.l.b16 %v588
      %v637 = vpack.c.b16 %v614, %v613
      %v638 = vpack.c.b16 %v616, %v615
      %v639 = vpack.c.b16 %v618, %v617
      %v640 = vpack.c.b16 %v620, %v619
      %v641 = vpack.c.b16 %v622, %v621
      %v642 = vpack.c.b16 %v624, %v623
      %v643 = vpack.c.b16 %v626, %v625
      %v644 = vpack.c.b16 %v628, %v627
      %v645 = vpack.c.b16 %v630, %v629
      %v646 = vpack.c.b16 %v632, %v631
      %v647 = vpack.c.b16 %v634, %v633
      %v648 = vpack.c.b16 %v636, %v635
      %v662 = vsel %vm459, %v554, 0
      %664 = vmatprep.subr.bf16.mxu0 0
      %665 = vmatpush1.bf16.msra.mxu0 %v637
      %666 = vmatprep.subr.bf16.mxu0 0
      %667 = vmatpush1.bf16.msra.mxu0 %v638
      %668 = vmatprep.subr.bf16.mxu0 0
      %669 = vmatpush1.bf16.msra.mxu0 %v639
      %670 = vmatprep.subr.bf16.mxu0 0
      %671 = vmatpush1.bf16.msra.mxu0 %v640
      %672 = vmatprep.subr.bf16.mxu0 0
      %673 = vmatpush1.bf16.msra.mxu0 %v641
      %674 = vmatprep.subr.bf16.mxu0 0
      %675 = vmatpush1.bf16.msra.mxu0 %v642
      %676 = vmatprep.subr.bf16.mxu0 0
      %677 = vmatpush1.bf16.msra.mxu0 %v643
      %678 = vmatprep.subr.bf16.mxu0 0
      %679 = vmatpush1.bf16.msra.mxu0 %v644
      %680 = vmatprep.subr.bf16.mxu0 0
      %681 = vmatpush1.bf16.msra.mxu0 %v645
      %682 = vmatprep.subr.bf16.mxu0 0
      %683 = vmatpush1.bf16.msra.mxu0 %v646
      %684 = vmatprep.subr.bf16.mxu0 0
      %685 = vmatpush1.bf16.msra.mxu0 %v647
      %686 = vmatprep.subr.bf16.mxu0 0
      %687 = vmatpush1.bf16.msra.mxu0 %v648
      %688 = vmatprep.subr.bf16.mxu0 0
      %689 = vmatpush1.bf16.msra.mxu0 0
      %690 = vmatprep.subr.bf16.mxu0 0
      %691 = vmatpush1.bf16.msra.mxu0 0
      %692 = vmatprep.subr.bf16.mxu0 0
      %693 = vmatpush1.bf16.msra.mxu0 0
      %694 = vmatprep.subr.bf16.mxu0 0
      %695 = vmatpush1.bf16.msra.mxu0 0
      %696 = vmatprep.mubr.bf16.mxu0 %v464
      %697 = vmatmul.mubr.bf16.gmra.mrb[0].mxu0 %v377
      %v698 = vpop.f32.mrb[0].mxu0
      %v699 = vadd.f32 0.0, %v698
      %v700 = vpop.f32.mrb[0].mxu0
      %v701 = vpop.f32.mrb[0].mxu0
      %v702 = vadd.f32 0.0, %v701
      %v703 = vpop.f32.mrb[0].mxu0
      %704 = vmatprep.mubr.bf16.mxu0 %v467
      %705 = vmatmul.mubr.bf16.gmra.mrb[0].mxu0 %v379
      %v706 = vpop.f32.mrb[0].mxu0
      %v707 = vadd.f32 0.0, %v706
      %v708 = vpop.f32.mrb[0].mxu0
      %v709 = vpop.f32.mrb[0].mxu0
      %v710 = vadd.f32 0.0, %v709
      %v711 = vpop.f32.mrb[0].mxu0
      %712 = vmatprep.mubr.bf16.mxu0 %v470
      %713 = vmatmul.mubr.bf16.gmra.mrb[0].mxu0 %v381
      %v714 = vpop.f32.mrb[0].mxu0
      %v715 = vadd.f32 0.0, %v714
      %v716 = vpop.f32.mrb[0].mxu0
      %v717 = vpop.f32.mrb[0].mxu0
      %v718 = vadd.f32 0.0, %v717
      %v719 = vpop.f32.mrb[0].mxu0
      %720 = vmatprep.mubr.bf16.mxu0 %v662
      %721 = vmatmul.mubr.bf16.gmra.mrb[0].mxu0 %v553
      %v722 = vpop.f32.mrb[0].mxu0
      %v723 = vadd.f32 0.0, %v722
      %v724 = vpop.f32.mrb[0].mxu0
      %v725 = vpop.f32.mrb[0].mxu0
      %v726 = vadd.f32 0.0, %v725
      %v727 = vpop.f32.mrb[0].mxu0
      %728 = vdwg.mxu0
      %v729 = vadd.f32 %v556, %v699
      %v730 = vadd.f32 %v557, %v702
      %v731 = vadd.f32 %v558, %v707
      %v732 = vadd.f32 %v559, %v710
      %v733 = vadd.f32 %v560, %v715
      %v734 = vadd.f32 %v561, %v718
      %v735 = vadd.f32 %v562, %v723
      %v736 = vadd.f32 %v563, %v726
      %737 = vst [vmem:[#allocation2] sm:$0xff] %v729
      %738 = vst [vmem:[#allocation2 + $0x8] sm:$0xff] %v730
      %739 = vst [vmem:[#allocation2 + $0x10] sm:$0xff] %v731
      %740 = vst [vmem:[#allocation2 + $0x18] sm:$0xff] %v732
      %741 = vst [vmem:[#allocation2 + $0x20] sm:$0xff] %v733
      %742 = vst [vmem:[#allocation2 + $0x28] sm:$0xff] %v734
      %743 = vst [vmem:[#allocation2 + $0x30] sm:$0xff] %v735
      %744 = vst [vmem:[#allocation2 + $0x38] sm:$0xff] %v736
      %v745 = vld [vmem:[#allocation2] sm:$0xff]
      %v746 = vld [vmem:[#allocation2 + $0x8] sm:$0xff]
      %v747 = vld [vmem:[#allocation2 + $0x10] sm:$0xff]
      %v748 = vld [vmem:[#allocation2 + $0x18] sm:$0xff]
      %v749 = vld [vmem:[#allocation2 + $0x20] sm:$0xff]
      %v750 = vld [vmem:[#allocation2 + $0x28] sm:$0xff]
      %v751 = vld [vmem:[#allocation2 + $0x30] sm:$0xff]
      %v752 = vld [vmem:[#allocation2 + $0x38] sm:$0xff]
      %v753 = vld [vmem:[%s3] sm:$0x1]
      %v755 = vlaneseq
      %v756 = vshrl.u32 %v755, 7
      %v757 = vsub.s32 0, %v756
      %v758 = vrot.slane %v753, %v757
      %v760 = vadd.f32 %v745, %v758
      %v761 = vadd.f32 %v746, %v758
      %v762 = vadd.f32 %v747, %v758
      %v763 = vadd.f32 %v748, %v758
      %v764 = vadd.f32 %v749, %v758
      %v765 = vadd.f32 %v750, %v758
      %v766 = vadd.f32 %v751, %v758
      %v767 = vadd.f32 %v752, %v758
      %v768 = vmul.f32 %v760, 0.1
      %v769 = vmul.f32 %v761, 0.1
      %v770 = vmul.f32 %v762, 0.1
      %v771 = vmul.f32 %v763, 0.1
      %v772 = vmul.f32 %v764, 0.1
      %v773 = vmul.f32 %v765, 0.1
      %v774 = vmul.f32 %v766, 0.1
      %v775 = vmul.f32 %v767, 0.1
      %v776 = vmax.f32 %v760, %v768
      %v777 = vmax.f32 %v761, %v769
      %v778 = vmax.f32 %v762, %v770
      %v779 = vmax.f32 %v763, %v771
      %v780 = vmax.f32 %v764, %v772
      %v781 = vmax.f32 %v765, %v773
      %v782 = vmax.f32 %v766, %v774
      %v783 = vmax.f32 %v767, %v775
      %784 = vst [vmem:[%s316] sm:$0xff] %v776
      %785 = vst [vmem:[%s316 + $0x8] sm:$0xff] %v777
      %786 = vst [vmem:[%s316 + $0x10] sm:$0xff] %v778
      %787 = vst [vmem:[%s316 + $0x18] sm:$0xff] %v779
      %788 = vst [vmem:[%s316 + $0x20] sm:$0xff] %v780
      %789 = vst [vmem:[%s316 + $0x28] sm:$0xff] %v781
      %790 = vst [vmem:[%s316 + $0x30] sm:$0xff] %v782
      %791 = vst [vmem:[%s316 + $0x38] sm:$0xff] %v783
      %s792 = smul.u32 8, %s20
      %p793 = scmp.lt.s32.totalorder %s19, 1
      %s794 = scalar_select %p793, %s19, 1
      %p795 = scmp.lt.s32.totalorder %s792, 15
      %s796 = scalar_select %p795, %s792, 15
      %s797 = smul.addr %s794, 16
      %s798 = sadd.s32 %s796, %s797
      %s799 = smul.addr %s798, 8
      %s800 = scalar_lea.vmem %s4, %s799
      // Predicated region
      $region37: #{flownet_forward.5} parent=35 // pred_check
        %p801 = pneg %p149
      $region38: #{flownet_forward.5} parent=35 // pred_check_branch
        %803 = sbr.rel (%p801) target = $region40
      $region39: #{flownet_forward.5} parent=35 // pred_region
        %s804 = smul.u32 8, %s20
      $region40: #{flownet_forward.5} parent=35 // pred_fallthru
        _
    $region36: #{flownet_forward.5} parent=5 // pred_fallthru
      _
    %p805 = scmp.le.s32.totalorder 2, %s10
    // Predicated region
    $region41: #{flownet_forward.5} parent=5 // pred_check
      %p806 = pneg %p805
    $region42: #{flownet_forward.5} parent=5 // pred_check_branch
      %808 = sbr.rel (%p806) target = $region44
    $region43: #{flownet_forward.5} parent=5 // pred_region
      %s809 = ssub.s32 %s10, 2
      // Predicated region
      $region45: #{flownet_forward.5} parent=43 // pred_check
        %p810 = pneg %p155
      $region46: #{flownet_forward.5} parent=43 // pred_check_branch
        %812 = sbr.rel (%p810) target = $region48
      $region47: #{flownet_forward.5} parent=43 // pred_region
        %s813 = smul.u32 8, %s22
        %p814 = scmp.lt.s32.totalorder %s21, 1
        %s815 = scalar_select %p814, %s21, 1
        %p816 = scmp.lt.s32.totalorder %s813, 15
        %s817 = scalar_select %p816, %s813, 15
        %s818 = smul.addr %s815, 16
        %s819 = sadd.s32 %s817, %s818
        %s820 = smul.addr %s819, 8
        %s821 = scalar_lea.vmem %s4, %s820
      $region48: #{flownet_forward.5} parent=43 // pred_fallthru
        _
    $region44: #{flownet_forward.5} parent=5 // pred_fallthru
      _
  $region6: #{flownet_forward.5} parent=0 // loop_footer
    %s14 = sadd.s32 1, %s10
  $region7: #{flownet_forward.5} parent=0 // loop_footer_branch
    %9 = sbr.rel target = $region3
  $region8: #{flownet_forward.5} parent=0 // loop_exit
    _

</llo_original>
